<compile_context>
chip_gen: v5e
topology: v5e:2x2
jax: 0.10.0
libtpu: 0.0.40
codegen_flags: <defaults>
</compile_context>

<pallas_src>
import math
import functools

import jax
import jax.numpy as jnp
import numpy as np
from jax.experimental import pallas as pl
from jax.experimental.pallas import tpu as pltpu

# ----------------------------- config ---------------------------------------
D_MODEL = 32
NHEAD = 4
DFF = 64
NUM_LAYERS = 2
T_TGT = 8      # decoder query length
S_MEM = 16     # encoder memory length
BATCH = 2
LN_EPS = 1e-5
NEG_INF = -1e30


def _layer_norm(x, g, b):
    mu = jnp.mean(x, axis=-1, keepdims=True)
    var = jnp.mean(jnp.square(x - mu), axis=-1, keepdims=True)
    return (x - mu) * jax.lax.rsqrt(var + LN_EPS) * g + b


# ----------------------------- fused decoder kernel --------------------------
def decoder_kernel(
    # activations, batch folded onto rows (batch-major: row = b*L + i)
    tgt_ref, qpos_ref, mem_ref, memk_ref,
    # additive batch-block masks (0 on same-batch blocks, -1e30 elsewhere)
    sbias_ref, cbias_ref,
    # stacked weights: attention (L, 2, ...) where index 1 is {0:self, 1:cross}
    attn_wi_ref, attn_bi_ref, attn_wo_ref,
    # FFN weights
    ffn_w1_ref, ffn_b1_ref, ffn_w2_ref,
    # per-layer (1, D) vectors [sa_ob, ca_ob, l2_b, n1g, n1b, n2g, n2b, n3g, n3b]
    vec_d_ref,
    # final LayerNorm [gamma, beta]
    fin_ref,
    # output
    out_ref,
    *, nhead, num_layers,
):
    D = tgt_ref.shape[-1]
    hd = D // nhead
    scale = 1.0 / math.sqrt(hd)

    x = tgt_ref[...]          # (B*T, D)
    qpos = qpos_ref[...]      # (B*T, D)
    mem = mem_ref[...]        # (B*S, D)
    memk = memk_ref[...]      # (B*S, D)  == memory + pos (precomputed on host)
    sbias = sbias_ref[...]    # (B*T, B*T)
    cbias = cbias_ref[...]    # (B*T, B*S)
    vd = vec_d_ref[...]       # (L, 9, 1, D)

    def split_heads(z):
        # (N, D) -> (H, N, hd) via static lane slices + stack (no duplication).
        return jnp.stack([z[:, h * hd:(h + 1) * hd] for h in range(nhead)], axis=0)

    def merge_heads(z):
        # (H, N, hd) -> (N, D) lane concat in head order (PyTorch MHA layout).
        return jnp.concatenate([z[h] for h in range(nhead)], axis=-1)

    def attention(q2d, k2d, v2d, bias):
        # q2d: (Nq, D) already projected + scaled; k2d/v2d: (Nk, D) projected.
        # bias keeps each query inside its own batch block.
        qh, kh, vh = split_heads(q2d), split_heads(k2d), split_heads(v2d)
        logits = jnp.einsum("hqc,hkc->hqk", qh, kh,
                            preferred_element_type=jnp.float32) + bias
        logits = logits - jnp.max(logits, axis=-1, keepdims=True)
        p = jnp.exp(logits)
        p = p / jnp.sum(p, axis=-1, keepdims=True)   # exact divide (EUP slack)
        ctx = jnp.einsum("hqk,hkc->hqc", p, vh,
                         preferred_element_type=jnp.float32)
        return merge_heads(ctx)                       # (Nq, D)

    # TODO(synk): tgt_mask / memory_mask / key_padding_mask support (all None here).
    for l in range(num_layers):                       # static unroll (num_layers = 2)
        # ---- self-attention: q = k = x + qpos, v = x (Q,K projection fused) ----
        wi = attn_wi_ref[l, 0]                        # (D, 3D)
        bi = attn_bi_ref[l, 0]                        # (1, 3D)
        q_in = x + qpos
        qk = jnp.dot(q_in, wi[:, :2 * D],
                     preferred_element_type=jnp.float32) + bi[:, :2 * D]
        v = jnp.dot(x, wi[:, 2 * D:],
                    preferred_element_type=jnp.float32) + bi[:, 2 * D:]
        sa = attention(qk[:, :D] * scale, qk[:, D:], v, sbias)
        sa = jnp.dot(sa, attn_wo_ref[l, 0],
                     preferred_element_type=jnp.float32) + vd[l, 0]
        x = _layer_norm(x + sa, vd[l, 3], vd[l, 4])

        # ---- cross-attention: q = x + qpos, k = mem + pos, v = mem -------------
        wi = attn_wi_ref[l, 1]
        bi = attn_bi_ref[l, 1]
        q = (jnp.dot(x + qpos, wi[:, :D],
                     preferred_element_type=jnp.float32) + bi[:, :D]) * scale
        k = jnp.dot(memk, wi[:, D:2 * D],
                    preferred_element_type=jnp.float32) + bi[:, D:2 * D]
        v = jnp.dot(mem, wi[:, 2 * D:],
                    preferred_element_type=jnp.float32) + bi[:, 2 * D:]
        ca = attention(q, k, v, cbias)
        ca = jnp.dot(ca, attn_wo_ref[l, 1],
                     preferred_element_type=jnp.float32) + vd[l, 1]
        x = _layer_norm(x + ca, vd[l, 5], vd[l, 6])

        # ---- feed-forward -------------------------------------------------------
        h = jnp.maximum(
            jnp.dot(x, ffn_w1_ref[l], preferred_element_type=jnp.float32)
            + ffn_b1_ref[l], 0.0)
        h = jnp.dot(h, ffn_w2_ref[l], preferred_element_type=jnp.float32) + vd[l, 2]
        x = _layer_norm(x + h, vd[l, 7], vd[l, 8])

    out_ref[...] = _layer_norm(x, fin_ref[0], fin_ref[1])


# ----------------------------- host-side weight packing ----------------------
def _pack_params(layer_params, norm_params):
    """Collapses all per-layer weights into 8 stacked arrays (x @ W layout)."""
    def per_layer(p):
        wi = jnp.stack([p["sa_w"].T, p["ca_w"].T], axis=0)        # (2, D, 3D)
        bi = jnp.stack([p["sa_b"], p["ca_b"]], axis=0)            # (2, 1, 3D)
        wo = jnp.stack([p["sa_ow"].T, p["ca_ow"].T], axis=0)      # (2, D, D)
        vecs = jnp.stack([p["sa_ob"], p["ca_ob"], p["l2_b"],
                          p["n1_g"], p["n1_b"], p["n2_g"], p["n2_b"],
                          p["n3_g"], p["n3_b"]], axis=0)          # (9, 1, D)
        return wi, bi, wo, p["l1_w"].T, p["l1_b"], p["l2_w"].T, vecs

    groups = list(zip(*[per_layer(p) for p in layer_params]))
    attn_wi, attn_bi, attn_wo, ffn_w1, ffn_b1, ffn_w2, vec_d = [
        jnp.stack(g, axis=0) for g in groups]
    fin = jnp.stack([norm_params["g"], norm_params["b"]], axis=0)  # (2, 1, D)
    return [attn_wi, attn_bi, attn_wo, ffn_w1, ffn_b1, ffn_w2, vec_d, fin]


def _block_bias(n_q, per_q, n_k, per_k):
    """Additive mask: 0 where query/key rows belong to the same batch, -1e30 else."""
    rq = np.arange(n_q) // per_q
    rk = np.arange(n_k) // per_k
    return jnp.asarray(np.where(rq[:, None] == rk[None, :], 0.0, NEG_INF),
                       dtype=jnp.float32)


# ----------------------------- wrapper ---------------------------------------
def transformer_decoder(tgt_tbd, mem_sbd, qpos_tbd, pos_sbd, layer_params, norm_params):
    """Matches TransformerDecoder.forward with return_intermediate=False.

    tgt_tbd: (T, B, D), mem_sbd: (S, B, D)  (PyTorch seq-first convention).
    Returns (1, T, B, D) == output.unsqueeze(0).
    """
    T, B, D = tgt_tbd.shape
    S = mem_sbd.shape[0]

    # Fold batch onto sublanes (rows batch-major).  These moves are < 6 KB.
    tgt2d = jnp.transpose(tgt_tbd, (1, 0, 2)).reshape(B * T, D)
    qpos2d = jnp.transpose(qpos_tbd, (1, 0, 2)).reshape(B * T, D)
    mem2d = jnp.transpose(mem_sbd, (1, 0, 2)).reshape(B * S, D)
    memk2d = mem2d + jnp.transpose(pos_sbd, (1, 0, 2)).reshape(B * S, D)

    sbias = _block_bias(B * T, T, B * T, T)       # (B*T, B*T)
    cbias = _block_bias(B * T, T, B * S, S)       # (B*T, B*S)

    weights = _pack_params(layer_params, norm_params)
    args = (tgt2d, qpos2d, mem2d, memk2d, sbias, cbias) + tuple(weights)

    # Single invocation (no grid): everything sits in VMEM for the whole kernel.
    # (On v7x, a grid=(2,) "parallel" split per TensorCore could be benchmarked,
    #  but per-element compute is tiny so one core doing both rows is expected
    #  to win; with no grid there is also no redundant double-buffering.)
    vmem = pl.BlockSpec(memory_space=pltpu.MemorySpace.VMEM)
    out2d = pl.pallas_call(
        functools.partial(decoder_kernel, nhead=NHEAD,
                          num_layers=len(layer_params)),
        in_specs=[vmem] * len(args),
        out_specs=vmem,
        out_shape=jax.ShapeDtypeStruct((B * T, D), jnp.float32),
    )(*args)

    out = out2d.reshape(B, T, D)
    return jnp.transpose(out, (1, 0, 2))[None]            # (1, T, B, D)


# ----------------------------- pure-JAX reference ----------------------------
def _ref_mha(q_in, k_in, v_in, in_w, in_b, out_w, out_b, nhead):
    B, Lq, D = q_in.shape
    Lk = k_in.shape[1]
    hd = D // nhead
    q = (q_in @ in_w[:D].T + in_b[:, :D]) / math.sqrt(hd)
    k = k_in @ in_w[D:2 * D].T + in_b[:, D:2 * D]
    v = v_in @ in_w[2 * D:].T + in_b[:, 2 * D:]
    qh = q.reshape(B, Lq, nhead, hd)
    kh = k.reshape(B, Lk, nhead, hd)
    vh = v.reshape(B, Lk, nhead, hd)
    logits = jnp.einsum("bqhd,bkhd->bhqk", qh, kh)
    p_attn = jax.nn.softmax(logits, axis=-1)
    o = jnp.einsum("bhqk,bkhd->bqhd", p_attn, vh).reshape(B, Lq, D)
    return o @ out_w.T + out_b


def _ref_layer(tgt, mem, qpos, pos, p):
    q = tgt + qpos
    x = _layer_norm(tgt + _ref_mha(q, q, tgt, p["sa_w"], p["sa_b"],
                                   p["sa_ow"], p["sa_ob"], NHEAD),
                    p["n1_g"], p["n1_b"])
    x = _layer_norm(x + _ref_mha(x + qpos, mem + pos, mem, p["ca_w"], p["ca_b"],
                                 p["ca_ow"], p["ca_ob"], NHEAD),
                    p["n2_g"], p["n2_b"])
    h = jnp.maximum(x @ p["l1_w"].T + p["l1_b"], 0.0)
    x = _layer_norm(x + (h @ p["l2_w"].T + p["l2_b"]), p["n3_g"], p["n3_b"])
    return x


def _ref_decoder(tgt_tbd, mem_sbd, qpos_tbd, pos_sbd, layer_params, norm_params):
    tgt = jnp.transpose(tgt_tbd, (1, 0, 2))
    mem = jnp.transpose(mem_sbd, (1, 0, 2))
    qpos = jnp.transpose(qpos_tbd, (1, 0, 2))
    pos = jnp.transpose(pos_sbd, (1, 0, 2))
    out = tgt
    for p in layer_params:
        out = _ref_layer(out, mem, qpos, pos, p)
    out = _layer_norm(out, norm_params["g"], norm_params["b"])
    return jnp.transpose(out, (1, 0, 2))[None]


# ----------------------------- param init ------------------------------------
def init_layer_params(key, d, dff):
    ks = jax.random.split(key, 12)
    f = lambda k, shape: (0.02 * jax.random.normal(k, shape)).astype(jnp.float32)
    return {
        "sa_w": f(ks[0], (3 * d, d)), "sa_b": f(ks[1], (1, 3 * d)),
        "sa_ow": f(ks[2], (d, d)),    "sa_ob": f(ks[3], (1, d)),
        "ca_w": f(ks[4], (3 * d, d)), "ca_b": f(ks[5], (1, 3 * d)),
        "ca_ow": f(ks[6], (d, d)),    "ca_ob": f(ks[7], (1, d)),
        "l1_w": f(ks[8], (dff, d)),   "l1_b": f(ks[9], (1, dff)),
        "l2_w": f(ks[10], (d, dff)),  "l2_b": f(ks[11], (1, d)),
        "n1_g": jnp.ones((1, d), jnp.float32), "n1_b": jnp.zeros((1, d), jnp.float32),
        "n2_g": jnp.ones((1, d), jnp.float32), "n2_b": jnp.zeros((1, d), jnp.float32),
        "n3_g": jnp.ones((1, d), jnp.float32), "n3_b": jnp.zeros((1, d), jnp.float32),
    }


if __name__ == "__main__":
    key = jax.random.PRNGKey(0)
    k_tgt, k_mem, k_qpos, k_pos = jax.random.split(key, 4)

    tgt = jax.random.normal(k_tgt, (T_TGT, BATCH, D_MODEL), jnp.float32)
    memory = jax.random.normal(k_mem, (S_MEM, BATCH, D_MODEL), jnp.float32)
    query_pos = jax.random.normal(k_qpos, (T_TGT, BATCH, D_MODEL), jnp.float32)
    pos = jax.random.normal(k_pos, (S_MEM, BATCH, D_MODEL), jnp.float32)

    # _get_clones deepcopies the layer => every layer starts with identical params.
    shared_layer = init_layer_params(jax.random.PRNGKey(1), D_MODEL, DFF)
    layer_params = [shared_layer] * NUM_LAYERS
    norm_params = {"g": jnp.ones((1, D_MODEL), jnp.float32),
                   "b": jnp.zeros((1, D_MODEL), jnp.float32)}

    out = transformer_decoder(tgt, memory, query_pos, pos, layer_params, norm_params)
    out = jax.block_until_ready(out)

    ref = _ref_decoder(tgt, memory, query_pos, pos, layer_params, norm_params)
    assert out.shape == (1, T_TGT, BATCH, D_MODEL), out.shape
    # Softmax is now exact; remaining tolerance only covers MXU vs. XLA matmul
    # accumulation/rounding differences.
    np.testing.assert_allclose(np.asarray(out), np.asarray(ref), atol=2e-3, rtol=2e-3)

    print("KERNEL_OK")
</pallas_src>

<mosaic_0001>
module attributes {stable_mosaic.version = 11 : i64} {
  func.func @decoder_kernel(%arg0: memref<16x32xf32, #tpu.memory_space<vmem>>, %arg1: memref<16x32xf32, #tpu.memory_space<vmem>>, %arg2: memref<32x32xf32, #tpu.memory_space<vmem>>, %arg3: memref<32x32xf32, #tpu.memory_space<vmem>>, %arg4: memref<16x16xf32, #tpu.memory_space<vmem>>, %arg5: memref<16x32xf32, #tpu.memory_space<vmem>>, %arg6: memref<2x2x32x96xf32, #tpu.memory_space<vmem>>, %arg7: memref<2x2x1x96xf32, #tpu.memory_space<vmem>>, %arg8: memref<2x2x32x32xf32, #tpu.memory_space<vmem>>, %arg9: memref<2x32x64xf32, #tpu.memory_space<vmem>>, %arg10: memref<2x1x64xf32, #tpu.memory_space<vmem>>, %arg11: memref<2x64x32xf32, #tpu.memory_space<vmem>>, %arg12: memref<2x9x1x32xf32, #tpu.memory_space<vmem>>, %arg13: memref<2x1x32xf32, #tpu.memory_space<vmem>>, %arg14: memref<16x32xf32, #tpu.memory_space<vmem>>) attributes {dimension_semantics = [], scalar_prefetch = 0 : i64, scratch_operands = 0 : i64, tpu.core_type = #tpu.core_type<tc>} {
    %c0 = arith.constant 0 : index
    %c0_0 = arith.constant 0 : index
    %0 = vector.load %arg0[%c0, %c0_0] : memref<16x32xf32, #tpu.memory_space<vmem>>, vector<16x32xf32>
    %c0_1 = arith.constant 0 : index
    %c0_2 = arith.constant 0 : index
    %1 = vector.load %arg1[%c0_1, %c0_2] : memref<16x32xf32, #tpu.memory_space<vmem>>, vector<16x32xf32>
    %c0_3 = arith.constant 0 : index
    %c0_4 = arith.constant 0 : index
    %2 = vector.load %arg2[%c0_3, %c0_4] : memref<32x32xf32, #tpu.memory_space<vmem>>, vector<32x32xf32>
    %c0_5 = arith.constant 0 : index
    %c0_6 = arith.constant 0 : index
    %3 = vector.load %arg3[%c0_5, %c0_6] : memref<32x32xf32, #tpu.memory_space<vmem>>, vector<32x32xf32>
    %c0_7 = arith.constant 0 : index
    %c0_8 = arith.constant 0 : index
    %4 = vector.load %arg4[%c0_7, %c0_8] : memref<16x16xf32, #tpu.memory_space<vmem>>, vector<16x16xf32>
    %c0_9 = arith.constant 0 : index
    %c0_10 = arith.constant 0 : index
    %5 = vector.load %arg5[%c0_9, %c0_10] : memref<16x32xf32, #tpu.memory_space<vmem>>, vector<16x32xf32>
    %c0_11 = arith.constant 0 : index
    %c0_12 = arith.constant 0 : index
    %c0_13 = arith.constant 0 : index
    %c0_14 = arith.constant 0 : index
    %6 = vector.load %arg12[%c0_11, %c0_12, %c0_13, %c0_14] : memref<2x9x1x32xf32, #tpu.memory_space<vmem>>, vector<2x9x1x32xf32>
    %c0_15 = arith.constant 0 : index
    %c0_16 = arith.constant 0 : index
    %c0_17 = arith.constant 0 : index
    %c0_18 = arith.constant 0 : index
    %7 = vector.load %arg6[%c0_15, %c0_16, %c0_17, %c0_18] : memref<2x2x32x96xf32, #tpu.memory_space<vmem>>, vector<1x1x32x96xf32>
    %8 = vector.shape_cast %7 : vector<1x1x32x96xf32> to vector<32x96xf32>
    %c0_19 = arith.constant 0 : index
    %c0_20 = arith.constant 0 : index
    %c0_21 = arith.constant 0 : index
    %c0_22 = arith.constant 0 : index
    %9 = vector.load %arg7[%c0_19, %c0_20, %c0_21, %c0_22] : memref<2x2x1x96xf32, #tpu.memory_space<vmem>>, vector<1x1x1x96xf32>
    %10 = vector.shape_cast %9 : vector<1x1x1x96xf32> to vector<1x96xf32>
    %11 = arith.addf %0, %1 : vector<16x32xf32>
    %12 = vector.extract_strided_slice %8 {offsets = [0, 0], sizes = [32, 64], strides = [1, 1]} : vector<32x96xf32> to vector<32x64xf32>
    %cst = arith.constant dense<0.000000e+00> : vector<16x64xf32>
    %13 = tpu.matmul %11, %12, %cst {dimension_numbers = #tpu.dot_dimension_numbers<[1], [0], [0], [1], [0, 0, 1, 1], [], []>} : vector<16x32xf32>, vector<32x64xf32>, vector<16x64xf32> -> vector<16x64xf32>
    %14 = vector.extract_strided_slice %10 {offsets = [0, 0], sizes = [1, 64], strides = [1, 1]} : vector<1x96xf32> to vector<1x64xf32>
    %15 = vector.broadcast %14 : vector<1x64xf32> to vector<16x64xf32>
    %16 = arith.addf %13, %15 : vector<16x64xf32>
    %17 = vector.extract_strided_slice %8 {offsets = [0, 64], sizes = [32, 32], strides = [1, 1]} : vector<32x96xf32> to vector<32x32xf32>
    %cst_23 = arith.constant dense<0.000000e+00> : vector<16x32xf32>
    %18 = tpu.matmul %0, %17, %cst_23 {dimension_numbers = #tpu.dot_dimension_numbers<[1], [0], [0], [1], [0, 0, 1, 1], [], []>} : vector<16x32xf32>, vector<32x32xf32>, vector<16x32xf32> -> vector<16x32xf32>
    %19 = vector.extract_strided_slice %10 {offsets = [0, 64], sizes = [1, 32], strides = [1, 1]} : vector<1x96xf32> to vector<1x32xf32>
    %20 = vector.broadcast %19 : vector<1x32xf32> to vector<16x32xf32>
    %21 = arith.addf %18, %20 : vector<16x32xf32>
    %22 = vector.extract_strided_slice %16 {offsets = [0, 0], sizes = [16, 32], strides = [1, 1]} : vector<16x64xf32> to vector<16x32xf32>
    %cst_24 = arith.constant 0.353553385 : f32
    %23 = vector.broadcast %cst_24 : f32 to vector<16x32xf32>
    %24 = arith.mulf %22, %23 : vector<16x32xf32>
    %25 = vector.extract_strided_slice %16 {offsets = [0, 32], sizes = [16, 32], strides = [1, 1]} : vector<16x64xf32> to vector<16x32xf32>
    %26 = vector.extract_strided_slice %24 {offsets = [0, 0], sizes = [16, 8], strides = [1, 1]} : vector<16x32xf32> to vector<16x8xf32>
    %27 = vector.extract_strided_slice %24 {offsets = [0, 8], sizes = [16, 8], strides = [1, 1]} : vector<16x32xf32> to vector<16x8xf32>
    %28 = vector.extract_strided_slice %24 {offsets = [0, 16], sizes = [16, 8], strides = [1, 1]} : vector<16x32xf32> to vector<16x8xf32>
    %29 = vector.extract_strided_slice %24 {offsets = [0, 24], sizes = [16, 8], strides = [1, 1]} : vector<16x32xf32> to vector<16x8xf32>
    %30 = vector.shape_cast %26 : vector<16x8xf32> to vector<1x16x8xf32>
    %31 = vector.shape_cast %27 : vector<16x8xf32> to vector<1x16x8xf32>
    %32 = vector.shape_cast %28 : vector<16x8xf32> to vector<1x16x8xf32>
    %33 = vector.shape_cast %29 : vector<16x8xf32> to vector<1x16x8xf32>
    %34 = tpu.concatenate %30, %31, %32, %33 in 0 : vector<1x16x8xf32>, vector<1x16x8xf32>, vector<1x16x8xf32>, vector<1x16x8xf32> -> vector<4x16x8xf32>
    %35 = vector.extract_strided_slice %25 {offsets = [0, 0], sizes = [16, 8], strides = [1, 1]} : vector<16x32xf32> to vector<16x8xf32>
    %36 = vector.extract_strided_slice %25 {offsets = [0, 8], sizes = [16, 8], strides = [1, 1]} : vector<16x32xf32> to vector<16x8xf32>
    %37 = vector.extract_strided_slice %25 {offsets = [0, 16], sizes = [16, 8], strides = [1, 1]} : vector<16x32xf32> to vector<16x8xf32>
    %38 = vector.extract_strided_slice %25 {offsets = [0, 24], sizes = [16, 8], strides = [1, 1]} : vector<16x32xf32> to vector<16x8xf32>
    %39 = vector.shape_cast %35 : vector<16x8xf32> to vector<1x16x8xf32>
    %40 = vector.shape_cast %36 : vector<16x8xf32> to vector<1x16x8xf32>
    %41 = vector.shape_cast %37 : vector<16x8xf32> to vector<1x16x8xf32>
    %42 = vector.shape_cast %38 : vector<16x8xf32> to vector<1x16x8xf32>
    %43 = tpu.concatenate %39, %40, %41, %42 in 0 : vector<1x16x8xf32>, vector<1x16x8xf32>, vector<1x16x8xf32>, vector<1x16x8xf32> -> vector<4x16x8xf32>
    %44 = vector.extract_strided_slice %21 {offsets = [0, 0], sizes = [16, 8], strides = [1, 1]} : vector<16x32xf32> to vector<16x8xf32>
    %45 = vector.extract_strided_slice %21 {offsets = [0, 8], sizes = [16, 8], strides = [1, 1]} : vector<16x32xf32> to vector<16x8xf32>
    %46 = vector.extract_strided_slice %21 {offsets = [0, 16], sizes = [16, 8], strides = [1, 1]} : vector<16x32xf32> to vector<16x8xf32>
    %47 = vector.extract_strided_slice %21 {offsets = [0, 24], sizes = [16, 8], strides = [1, 1]} : vector<16x32xf32> to vector<16x8xf32>
    %48 = vector.shape_cast %44 : vector<16x8xf32> to vector<1x16x8xf32>
    %49 = vector.shape_cast %45 : vector<16x8xf32> to vector<1x16x8xf32>
    %50 = vector.shape_cast %46 : vector<16x8xf32> to vector<1x16x8xf32>
    %51 = vector.shape_cast %47 : vector<16x8xf32> to vector<1x16x8xf32>
    %52 = tpu.concatenate %48, %49, %50, %51 in 0 : vector<1x16x8xf32>, vector<1x16x8xf32>, vector<1x16x8xf32>, vector<1x16x8xf32> -> vector<4x16x8xf32>
    "tpu.trace_start"() <{level = 10 : i32, message = "hqc,hkc->hqk"}> : () -> ()
    %cst_25 = arith.constant dense<0.000000e+00> : vector<4x16x16xf32>
    %53 = tpu.matmul %34, %43, %cst_25 {dimension_numbers = #tpu.dot_dimension_numbers<[2], [2], [1], [1], [0, 0, 0, 1, 1, 1], [0], [0]>} : vector<4x16x8xf32>, vector<4x16x8xf32>, vector<4x16x16xf32> -> vector<4x16x16xf32>
    "tpu.trace_stop"() : () -> ()
    %54 = vector.shape_cast %4 : vector<16x16xf32> to vector<1x16x16xf32>
    %55 = vector.broadcast %54 : vector<1x16x16xf32> to vector<4x16x16xf32>
    %56 = arith.addf %53, %55 : vector<4x16x16xf32>
    %cst_26 = arith.constant dense<0xFF800000> : vector<4x16xf32>
    %57 = vector.multi_reduction <maximumf>, %56, %cst_26 [2] : vector<4x16x16xf32> to vector<4x16xf32>
    %58 = vector.shape_cast %57 : vector<4x16xf32> to vector<4x16x1xf32>
    %59 = vector.broadcast %58 : vector<4x16x1xf32> to vector<4x16x16xf32>
    %60 = arith.subf %56, %59 : vector<4x16x16xf32>
    %61 = math.exp %60 : vector<4x16x16xf32>
    %cst_27 = arith.constant dense<0.000000e+00> : vector<4x16xf32>
    %62 = vector.multi_reduction <add>, %61, %cst_27 [2] : vector<4x16x16xf32> to vector<4x16xf32>
    %63 = vector.shape_cast %62 : vector<4x16xf32> to vector<4x16x1xf32>
    %64 = vector.broadcast %63 : vector<4x16x1xf32> to vector<4x16x16xf32>
    %65 = arith.divf %61, %64 : vector<4x16x16xf32>
    "tpu.trace_start"() <{level = 10 : i32, message = "hqk,hkc->hqc"}> : () -> ()
    %cst_28 = arith.constant dense<0.000000e+00> : vector<4x16x8xf32>
    %66 = tpu.matmul %65, %52, %cst_28 {dimension_numbers = #tpu.dot_dimension_numbers<[2], [1], [1], [2], [0, 0, 0, 1, 1, 2], [0], [0]>} : vector<4x16x16xf32>, vector<4x16x8xf32>, vector<4x16x8xf32> -> vector<4x16x8xf32>
    "tpu.trace_stop"() : () -> ()
    %67 = vector.extract_strided_slice %66 {offsets = [0, 0, 0], sizes = [1, 16, 8], strides = [1, 1, 1]} : vector<4x16x8xf32> to vector<1x16x8xf32>
    %68 = vector.shape_cast %67 : vector<1x16x8xf32> to vector<16x8xf32>
    %69 = vector.extract_strided_slice %66 {offsets = [1, 0, 0], sizes = [1, 16, 8], strides = [1, 1, 1]} : vector<4x16x8xf32> to vector<1x16x8xf32>
    %70 = vector.shape_cast %69 : vector<1x16x8xf32> to vector<16x8xf32>
    %71 = vector.extract_strided_slice %66 {offsets = [2, 0, 0], sizes = [1, 16, 8], strides = [1, 1, 1]} : vector<4x16x8xf32> to vector<1x16x8xf32>
    %72 = vector.shape_cast %71 : vector<1x16x8xf32> to vector<16x8xf32>
    %73 = vector.extract_strided_slice %66 {offsets = [3, 0, 0], sizes = [1, 16, 8], strides = [1, 1, 1]} : vector<4x16x8xf32> to vector<1x16x8xf32>
    %74 = vector.shape_cast %73 : vector<1x16x8xf32> to vector<16x8xf32>
    %75 = tpu.concatenate %68, %70, %72, %74 in 1 : vector<16x8xf32>, vector<16x8xf32>, vector<16x8xf32>, vector<16x8xf32> -> vector<16x32xf32>
    %c0_29 = arith.constant 0 : index
    %c0_30 = arith.constant 0 : index
    %c0_31 = arith.constant 0 : index
    %c0_32 = arith.constant 0 : index
    %76 = vector.load %arg8[%c0_29, %c0_30, %c0_31, %c0_32] : memref<2x2x32x32xf32, #tpu.memory_space<vmem>>, vector<1x1x32x32xf32>
    %77 = vector.shape_cast %76 : vector<1x1x32x32xf32> to vector<32x32xf32>
    %cst_33 = arith.constant dense<0.000000e+00> : vector<16x32xf32>
    %78 = tpu.matmul %75, %77, %cst_33 {dimension_numbers = #tpu.dot_dimension_numbers<[1], [0], [0], [1], [0, 0, 1, 1], [], []>} : vector<16x32xf32>, vector<32x32xf32>, vector<16x32xf32> -> vector<16x32xf32>
    %79 = vector.extract_strided_slice %6 {offsets = [0, 0, 0, 0], sizes = [1, 1, 1, 32], strides = [1, 1, 1, 1]} : vector<2x9x1x32xf32> to vector<1x1x1x32xf32>
    %80 = vector.shape_cast %79 : vector<1x1x1x32xf32> to vector<1x32xf32>
    %81 = vector.broadcast %80 : vector<1x32xf32> to vector<16x32xf32>
    %82 = arith.addf %78, %81 : vector<16x32xf32>
    %83 = arith.addf %0, %82 : vector<16x32xf32>
    %84 = vector.extract_strided_slice %6 {offsets = [0, 3, 0, 0], sizes = [1, 1, 1, 32], strides = [1, 1, 1, 1]} : vector<2x9x1x32xf32> to vector<1x1x1x32xf32>
    %85 = vector.shape_cast %84 : vector<1x1x1x32xf32> to vector<1x32xf32>
    %86 = vector.extract_strided_slice %6 {offsets = [0, 4, 0, 0], sizes = [1, 1, 1, 32], strides = [1, 1, 1, 1]} : vector<2x9x1x32xf32> to vector<1x1x1x32xf32>
    %87 = vector.shape_cast %86 : vector<1x1x1x32xf32> to vector<1x32xf32>
    %cst_34 = arith.constant dense<0.000000e+00> : vector<16xf32>
    %88 = vector.multi_reduction <add>, %83, %cst_34 [1] : vector<16x32xf32> to vector<16xf32>
    %89 = vector.shape_cast %88 : vector<16xf32> to vector<16x1xf32>
    %cst_35 = arith.constant 3.200000e+01 : f32
    %90 = vector.broadcast %cst_35 : f32 to vector<16x1xf32>
    %91 = arith.divf %89, %90 : vector<16x1xf32>
    %92 = vector.broadcast %91 : vector<16x1xf32> to vector<16x32xf32>
    %93 = arith.subf %83, %92 : vector<16x32xf32>
    %94 = arith.mulf %93, %93 : vector<16x32xf32>
    %cst_36 = arith.constant dense<0.000000e+00> : vector<16xf32>
    %95 = vector.multi_reduction <add>, %94, %cst_36 [1] : vector<16x32xf32> to vector<16xf32>
    %96 = vector.shape_cast %95 : vector<16xf32> to vector<16x1xf32>
    %cst_37 = arith.constant 3.200000e+01 : f32
    %97 = vector.broadcast %cst_37 : f32 to vector<16x1xf32>
    %98 = arith.divf %96, %97 : vector<16x1xf32>
    %99 = vector.broadcast %91 : vector<16x1xf32> to vector<16x32xf32>
    %100 = arith.subf %83, %99 : vector<16x32xf32>
    %cst_38 = arith.constant 9.99999974E-6 : f32
    %101 = vector.broadcast %cst_38 : f32 to vector<16x1xf32>
    %102 = arith.addf %98, %101 : vector<16x1xf32>
    %103 = math.rsqrt %102 : vector<16x1xf32>
    %104 = vector.broadcast %103 : vector<16x1xf32> to vector<16x32xf32>
    %105 = arith.mulf %100, %104 : vector<16x32xf32>
    %106 = vector.broadcast %85 : vector<1x32xf32> to vector<16x32xf32>
    %107 = arith.mulf %105, %106 : vector<16x32xf32>
    %108 = vector.broadcast %87 : vector<1x32xf32> to vector<16x32xf32>
    %109 = arith.addf %107, %108 : vector<16x32xf32>
    %c0_39 = arith.constant 0 : index
    %c1 = arith.constant 1 : index
    %c0_40 = arith.constant 0 : index
    %c0_41 = arith.constant 0 : index
    %110 = vector.load %arg6[%c0_39, %c1, %c0_40, %c0_41] : memref<2x2x32x96xf32, #tpu.memory_space<vmem>>, vector<1x1x32x96xf32>
    %111 = vector.shape_cast %110 : vector<1x1x32x96xf32> to vector<32x96xf32>
    %c0_42 = arith.constant 0 : index
    %c1_43 = arith.constant 1 : index
    %c0_44 = arith.constant 0 : index
    %c0_45 = arith.constant 0 : index
    %112 = vector.load %arg7[%c0_42, %c1_43, %c0_44, %c0_45] : memref<2x2x1x96xf32, #tpu.memory_space<vmem>>, vector<1x1x1x96xf32>
    %113 = vector.shape_cast %112 : vector<1x1x1x96xf32> to vector<1x96xf32>
    %114 = arith.addf %109, %1 : vector<16x32xf32>
    %115 = vector.extract_strided_slice %111 {offsets = [0, 0], sizes = [32, 32], strides = [1, 1]} : vector<32x96xf32> to vector<32x32xf32>
    %cst_46 = arith.constant dense<0.000000e+00> : vector<16x32xf32>
    %116 = tpu.matmul %114, %115, %cst_46 {dimension_numbers = #tpu.dot_dimension_numbers<[1], [0], [0], [1], [0, 0, 1, 1], [], []>} : vector<16x32xf32>, vector<32x32xf32>, vector<16x32xf32> -> vector<16x32xf32>
    %117 = vector.extract_strided_slice %113 {offsets = [0, 0], sizes = [1, 32], strides = [1, 1]} : vector<1x96xf32> to vector<1x32xf32>
    %118 = vector.broadcast %117 : vector<1x32xf32> to vector<16x32xf32>
    %119 = arith.addf %116, %118 : vector<16x32xf32>
    %cst_47 = arith.constant 0.353553385 : f32
    %120 = vector.broadcast %cst_47 : f32 to vector<16x32xf32>
    %121 = arith.mulf %119, %120 : vector<16x32xf32>
    %122 = vector.extract_strided_slice %111 {offsets = [0, 32], sizes = [32, 32], strides = [1, 1]} : vector<32x96xf32> to vector<32x32xf32>
    %cst_48 = arith.constant dense<0.000000e+00> : vector<32x32xf32>
    %123 = tpu.matmul %3, %122, %cst_48 {dimension_numbers = #tpu.dot_dimension_numbers<[1], [0], [0], [1], [0, 0, 1, 1], [], []>} : vector<32x32xf32>, vector<32x32xf32>, vector<32x32xf32> -> vector<32x32xf32>
    %124 = vector.extract_strided_slice %113 {offsets = [0, 32], sizes = [1, 32], strides = [1, 1]} : vector<1x96xf32> to vector<1x32xf32>
    %125 = vector.broadcast %124 : vector<1x32xf32> to vector<32x32xf32>
    %126 = arith.addf %123, %125 : vector<32x32xf32>
    %127 = vector.extract_strided_slice %111 {offsets = [0, 64], sizes = [32, 32], strides = [1, 1]} : vector<32x96xf32> to vector<32x32xf32>
    %cst_49 = arith.constant dense<0.000000e+00> : vector<32x32xf32>
    %128 = tpu.matmul %2, %127, %cst_49 {dimension_numbers = #tpu.dot_dimension_numbers<[1], [0], [0], [1], [0, 0, 1, 1], [], []>} : vector<32x32xf32>, vector<32x32xf32>, vector<32x32xf32> -> vector<32x32xf32>
    %129 = vector.extract_strided_slice %113 {offsets = [0, 64], sizes = [1, 32], strides = [1, 1]} : vector<1x96xf32> to vector<1x32xf32>
    %130 = vector.broadcast %129 : vector<1x32xf32> to vector<32x32xf32>
    %131 = arith.addf %128, %130 : vector<32x32xf32>
    %132 = vector.extract_strided_slice %121 {offsets = [0, 0], sizes = [16, 8], strides = [1, 1]} : vector<16x32xf32> to vector<16x8xf32>
    %133 = vector.extract_strided_slice %121 {offsets = [0, 8], sizes = [16, 8], strides = [1, 1]} : vector<16x32xf32> to vector<16x8xf32>
    %134 = vector.extract_strided_slice %121 {offsets = [0, 16], sizes = [16, 8], strides = [1, 1]} : vector<16x32xf32> to vector<16x8xf32>
    %135 = vector.extract_strided_slice %121 {offsets = [0, 24], sizes = [16, 8], strides = [1, 1]} : vector<16x32xf32> to vector<16x8xf32>
    %136 = vector.shape_cast %132 : vector<16x8xf32> to vector<1x16x8xf32>
    %137 = vector.shape_cast %133 : vector<16x8xf32> to vector<1x16x8xf32>
    %138 = vector.shape_cast %134 : vector<16x8xf32> to vector<1x16x8xf32>
    %139 = vector.shape_cast %135 : vector<16x8xf32> to vector<1x16x8xf32>
    %140 = tpu.concatenate %136, %137, %138, %139 in 0 : vector<1x16x8xf32>, vector<1x16x8xf32>, vector<1x16x8xf32>, vector<1x16x8xf32> -> vector<4x16x8xf32>
    %141 = vector.extract_strided_slice %126 {offsets = [0, 0], sizes = [32, 8], strides = [1, 1]} : vector<32x32xf32> to vector<32x8xf32>
    %142 = vector.extract_strided_slice %126 {offsets = [0, 8], sizes = [32, 8], strides = [1, 1]} : vector<32x32xf32> to vector<32x8xf32>
    %143 = vector.extract_strided_slice %126 {offsets = [0, 16], sizes = [32, 8], strides = [1, 1]} : vector<32x32xf32> to vector<32x8xf32>
    %144 = vector.extract_strided_slice %126 {offsets = [0, 24], sizes = [32, 8], strides = [1, 1]} : vector<32x32xf32> to vector<32x8xf32>
    %145 = vector.shape_cast %141 : vector<32x8xf32> to vector<1x32x8xf32>
    %146 = vector.shape_cast %142 : vector<32x8xf32> to vector<1x32x8xf32>
    %147 = vector.shape_cast %143 : vector<32x8xf32> to vector<1x32x8xf32>
    %148 = vector.shape_cast %144 : vector<32x8xf32> to vector<1x32x8xf32>
    %149 = tpu.concatenate %145, %146, %147, %148 in 0 : vector<1x32x8xf32>, vector<1x32x8xf32>, vector<1x32x8xf32>, vector<1x32x8xf32> -> vector<4x32x8xf32>
    %150 = vector.extract_strided_slice %131 {offsets = [0, 0], sizes = [32, 8], strides = [1, 1]} : vector<32x32xf32> to vector<32x8xf32>
    %151 = vector.extract_strided_slice %131 {offsets = [0, 8], sizes = [32, 8], strides = [1, 1]} : vector<32x32xf32> to vector<32x8xf32>
    %152 = vector.extract_strided_slice %131 {offsets = [0, 16], sizes = [32, 8], strides = [1, 1]} : vector<32x32xf32> to vector<32x8xf32>
    %153 = vector.extract_strided_slice %131 {offsets = [0, 24], sizes = [32, 8], strides = [1, 1]} : vector<32x32xf32> to vector<32x8xf32>
    %154 = vector.shape_cast %150 : vector<32x8xf32> to vector<1x32x8xf32>
    %155 = vector.shape_cast %151 : vector<32x8xf32> to vector<1x32x8xf32>
    %156 = vector.shape_cast %152 : vector<32x8xf32> to vector<1x32x8xf32>
    %157 = vector.shape_cast %153 : vector<32x8xf32> to vector<1x32x8xf32>
    %158 = tpu.concatenate %154, %155, %156, %157 in 0 : vector<1x32x8xf32>, vector<1x32x8xf32>, vector<1x32x8xf32>, vector<1x32x8xf32> -> vector<4x32x8xf32>
    "tpu.trace_start"() <{level = 10 : i32, message = "hqc,hkc->hqk"}> : () -> ()
    %cst_50 = arith.constant dense<0.000000e+00> : vector<4x16x32xf32>
    %159 = tpu.matmul %140, %149, %cst_50 {dimension_numbers = #tpu.dot_dimension_numbers<[2], [2], [1], [1], [0, 0, 0, 1, 1, 1], [0], [0]>} : vector<4x16x8xf32>, vector<4x32x8xf32>, vector<4x16x32xf32> -> vector<4x16x32xf32>
    "tpu.trace_stop"() : () -> ()
    %160 = vector.shape_cast %5 : vector<16x32xf32> to vector<1x16x32xf32>
    %161 = vector.broadcast %160 : vector<1x16x32xf32> to vector<4x16x32xf32>
    %162 = arith.addf %159, %161 : vector<4x16x32xf32>
    %cst_51 = arith.constant dense<0xFF800000> : vector<4x16xf32>
    %163 = vector.multi_reduction <maximumf>, %162, %cst_51 [2] : vector<4x16x32xf32> to vector<4x16xf32>
    %164 = vector.shape_cast %163 : vector<4x16xf32> to vector<4x16x1xf32>
    %165 = vector.broadcast %164 : vector<4x16x1xf32> to vector<4x16x32xf32>
    %166 = arith.subf %162, %165 : vector<4x16x32xf32>
    %167 = math.exp %166 : vector<4x16x32xf32>
    %cst_52 = arith.constant dense<0.000000e+00> : vector<4x16xf32>
    %168 = vector.multi_reduction <add>, %167, %cst_52 [2] : vector<4x16x32xf32> to vector<4x16xf32>
    %169 = vector.shape_cast %168 : vector<4x16xf32> to vector<4x16x1xf32>
    %170 = vector.broadcast %169 : vector<4x16x1xf32> to vector<4x16x32xf32>
    %171 = arith.divf %167, %170 : vector<4x16x32xf32>
    "tpu.trace_start"() <{level = 10 : i32, message = "hqk,hkc->hqc"}> : () -> ()
    %cst_53 = arith.constant dense<0.000000e+00> : vector<4x16x8xf32>
    %172 = tpu.matmul %171, %158, %cst_53 {dimension_numbers = #tpu.dot_dimension_numbers<[2], [1], [1], [2], [0, 0, 0, 1, 1, 2], [0], [0]>} : vector<4x16x32xf32>, vector<4x32x8xf32>, vector<4x16x8xf32> -> vector<4x16x8xf32>
    "tpu.trace_stop"() : () -> ()
    %173 = vector.extract_strided_slice %172 {offsets = [0, 0, 0], sizes = [1, 16, 8], strides = [1, 1, 1]} : vector<4x16x8xf32> to vector<1x16x8xf32>
    %174 = vector.shape_cast %173 : vector<1x16x8xf32> to vector<16x8xf32>
    %175 = vector.extract_strided_slice %172 {offsets = [1, 0, 0], sizes = [1, 16, 8], strides = [1, 1, 1]} : vector<4x16x8xf32> to vector<1x16x8xf32>
    %176 = vector.shape_cast %175 : vector<1x16x8xf32> to vector<16x8xf32>
    %177 = vector.extract_strided_slice %172 {offsets = [2, 0, 0], sizes = [1, 16, 8], strides = [1, 1, 1]} : vector<4x16x8xf32> to vector<1x16x8xf32>
    %178 = vector.shape_cast %177 : vector<1x16x8xf32> to vector<16x8xf32>
    %179 = vector.extract_strided_slice %172 {offsets = [3, 0, 0], sizes = [1, 16, 8], strides = [1, 1, 1]} : vector<4x16x8xf32> to vector<1x16x8xf32>
    %180 = vector.shape_cast %179 : vector<1x16x8xf32> to vector<16x8xf32>
    %181 = tpu.concatenate %174, %176, %178, %180 in 1 : vector<16x8xf32>, vector<16x8xf32>, vector<16x8xf32>, vector<16x8xf32> -> vector<16x32xf32>
    %c0_54 = arith.constant 0 : index
    %c1_55 = arith.constant 1 : index
    %c0_56 = arith.constant 0 : index
    %c0_57 = arith.constant 0 : index
    %182 = vector.load %arg8[%c0_54, %c1_55, %c0_56, %c0_57] : memref<2x2x32x32xf32, #tpu.memory_space<vmem>>, vector<1x1x32x32xf32>
    %183 = vector.shape_cast %182 : vector<1x1x32x32xf32> to vector<32x32xf32>
    %cst_58 = arith.constant dense<0.000000e+00> : vector<16x32xf32>
    %184 = tpu.matmul %181, %183, %cst_58 {dimension_numbers = #tpu.dot_dimension_numbers<[1], [0], [0], [1], [0, 0, 1, 1], [], []>} : vector<16x32xf32>, vector<32x32xf32>, vector<16x32xf32> -> vector<16x32xf32>
    %185 = vector.extract_strided_slice %6 {offsets = [0, 1, 0, 0], sizes = [1, 1, 1, 32], strides = [1, 1, 1, 1]} : vector<2x9x1x32xf32> to vector<1x1x1x32xf32>
    %186 = vector.shape_cast %185 : vector<1x1x1x32xf32> to vector<1x32xf32>
    %187 = vector.broadcast %186 : vector<1x32xf32> to vector<16x32xf32>
    %188 = arith.addf %184, %187 : vector<16x32xf32>
    %189 = arith.addf %109, %188 : vector<16x32xf32>
    %190 = vector.extract_strided_slice %6 {offsets = [0, 5, 0, 0], sizes = [1, 1, 1, 32], strides = [1, 1, 1, 1]} : vector<2x9x1x32xf32> to vector<1x1x1x32xf32>
    %191 = vector.shape_cast %190 : vector<1x1x1x32xf32> to vector<1x32xf32>
    %192 = vector.extract_strided_slice %6 {offsets = [0, 6, 0, 0], sizes = [1, 1, 1, 32], strides = [1, 1, 1, 1]} : vector<2x9x1x32xf32> to vector<1x1x1x32xf32>
    %193 = vector.shape_cast %192 : vector<1x1x1x32xf32> to vector<1x32xf32>
    %cst_59 = arith.constant dense<0.000000e+00> : vector<16xf32>
    %194 = vector.multi_reduction <add>, %189, %cst_59 [1] : vector<16x32xf32> to vector<16xf32>
    %195 = vector.shape_cast %194 : vector<16xf32> to vector<16x1xf32>
    %cst_60 = arith.constant 3.200000e+01 : f32
    %196 = vector.broadcast %cst_60 : f32 to vector<16x1xf32>
    %197 = arith.divf %195, %196 : vector<16x1xf32>
    %198 = vector.broadcast %197 : vector<16x1xf32> to vector<16x32xf32>
    %199 = arith.subf %189, %198 : vector<16x32xf32>
    %200 = arith.mulf %199, %199 : vector<16x32xf32>
    %cst_61 = arith.constant dense<0.000000e+00> : vector<16xf32>
    %201 = vector.multi_reduction <add>, %200, %cst_61 [1] : vector<16x32xf32> to vector<16xf32>
    %202 = vector.shape_cast %201 : vector<16xf32> to vector<16x1xf32>
    %cst_62 = arith.constant 3.200000e+01 : f32
    %203 = vector.broadcast %cst_62 : f32 to vector<16x1xf32>
    %204 = arith.divf %202, %203 : vector<16x1xf32>
    %205 = vector.broadcast %197 : vector<16x1xf32> to vector<16x32xf32>
    %206 = arith.subf %189, %205 : vector<16x32xf32>
    %cst_63 = arith.constant 9.99999974E-6 : f32
    %207 = vector.broadcast %cst_63 : f32 to vector<16x1xf32>
    %208 = arith.addf %204, %207 : vector<16x1xf32>
    %209 = math.rsqrt %208 : vector<16x1xf32>
    %210 = vector.broadcast %209 : vector<16x1xf32> to vector<16x32xf32>
    %211 = arith.mulf %206, %210 : vector<16x32xf32>
    %212 = vector.broadcast %191 : vector<1x32xf32> to vector<16x32xf32>
    %213 = arith.mulf %211, %212 : vector<16x32xf32>
    %214 = vector.broadcast %193 : vector<1x32xf32> to vector<16x32xf32>
    %215 = arith.addf %213, %214 : vector<16x32xf32>
    %c0_64 = arith.constant 0 : index
    %c0_65 = arith.constant 0 : index
    %c0_66 = arith.constant 0 : index
    %216 = vector.load %arg9[%c0_64, %c0_65, %c0_66] : memref<2x32x64xf32, #tpu.memory_space<vmem>>, vector<1x32x64xf32>
    %217 = vector.shape_cast %216 : vector<1x32x64xf32> to vector<32x64xf32>
    %cst_67 = arith.constant dense<0.000000e+00> : vector<16x64xf32>
    %218 = tpu.matmul %215, %217, %cst_67 {dimension_numbers = #tpu.dot_dimension_numbers<[1], [0], [0], [1], [0, 0, 1, 1], [], []>} : vector<16x32xf32>, vector<32x64xf32>, vector<16x64xf32> -> vector<16x64xf32>
    %c0_68 = arith.constant 0 : index
    %c0_69 = arith.constant 0 : index
    %c0_70 = arith.constant 0 : index
    %219 = vector.load %arg10[%c0_68, %c0_69, %c0_70] : memref<2x1x64xf32, #tpu.memory_space<vmem>>, vector<1x1x64xf32>
    %220 = vector.shape_cast %219 : vector<1x1x64xf32> to vector<1x64xf32>
    %221 = vector.broadcast %220 : vector<1x64xf32> to vector<16x64xf32>
    %222 = arith.addf %218, %221 : vector<16x64xf32>
    %cst_71 = arith.constant 0.000000e+00 : f32
    %223 = vector.broadcast %cst_71 : f32 to vector<16x64xf32>
    %224 = arith.maximumf %222, %223 : vector<16x64xf32>
    %c0_72 = arith.constant 0 : index
    %c0_73 = arith.constant 0 : index
    %c0_74 = arith.constant 0 : index
    %225 = vector.load %arg11[%c0_72, %c0_73, %c0_74] : memref<2x64x32xf32, #tpu.memory_space<vmem>>, vector<1x64x32xf32>
    %226 = vector.shape_cast %225 : vector<1x64x32xf32> to vector<64x32xf32>
    %cst_75 = arith.constant dense<0.000000e+00> : vector<16x32xf32>
    %227 = tpu.matmul %224, %226, %cst_75 {dimension_numbers = #tpu.dot_dimension_numbers<[1], [0], [0], [1], [0, 0, 1, 1], [], []>} : vector<16x64xf32>, vector<64x32xf32>, vector<16x32xf32> -> vector<16x32xf32>
    %228 = vector.extract_strided_slice %6 {offsets = [0, 2, 0, 0], sizes = [1, 1, 1, 32], strides = [1, 1, 1, 1]} : vector<2x9x1x32xf32> to vector<1x1x1x32xf32>
    %229 = vector.shape_cast %228 : vector<1x1x1x32xf32> to vector<1x32xf32>
    %230 = vector.broadcast %229 : vector<1x32xf32> to vector<16x32xf32>
    %231 = arith.addf %227, %230 : vector<16x32xf32>
    %232 = arith.addf %215, %231 : vector<16x32xf32>
    %233 = vector.extract_strided_slice %6 {offsets = [0, 7, 0, 0], sizes = [1, 1, 1, 32], strides = [1, 1, 1, 1]} : vector<2x9x1x32xf32> to vector<1x1x1x32xf32>
    %234 = vector.shape_cast %233 : vector<1x1x1x32xf32> to vector<1x32xf32>
    %235 = vector.extract_strided_slice %6 {offsets = [0, 8, 0, 0], sizes = [1, 1, 1, 32], strides = [1, 1, 1, 1]} : vector<2x9x1x32xf32> to vector<1x1x1x32xf32>
    %236 = vector.shape_cast %235 : vector<1x1x1x32xf32> to vector<1x32xf32>
    %cst_76 = arith.constant dense<0.000000e+00> : vector<16xf32>
    %237 = vector.multi_reduction <add>, %232, %cst_76 [1] : vector<16x32xf32> to vector<16xf32>
    %238 = vector.shape_cast %237 : vector<16xf32> to vector<16x1xf32>
    %cst_77 = arith.constant 3.200000e+01 : f32
    %239 = vector.broadcast %cst_77 : f32 to vector<16x1xf32>
    %240 = arith.divf %238, %239 : vector<16x1xf32>
    %241 = vector.broadcast %240 : vector<16x1xf32> to vector<16x32xf32>
    %242 = arith.subf %232, %241 : vector<16x32xf32>
    %243 = arith.mulf %242, %242 : vector<16x32xf32>
    %cst_78 = arith.constant dense<0.000000e+00> : vector<16xf32>
    %244 = vector.multi_reduction <add>, %243, %cst_78 [1] : vector<16x32xf32> to vector<16xf32>
    %245 = vector.shape_cast %244 : vector<16xf32> to vector<16x1xf32>
    %cst_79 = arith.constant 3.200000e+01 : f32
    %246 = vector.broadcast %cst_79 : f32 to vector<16x1xf32>
    %247 = arith.divf %245, %246 : vector<16x1xf32>
    %248 = vector.broadcast %240 : vector<16x1xf32> to vector<16x32xf32>
    %249 = arith.subf %232, %248 : vector<16x32xf32>
    %cst_80 = arith.constant 9.99999974E-6 : f32
    %250 = vector.broadcast %cst_80 : f32 to vector<16x1xf32>
    %251 = arith.addf %247, %250 : vector<16x1xf32>
    %252 = math.rsqrt %251 : vector<16x1xf32>
    %253 = vector.broadcast %252 : vector<16x1xf32> to vector<16x32xf32>
    %254 = arith.mulf %249, %253 : vector<16x32xf32>
    %255 = vector.broadcast %234 : vector<1x32xf32> to vector<16x32xf32>
    %256 = arith.mulf %254, %255 : vector<16x32xf32>
    %257 = vector.broadcast %236 : vector<1x32xf32> to vector<16x32xf32>
    %258 = arith.addf %256, %257 : vector<16x32xf32>
    %c1_81 = arith.constant 1 : index
    %c0_82 = arith.constant 0 : index
    %c0_83 = arith.constant 0 : index
    %c0_84 = arith.constant 0 : index
    %259 = vector.load %arg6[%c1_81, %c0_82, %c0_83, %c0_84] : memref<2x2x32x96xf32, #tpu.memory_space<vmem>>, vector<1x1x32x96xf32>
    %260 = vector.shape_cast %259 : vector<1x1x32x96xf32> to vector<32x96xf32>
    %c1_85 = arith.constant 1 : index
    %c0_86 = arith.constant 0 : index
    %c0_87 = arith.constant 0 : index
    %c0_88 = arith.constant 0 : index
    %261 = vector.load %arg7[%c1_85, %c0_86, %c0_87, %c0_88] : memref<2x2x1x96xf32, #tpu.memory_space<vmem>>, vector<1x1x1x96xf32>
    %262 = vector.shape_cast %261 : vector<1x1x1x96xf32> to vector<1x96xf32>
    %263 = arith.addf %258, %1 : vector<16x32xf32>
    %264 = vector.extract_strided_slice %260 {offsets = [0, 0], sizes = [32, 64], strides = [1, 1]} : vector<32x96xf32> to vector<32x64xf32>
    %cst_89 = arith.constant dense<0.000000e+00> : vector<16x64xf32>
    %265 = tpu.matmul %263, %264, %cst_89 {dimension_numbers = #tpu.dot_dimension_numbers<[1], [0], [0], [1], [0, 0, 1, 1], [], []>} : vector<16x32xf32>, vector<32x64xf32>, vector<16x64xf32> -> vector<16x64xf32>
    %266 = vector.extract_strided_slice %262 {offsets = [0, 0], sizes = [1, 64], strides = [1, 1]} : vector<1x96xf32> to vector<1x64xf32>
    %267 = vector.broadcast %266 : vector<1x64xf32> to vector<16x64xf32>
    %268 = arith.addf %265, %267 : vector<16x64xf32>
    %269 = vector.extract_strided_slice %260 {offsets = [0, 64], sizes = [32, 32], strides = [1, 1]} : vector<32x96xf32> to vector<32x32xf32>
    %cst_90 = arith.constant dense<0.000000e+00> : vector<16x32xf32>
    %270 = tpu.matmul %258, %269, %cst_90 {dimension_numbers = #tpu.dot_dimension_numbers<[1], [0], [0], [1], [0, 0, 1, 1], [], []>} : vector<16x32xf32>, vector<32x32xf32>, vector<16x32xf32> -> vector<16x32xf32>
    %271 = vector.extract_strided_slice %262 {offsets = [0, 64], sizes = [1, 32], strides = [1, 1]} : vector<1x96xf32> to vector<1x32xf32>
    %272 = vector.broadcast %271 : vector<1x32xf32> to vector<16x32xf32>
    %273 = arith.addf %270, %272 : vector<16x32xf32>
    %274 = vector.extract_strided_slice %268 {offsets = [0, 0], sizes = [16, 32], strides = [1, 1]} : vector<16x64xf32> to vector<16x32xf32>
    %cst_91 = arith.constant 0.353553385 : f32
    %275 = vector.broadcast %cst_91 : f32 to vector<16x32xf32>
    %276 = arith.mulf %274, %275 : vector<16x32xf32>
    %277 = vector.extract_strided_slice %268 {offsets = [0, 32], sizes = [16, 32], strides = [1, 1]} : vector<16x64xf32> to vector<16x32xf32>
    %278 = vector.extract_strided_slice %276 {offsets = [0, 0], sizes = [16, 8], strides = [1, 1]} : vector<16x32xf32> to vector<16x8xf32>
    %279 = vector.extract_strided_slice %276 {offsets = [0, 8], sizes = [16, 8], strides = [1, 1]} : vector<16x32xf32> to vector<16x8xf32>
    %280 = vector.extract_strided_slice %276 {offsets = [0, 16], sizes = [16, 8], strides = [1, 1]} : vector<16x32xf32> to vector<16x8xf32>
    %281 = vector.extract_strided_slice %276 {offsets = [0, 24], sizes = [16, 8], strides = [1, 1]} : vector<16x32xf32> to vector<16x8xf32>
    %282 = vector.shape_cast %278 : vector<16x8xf32> to vector<1x16x8xf32>
    %283 = vector.shape_cast %279 : vector<16x8xf32> to vector<1x16x8xf32>
    %284 = vector.shape_cast %280 : vector<16x8xf32> to vector<1x16x8xf32>
    %285 = vector.shape_cast %281 : vector<16x8xf32> to vector<1x16x8xf32>
    %286 = tpu.concatenate %282, %283, %284, %285 in 0 : vector<1x16x8xf32>, vector<1x16x8xf32>, vector<1x16x8xf32>, vector<1x16x8xf32> -> vector<4x16x8xf32>
    %287 = vector.extract_strided_slice %277 {offsets = [0, 0], sizes = [16, 8], strides = [1, 1]} : vector<16x32xf32> to vector<16x8xf32>
    %288 = vector.extract_strided_slice %277 {offsets = [0, 8], sizes = [16, 8], strides = [1, 1]} : vector<16x32xf32> to vector<16x8xf32>
    %289 = vector.extract_strided_slice %277 {offsets = [0, 16], sizes = [16, 8], strides = [1, 1]} : vector<16x32xf32> to vector<16x8xf32>
    %290 = vector.extract_strided_slice %277 {offsets = [0, 24], sizes = [16, 8], strides = [1, 1]} : vector<16x32xf32> to vector<16x8xf32>
    %291 = vector.shape_cast %287 : vector<16x8xf32> to vector<1x16x8xf32>
    %292 = vector.shape_cast %288 : vector<16x8xf32> to vector<1x16x8xf32>
    %293 = vector.shape_cast %289 : vector<16x8xf32> to vector<1x16x8xf32>
    %294 = vector.shape_cast %290 : vector<16x8xf32> to vector<1x16x8xf32>
    %295 = tpu.concatenate %291, %292, %293, %294 in 0 : vector<1x16x8xf32>, vector<1x16x8xf32>, vector<1x16x8xf32>, vector<1x16x8xf32> -> vector<4x16x8xf32>
    %296 = vector.extract_strided_slice %273 {offsets = [0, 0], sizes = [16, 8], strides = [1, 1]} : vector<16x32xf32> to vector<16x8xf32>
    %297 = vector.extract_strided_slice %273 {offsets = [0, 8], sizes = [16, 8], strides = [1, 1]} : vector<16x32xf32> to vector<16x8xf32>
    %298 = vector.extract_strided_slice %273 {offsets = [0, 16], sizes = [16, 8], strides = [1, 1]} : vector<16x32xf32> to vector<16x8xf32>
    %299 = vector.extract_strided_slice %273 {offsets = [0, 24], sizes = [16, 8], strides = [1, 1]} : vector<16x32xf32> to vector<16x8xf32>
    %300 = vector.shape_cast %296 : vector<16x8xf32> to vector<1x16x8xf32>
    %301 = vector.shape_cast %297 : vector<16x8xf32> to vector<1x16x8xf32>
    %302 = vector.shape_cast %298 : vector<16x8xf32> to vector<1x16x8xf32>
    %303 = vector.shape_cast %299 : vector<16x8xf32> to vector<1x16x8xf32>
    %304 = tpu.concatenate %300, %301, %302, %303 in 0 : vector<1x16x8xf32>, vector<1x16x8xf32>, vector<1x16x8xf32>, vector<1x16x8xf32> -> vector<4x16x8xf32>
    "tpu.trace_start"() <{level = 10 : i32, message = "hqc,hkc->hqk"}> : () -> ()
    %cst_92 = arith.constant dense<0.000000e+00> : vector<4x16x16xf32>
    %305 = tpu.matmul %286, %295, %cst_92 {dimension_numbers = #tpu.dot_dimension_numbers<[2], [2], [1], [1], [0, 0, 0, 1, 1, 1], [0], [0]>} : vector<4x16x8xf32>, vector<4x16x8xf32>, vector<4x16x16xf32> -> vector<4x16x16xf32>
    "tpu.trace_stop"() : () -> ()
    %306 = vector.shape_cast %4 : vector<16x16xf32> to vector<1x16x16xf32>
    %307 = vector.broadcast %306 : vector<1x16x16xf32> to vector<4x16x16xf32>
    %308 = arith.addf %305, %307 : vector<4x16x16xf32>
    %cst_93 = arith.constant dense<0xFF800000> : vector<4x16xf32>
    %309 = vector.multi_reduction <maximumf>, %308, %cst_93 [2] : vector<4x16x16xf32> to vector<4x16xf32>
    %310 = vector.shape_cast %309 : vector<4x16xf32> to vector<4x16x1xf32>
    %311 = vector.broadcast %310 : vector<4x16x1xf32> to vector<4x16x16xf32>
    %312 = arith.subf %308, %311 : vector<4x16x16xf32>
    %313 = math.exp %312 : vector<4x16x16xf32>
    %cst_94 = arith.constant dense<0.000000e+00> : vector<4x16xf32>
    %314 = vector.multi_reduction <add>, %313, %cst_94 [2] : vector<4x16x16xf32> to vector<4x16xf32>
    %315 = vector.shape_cast %314 : vector<4x16xf32> to vector<4x16x1xf32>
    %316 = vector.broadcast %315 : vector<4x16x1xf32> to vector<4x16x16xf32>
    %317 = arith.divf %313, %316 : vector<4x16x16xf32>
    "tpu.trace_start"() <{level = 10 : i32, message = "hqk,hkc->hqc"}> : () -> ()
    %cst_95 = arith.constant dense<0.000000e+00> : vector<4x16x8xf32>
    %318 = tpu.matmul %317, %304, %cst_95 {dimension_numbers = #tpu.dot_dimension_numbers<[2], [1], [1], [2], [0, 0, 0, 1, 1, 2], [0], [0]>} : vector<4x16x16xf32>, vector<4x16x8xf32>, vector<4x16x8xf32> -> vector<4x16x8xf32>
    "tpu.trace_stop"() : () -> ()
    %319 = vector.extract_strided_slice %318 {offsets = [0, 0, 0], sizes = [1, 16, 8], strides = [1, 1, 1]} : vector<4x16x8xf32> to vector<1x16x8xf32>
    %320 = vector.shape_cast %319 : vector<1x16x8xf32> to vector<16x8xf32>
    %321 = vector.extract_strided_slice %318 {offsets = [1, 0, 0], sizes = [1, 16, 8], strides = [1, 1, 1]} : vector<4x16x8xf32> to vector<1x16x8xf32>
    %322 = vector.shape_cast %321 : vector<1x16x8xf32> to vector<16x8xf32>
    %323 = vector.extract_strided_slice %318 {offsets = [2, 0, 0], sizes = [1, 16, 8], strides = [1, 1, 1]} : vector<4x16x8xf32> to vector<1x16x8xf32>
    %324 = vector.shape_cast %323 : vector<1x16x8xf32> to vector<16x8xf32>
    %325 = vector.extract_strided_slice %318 {offsets = [3, 0, 0], sizes = [1, 16, 8], strides = [1, 1, 1]} : vector<4x16x8xf32> to vector<1x16x8xf32>
    %326 = vector.shape_cast %325 : vector<1x16x8xf32> to vector<16x8xf32>
    %327 = tpu.concatenate %320, %322, %324, %326 in 1 : vector<16x8xf32>, vector<16x8xf32>, vector<16x8xf32>, vector<16x8xf32> -> vector<16x32xf32>
    %c1_96 = arith.constant 1 : index
    %c0_97 = arith.constant 0 : index
    %c0_98 = arith.constant 0 : index
    %c0_99 = arith.constant 0 : index
    %328 = vector.load %arg8[%c1_96, %c0_97, %c0_98, %c0_99] : memref<2x2x32x32xf32, #tpu.memory_space<vmem>>, vector<1x1x32x32xf32>
    %329 = vector.shape_cast %328 : vector<1x1x32x32xf32> to vector<32x32xf32>
    %cst_100 = arith.constant dense<0.000000e+00> : vector<16x32xf32>
    %330 = tpu.matmul %327, %329, %cst_100 {dimension_numbers = #tpu.dot_dimension_numbers<[1], [0], [0], [1], [0, 0, 1, 1], [], []>} : vector<16x32xf32>, vector<32x32xf32>, vector<16x32xf32> -> vector<16x32xf32>
    %331 = vector.extract_strided_slice %6 {offsets = [1, 0, 0, 0], sizes = [1, 1, 1, 32], strides = [1, 1, 1, 1]} : vector<2x9x1x32xf32> to vector<1x1x1x32xf32>
    %332 = vector.shape_cast %331 : vector<1x1x1x32xf32> to vector<1x32xf32>
    %333 = vector.broadcast %332 : vector<1x32xf32> to vector<16x32xf32>
    %334 = arith.addf %330, %333 : vector<16x32xf32>
    %335 = arith.addf %258, %334 : vector<16x32xf32>
    %336 = vector.extract_strided_slice %6 {offsets = [1, 3, 0, 0], sizes = [1, 1, 1, 32], strides = [1, 1, 1, 1]} : vector<2x9x1x32xf32> to vector<1x1x1x32xf32>
    %337 = vector.shape_cast %336 : vector<1x1x1x32xf32> to vector<1x32xf32>
    %338 = vector.extract_strided_slice %6 {offsets = [1, 4, 0, 0], sizes = [1, 1, 1, 32], strides = [1, 1, 1, 1]} : vector<2x9x1x32xf32> to vector<1x1x1x32xf32>
    %339 = vector.shape_cast %338 : vector<1x1x1x32xf32> to vector<1x32xf32>
    %cst_101 = arith.constant dense<0.000000e+00> : vector<16xf32>
    %340 = vector.multi_reduction <add>, %335, %cst_101 [1] : vector<16x32xf32> to vector<16xf32>
    %341 = vector.shape_cast %340 : vector<16xf32> to vector<16x1xf32>
    %cst_102 = arith.constant 3.200000e+01 : f32
    %342 = vector.broadcast %cst_102 : f32 to vector<16x1xf32>
    %343 = arith.divf %341, %342 : vector<16x1xf32>
    %344 = vector.broadcast %343 : vector<16x1xf32> to vector<16x32xf32>
    %345 = arith.subf %335, %344 : vector<16x32xf32>
    %346 = arith.mulf %345, %345 : vector<16x32xf32>
    %cst_103 = arith.constant dense<0.000000e+00> : vector<16xf32>
    %347 = vector.multi_reduction <add>, %346, %cst_103 [1] : vector<16x32xf32> to vector<16xf32>
    %348 = vector.shape_cast %347 : vector<16xf32> to vector<16x1xf32>
    %cst_104 = arith.constant 3.200000e+01 : f32
    %349 = vector.broadcast %cst_104 : f32 to vector<16x1xf32>
    %350 = arith.divf %348, %349 : vector<16x1xf32>
    %351 = vector.broadcast %343 : vector<16x1xf32> to vector<16x32xf32>
    %352 = arith.subf %335, %351 : vector<16x32xf32>
    %cst_105 = arith.constant 9.99999974E-6 : f32
    %353 = vector.broadcast %cst_105 : f32 to vector<16x1xf32>
    %354 = arith.addf %350, %353 : vector<16x1xf32>
    %355 = math.rsqrt %354 : vector<16x1xf32>
    %356 = vector.broadcast %355 : vector<16x1xf32> to vector<16x32xf32>
    %357 = arith.mulf %352, %356 : vector<16x32xf32>
    %358 = vector.broadcast %337 : vector<1x32xf32> to vector<16x32xf32>
    %359 = arith.mulf %357, %358 : vector<16x32xf32>
    %360 = vector.broadcast %339 : vector<1x32xf32> to vector<16x32xf32>
    %361 = arith.addf %359, %360 : vector<16x32xf32>
    %c1_106 = arith.constant 1 : index
    %c1_107 = arith.constant 1 : index
    %c0_108 = arith.constant 0 : index
    %c0_109 = arith.constant 0 : index
    %362 = vector.load %arg6[%c1_106, %c1_107, %c0_108, %c0_109] : memref<2x2x32x96xf32, #tpu.memory_space<vmem>>, vector<1x1x32x96xf32>
    %363 = vector.shape_cast %362 : vector<1x1x32x96xf32> to vector<32x96xf32>
    %c1_110 = arith.constant 1 : index
    %c1_111 = arith.constant 1 : index
    %c0_112 = arith.constant 0 : index
    %c0_113 = arith.constant 0 : index
    %364 = vector.load %arg7[%c1_110, %c1_111, %c0_112, %c0_113] : memref<2x2x1x96xf32, #tpu.memory_space<vmem>>, vector<1x1x1x96xf32>
    %365 = vector.shape_cast %364 : vector<1x1x1x96xf32> to vector<1x96xf32>
    %366 = arith.addf %361, %1 : vector<16x32xf32>
    %367 = vector.extract_strided_slice %363 {offsets = [0, 0], sizes = [32, 32], strides = [1, 1]} : vector<32x96xf32> to vector<32x32xf32>
    %cst_114 = arith.constant dense<0.000000e+00> : vector<16x32xf32>
    %368 = tpu.matmul %366, %367, %cst_114 {dimension_numbers = #tpu.dot_dimension_numbers<[1], [0], [0], [1], [0, 0, 1, 1], [], []>} : vector<16x32xf32>, vector<32x32xf32>, vector<16x32xf32> -> vector<16x32xf32>
    %369 = vector.extract_strided_slice %365 {offsets = [0, 0], sizes = [1, 32], strides = [1, 1]} : vector<1x96xf32> to vector<1x32xf32>
    %370 = vector.broadcast %369 : vector<1x32xf32> to vector<16x32xf32>
    %371 = arith.addf %368, %370 : vector<16x32xf32>
    %cst_115 = arith.constant 0.353553385 : f32
    %372 = vector.broadcast %cst_115 : f32 to vector<16x32xf32>
    %373 = arith.mulf %371, %372 : vector<16x32xf32>
    %374 = vector.extract_strided_slice %363 {offsets = [0, 32], sizes = [32, 32], strides = [1, 1]} : vector<32x96xf32> to vector<32x32xf32>
    %cst_116 = arith.constant dense<0.000000e+00> : vector<32x32xf32>
    %375 = tpu.matmul %3, %374, %cst_116 {dimension_numbers = #tpu.dot_dimension_numbers<[1], [0], [0], [1], [0, 0, 1, 1], [], []>} : vector<32x32xf32>, vector<32x32xf32>, vector<32x32xf32> -> vector<32x32xf32>
    %376 = vector.extract_strided_slice %365 {offsets = [0, 32], sizes = [1, 32], strides = [1, 1]} : vector<1x96xf32> to vector<1x32xf32>
    %377 = vector.broadcast %376 : vector<1x32xf32> to vector<32x32xf32>
    %378 = arith.addf %375, %377 : vector<32x32xf32>
    %379 = vector.extract_strided_slice %363 {offsets = [0, 64], sizes = [32, 32], strides = [1, 1]} : vector<32x96xf32> to vector<32x32xf32>
    %cst_117 = arith.constant dense<0.000000e+00> : vector<32x32xf32>
    %380 = tpu.matmul %2, %379, %cst_117 {dimension_numbers = #tpu.dot_dimension_numbers<[1], [0], [0], [1], [0, 0, 1, 1], [], []>} : vector<32x32xf32>, vector<32x32xf32>, vector<32x32xf32> -> vector<32x32xf32>
    %381 = vector.extract_strided_slice %365 {offsets = [0, 64], sizes = [1, 32], strides = [1, 1]} : vector<1x96xf32> to vector<1x32xf32>
    %382 = vector.broadcast %381 : vector<1x32xf32> to vector<32x32xf32>
    %383 = arith.addf %380, %382 : vector<32x32xf32>
    %384 = vector.extract_strided_slice %373 {offsets = [0, 0], sizes = [16, 8], strides = [1, 1]} : vector<16x32xf32> to vector<16x8xf32>
    %385 = vector.extract_strided_slice %373 {offsets = [0, 8], sizes = [16, 8], strides = [1, 1]} : vector<16x32xf32> to vector<16x8xf32>
    %386 = vector.extract_strided_slice %373 {offsets = [0, 16], sizes = [16, 8], strides = [1, 1]} : vector<16x32xf32> to vector<16x8xf32>
    %387 = vector.extract_strided_slice %373 {offsets = [0, 24], sizes = [16, 8], strides = [1, 1]} : vector<16x32xf32> to vector<16x8xf32>
    %388 = vector.shape_cast %384 : vector<16x8xf32> to vector<1x16x8xf32>
    %389 = vector.shape_cast %385 : vector<16x8xf32> to vector<1x16x8xf32>
    %390 = vector.shape_cast %386 : vector<16x8xf32> to vector<1x16x8xf32>
    %391 = vector.shape_cast %387 : vector<16x8xf32> to vector<1x16x8xf32>
    %392 = tpu.concatenate %388, %389, %390, %391 in 0 : vector<1x16x8xf32>, vector<1x16x8xf32>, vector<1x16x8xf32>, vector<1x16x8xf32> -> vector<4x16x8xf32>
    %393 = vector.extract_strided_slice %378 {offsets = [0, 0], sizes = [32, 8], strides = [1, 1]} : vector<32x32xf32> to vector<32x8xf32>
    %394 = vector.extract_strided_slice %378 {offsets = [0, 8], sizes = [32, 8], strides = [1, 1]} : vector<32x32xf32> to vector<32x8xf32>
    %395 = vector.extract_strided_slice %378 {offsets = [0, 16], sizes = [32, 8], strides = [1, 1]} : vector<32x32xf32> to vector<32x8xf32>
    %396 = vector.extract_strided_slice %378 {offsets = [0, 24], sizes = [32, 8], strides = [1, 1]} : vector<32x32xf32> to vector<32x8xf32>
    %397 = vector.shape_cast %393 : vector<32x8xf32> to vector<1x32x8xf32>
    %398 = vector.shape_cast %394 : vector<32x8xf32> to vector<1x32x8xf32>
    %399 = vector.shape_cast %395 : vector<32x8xf32> to vector<1x32x8xf32>
    %400 = vector.shape_cast %396 : vector<32x8xf32> to vector<1x32x8xf32>
    %401 = tpu.concatenate %397, %398, %399, %400 in 0 : vector<1x32x8xf32>, vector<1x32x8xf32>, vector<1x32x8xf32>, vector<1x32x8xf32> -> vector<4x32x8xf32>
    %402 = vector.extract_strided_slice %383 {offsets = [0, 0], sizes = [32, 8], strides = [1, 1]} : vector<32x32xf32> to vector<32x8xf32>
    %403 = vector.extract_strided_slice %383 {offsets = [0, 8], sizes = [32, 8], strides = [1, 1]} : vector<32x32xf32> to vector<32x8xf32>
    %404 = vector.extract_strided_slice %383 {offsets = [0, 16], sizes = [32, 8], strides = [1, 1]} : vector<32x32xf32> to vector<32x8xf32>
    %405 = vector.extract_strided_slice %383 {offsets = [0, 24], sizes = [32, 8], strides = [1, 1]} : vector<32x32xf32> to vector<32x8xf32>
    %406 = vector.shape_cast %402 : vector<32x8xf32> to vector<1x32x8xf32>
    %407 = vector.shape_cast %403 : vector<32x8xf32> to vector<1x32x8xf32>
    %408 = vector.shape_cast %404 : vector<32x8xf32> to vector<1x32x8xf32>
    %409 = vector.shape_cast %405 : vector<32x8xf32> to vector<1x32x8xf32>
    %410 = tpu.concatenate %406, %407, %408, %409 in 0 : vector<1x32x8xf32>, vector<1x32x8xf32>, vector<1x32x8xf32>, vector<1x32x8xf32> -> vector<4x32x8xf32>
    "tpu.trace_start"() <{level = 10 : i32, message = "hqc,hkc->hqk"}> : () -> ()
    %cst_118 = arith.constant dense<0.000000e+00> : vector<4x16x32xf32>
    %411 = tpu.matmul %392, %401, %cst_118 {dimension_numbers = #tpu.dot_dimension_numbers<[2], [2], [1], [1], [0, 0, 0, 1, 1, 1], [0], [0]>} : vector<4x16x8xf32>, vector<4x32x8xf32>, vector<4x16x32xf32> -> vector<4x16x32xf32>
    "tpu.trace_stop"() : () -> ()
    %412 = vector.shape_cast %5 : vector<16x32xf32> to vector<1x16x32xf32>
    %413 = vector.broadcast %412 : vector<1x16x32xf32> to vector<4x16x32xf32>
    %414 = arith.addf %411, %413 : vector<4x16x32xf32>
    %cst_119 = arith.constant dense<0xFF800000> : vector<4x16xf32>
    %415 = vector.multi_reduction <maximumf>, %414, %cst_119 [2] : vector<4x16x32xf32> to vector<4x16xf32>
    %416 = vector.shape_cast %415 : vector<4x16xf32> to vector<4x16x1xf32>
    %417 = vector.broadcast %416 : vector<4x16x1xf32> to vector<4x16x32xf32>
    %418 = arith.subf %414, %417 : vector<4x16x32xf32>
    %419 = math.exp %418 : vector<4x16x32xf32>
    %cst_120 = arith.constant dense<0.000000e+00> : vector<4x16xf32>
    %420 = vector.multi_reduction <add>, %419, %cst_120 [2] : vector<4x16x32xf32> to vector<4x16xf32>
    %421 = vector.shape_cast %420 : vector<4x16xf32> to vector<4x16x1xf32>
    %422 = vector.broadcast %421 : vector<4x16x1xf32> to vector<4x16x32xf32>
    %423 = arith.divf %419, %422 : vector<4x16x32xf32>
    "tpu.trace_start"() <{level = 10 : i32, message = "hqk,hkc->hqc"}> : () -> ()
    %cst_121 = arith.constant dense<0.000000e+00> : vector<4x16x8xf32>
    %424 = tpu.matmul %423, %410, %cst_121 {dimension_numbers = #tpu.dot_dimension_numbers<[2], [1], [1], [2], [0, 0, 0, 1, 1, 2], [0], [0]>} : vector<4x16x32xf32>, vector<4x32x8xf32>, vector<4x16x8xf32> -> vector<4x16x8xf32>
    "tpu.trace_stop"() : () -> ()
    %425 = vector.extract_strided_slice %424 {offsets = [0, 0, 0], sizes = [1, 16, 8], strides = [1, 1, 1]} : vector<4x16x8xf32> to vector<1x16x8xf32>
    %426 = vector.shape_cast %425 : vector<1x16x8xf32> to vector<16x8xf32>
    %427 = vector.extract_strided_slice %424 {offsets = [1, 0, 0], sizes = [1, 16, 8], strides = [1, 1, 1]} : vector<4x16x8xf32> to vector<1x16x8xf32>
    %428 = vector.shape_cast %427 : vector<1x16x8xf32> to vector<16x8xf32>
    %429 = vector.extract_strided_slice %424 {offsets = [2, 0, 0], sizes = [1, 16, 8], strides = [1, 1, 1]} : vector<4x16x8xf32> to vector<1x16x8xf32>
    %430 = vector.shape_cast %429 : vector<1x16x8xf32> to vector<16x8xf32>
    %431 = vector.extract_strided_slice %424 {offsets = [3, 0, 0], sizes = [1, 16, 8], strides = [1, 1, 1]} : vector<4x16x8xf32> to vector<1x16x8xf32>
    %432 = vector.shape_cast %431 : vector<1x16x8xf32> to vector<16x8xf32>
    %433 = tpu.concatenate %426, %428, %430, %432 in 1 : vector<16x8xf32>, vector<16x8xf32>, vector<16x8xf32>, vector<16x8xf32> -> vector<16x32xf32>
    %c1_122 = arith.constant 1 : index
    %c1_123 = arith.constant 1 : index
    %c0_124 = arith.constant 0 : index
    %c0_125 = arith.constant 0 : index
    %434 = vector.load %arg8[%c1_122, %c1_123, %c0_124, %c0_125] : memref<2x2x32x32xf32, #tpu.memory_space<vmem>>, vector<1x1x32x32xf32>
    %435 = vector.shape_cast %434 : vector<1x1x32x32xf32> to vector<32x32xf32>
    %cst_126 = arith.constant dense<0.000000e+00> : vector<16x32xf32>
    %436 = tpu.matmul %433, %435, %cst_126 {dimension_numbers = #tpu.dot_dimension_numbers<[1], [0], [0], [1], [0, 0, 1, 1], [], []>} : vector<16x32xf32>, vector<32x32xf32>, vector<16x32xf32> -> vector<16x32xf32>
    %437 = vector.extract_strided_slice %6 {offsets = [1, 1, 0, 0], sizes = [1, 1, 1, 32], strides = [1, 1, 1, 1]} : vector<2x9x1x32xf32> to vector<1x1x1x32xf32>
    %438 = vector.shape_cast %437 : vector<1x1x1x32xf32> to vector<1x32xf32>
    %439 = vector.broadcast %438 : vector<1x32xf32> to vector<16x32xf32>
    %440 = arith.addf %436, %439 : vector<16x32xf32>
    %441 = arith.addf %361, %440 : vector<16x32xf32>
    %442 = vector.extract_strided_slice %6 {offsets = [1, 5, 0, 0], sizes = [1, 1, 1, 32], strides = [1, 1, 1, 1]} : vector<2x9x1x32xf32> to vector<1x1x1x32xf32>
    %443 = vector.shape_cast %442 : vector<1x1x1x32xf32> to vector<1x32xf32>
    %444 = vector.extract_strided_slice %6 {offsets = [1, 6, 0, 0], sizes = [1, 1, 1, 32], strides = [1, 1, 1, 1]} : vector<2x9x1x32xf32> to vector<1x1x1x32xf32>
    %445 = vector.shape_cast %444 : vector<1x1x1x32xf32> to vector<1x32xf32>
    %cst_127 = arith.constant dense<0.000000e+00> : vector<16xf32>
    %446 = vector.multi_reduction <add>, %441, %cst_127 [1] : vector<16x32xf32> to vector<16xf32>
    %447 = vector.shape_cast %446 : vector<16xf32> to vector<16x1xf32>
    %cst_128 = arith.constant 3.200000e+01 : f32
    %448 = vector.broadcast %cst_128 : f32 to vector<16x1xf32>
    %449 = arith.divf %447, %448 : vector<16x1xf32>
    %450 = vector.broadcast %449 : vector<16x1xf32> to vector<16x32xf32>
    %451 = arith.subf %441, %450 : vector<16x32xf32>
    %452 = arith.mulf %451, %451 : vector<16x32xf32>
    %cst_129 = arith.constant dense<0.000000e+00> : vector<16xf32>
    %453 = vector.multi_reduction <add>, %452, %cst_129 [1] : vector<16x32xf32> to vector<16xf32>
    %454 = vector.shape_cast %453 : vector<16xf32> to vector<16x1xf32>
    %cst_130 = arith.constant 3.200000e+01 : f32
    %455 = vector.broadcast %cst_130 : f32 to vector<16x1xf32>
    %456 = arith.divf %454, %455 : vector<16x1xf32>
    %457 = vector.broadcast %449 : vector<16x1xf32> to vector<16x32xf32>
    %458 = arith.subf %441, %457 : vector<16x32xf32>
    %cst_131 = arith.constant 9.99999974E-6 : f32
    %459 = vector.broadcast %cst_131 : f32 to vector<16x1xf32>
    %460 = arith.addf %456, %459 : vector<16x1xf32>
    %461 = math.rsqrt %460 : vector<16x1xf32>
    %462 = vector.broadcast %461 : vector<16x1xf32> to vector<16x32xf32>
    %463 = arith.mulf %458, %462 : vector<16x32xf32>
    %464 = vector.broadcast %443 : vector<1x32xf32> to vector<16x32xf32>
    %465 = arith.mulf %463, %464 : vector<16x32xf32>
    %466 = vector.broadcast %445 : vector<1x32xf32> to vector<16x32xf32>
    %467 = arith.addf %465, %466 : vector<16x32xf32>
    %c1_132 = arith.constant 1 : index
    %c0_133 = arith.constant 0 : index
    %c0_134 = arith.constant 0 : index
    %468 = vector.load %arg9[%c1_132, %c0_133, %c0_134] : memref<2x32x64xf32, #tpu.memory_space<vmem>>, vector<1x32x64xf32>
    %469 = vector.shape_cast %468 : vector<1x32x64xf32> to vector<32x64xf32>
    %cst_135 = arith.constant dense<0.000000e+00> : vector<16x64xf32>
    %470 = tpu.matmul %467, %469, %cst_135 {dimension_numbers = #tpu.dot_dimension_numbers<[1], [0], [0], [1], [0, 0, 1, 1], [], []>} : vector<16x32xf32>, vector<32x64xf32>, vector<16x64xf32> -> vector<16x64xf32>
    %c1_136 = arith.constant 1 : index
    %c0_137 = arith.constant 0 : index
    %c0_138 = arith.constant 0 : index
    %471 = vector.load %arg10[%c1_136, %c0_137, %c0_138] : memref<2x1x64xf32, #tpu.memory_space<vmem>>, vector<1x1x64xf32>
    %472 = vector.shape_cast %471 : vector<1x1x64xf32> to vector<1x64xf32>
    %473 = vector.broadcast %472 : vector<1x64xf32> to vector<16x64xf32>
    %474 = arith.addf %470, %473 : vector<16x64xf32>
    %cst_139 = arith.constant 0.000000e+00 : f32
    %475 = vector.broadcast %cst_139 : f32 to vector<16x64xf32>
    %476 = arith.maximumf %474, %475 : vector<16x64xf32>
    %c1_140 = arith.constant 1 : index
    %c0_141 = arith.constant 0 : index
    %c0_142 = arith.constant 0 : index
    %477 = vector.load %arg11[%c1_140, %c0_141, %c0_142] : memref<2x64x32xf32, #tpu.memory_space<vmem>>, vector<1x64x32xf32>
    %478 = vector.shape_cast %477 : vector<1x64x32xf32> to vector<64x32xf32>
    %cst_143 = arith.constant dense<0.000000e+00> : vector<16x32xf32>
    %479 = tpu.matmul %476, %478, %cst_143 {dimension_numbers = #tpu.dot_dimension_numbers<[1], [0], [0], [1], [0, 0, 1, 1], [], []>} : vector<16x64xf32>, vector<64x32xf32>, vector<16x32xf32> -> vector<16x32xf32>
    %480 = vector.extract_strided_slice %6 {offsets = [1, 2, 0, 0], sizes = [1, 1, 1, 32], strides = [1, 1, 1, 1]} : vector<2x9x1x32xf32> to vector<1x1x1x32xf32>
    %481 = vector.shape_cast %480 : vector<1x1x1x32xf32> to vector<1x32xf32>
    %482 = vector.broadcast %481 : vector<1x32xf32> to vector<16x32xf32>
    %483 = arith.addf %479, %482 : vector<16x32xf32>
    %484 = arith.addf %467, %483 : vector<16x32xf32>
    %485 = vector.extract_strided_slice %6 {offsets = [1, 7, 0, 0], sizes = [1, 1, 1, 32], strides = [1, 1, 1, 1]} : vector<2x9x1x32xf32> to vector<1x1x1x32xf32>
    %486 = vector.shape_cast %485 : vector<1x1x1x32xf32> to vector<1x32xf32>
    %487 = vector.extract_strided_slice %6 {offsets = [1, 8, 0, 0], sizes = [1, 1, 1, 32], strides = [1, 1, 1, 1]} : vector<2x9x1x32xf32> to vector<1x1x1x32xf32>
    %488 = vector.shape_cast %487 : vector<1x1x1x32xf32> to vector<1x32xf32>
    %cst_144 = arith.constant dense<0.000000e+00> : vector<16xf32>
    %489 = vector.multi_reduction <add>, %484, %cst_144 [1] : vector<16x32xf32> to vector<16xf32>
    %490 = vector.shape_cast %489 : vector<16xf32> to vector<16x1xf32>
    %cst_145 = arith.constant 3.200000e+01 : f32
    %491 = vector.broadcast %cst_145 : f32 to vector<16x1xf32>
    %492 = arith.divf %490, %491 : vector<16x1xf32>
    %493 = vector.broadcast %492 : vector<16x1xf32> to vector<16x32xf32>
    %494 = arith.subf %484, %493 : vector<16x32xf32>
    %495 = arith.mulf %494, %494 : vector<16x32xf32>
    %cst_146 = arith.constant dense<0.000000e+00> : vector<16xf32>
    %496 = vector.multi_reduction <add>, %495, %cst_146 [1] : vector<16x32xf32> to vector<16xf32>
    %497 = vector.shape_cast %496 : vector<16xf32> to vector<16x1xf32>
    %cst_147 = arith.constant 3.200000e+01 : f32
    %498 = vector.broadcast %cst_147 : f32 to vector<16x1xf32>
    %499 = arith.divf %497, %498 : vector<16x1xf32>
    %500 = vector.broadcast %492 : vector<16x1xf32> to vector<16x32xf32>
    %501 = arith.subf %484, %500 : vector<16x32xf32>
    %cst_148 = arith.constant 9.99999974E-6 : f32
    %502 = vector.broadcast %cst_148 : f32 to vector<16x1xf32>
    %503 = arith.addf %499, %502 : vector<16x1xf32>
    %504 = math.rsqrt %503 : vector<16x1xf32>
    %505 = vector.broadcast %504 : vector<16x1xf32> to vector<16x32xf32>
    %506 = arith.mulf %501, %505 : vector<16x32xf32>
    %507 = vector.broadcast %486 : vector<1x32xf32> to vector<16x32xf32>
    %508 = arith.mulf %506, %507 : vector<16x32xf32>
    %509 = vector.broadcast %488 : vector<1x32xf32> to vector<16x32xf32>
    %510 = arith.addf %508, %509 : vector<16x32xf32>
    %c0_149 = arith.constant 0 : index
    %c0_150 = arith.constant 0 : index
    %c0_151 = arith.constant 0 : index
    %511 = vector.load %arg13[%c0_149, %c0_150, %c0_151] : memref<2x1x32xf32, #tpu.memory_space<vmem>>, vector<1x1x32xf32>
    %512 = vector.shape_cast %511 : vector<1x1x32xf32> to vector<1x32xf32>
    %c1_152 = arith.constant 1 : index
    %c0_153 = arith.constant 0 : index
    %c0_154 = arith.constant 0 : index
    %513 = vector.load %arg13[%c1_152, %c0_153, %c0_154] : memref<2x1x32xf32, #tpu.memory_space<vmem>>, vector<1x1x32xf32>
    %514 = vector.shape_cast %513 : vector<1x1x32xf32> to vector<1x32xf32>
    %cst_155 = arith.constant dense<0.000000e+00> : vector<16xf32>
    %515 = vector.multi_reduction <add>, %510, %cst_155 [1] : vector<16x32xf32> to vector<16xf32>
    %516 = vector.shape_cast %515 : vector<16xf32> to vector<16x1xf32>
    %cst_156 = arith.constant 3.200000e+01 : f32
    %517 = vector.broadcast %cst_156 : f32 to vector<16x1xf32>
    %518 = arith.divf %516, %517 : vector<16x1xf32>
    %519 = vector.broadcast %518 : vector<16x1xf32> to vector<16x32xf32>
    %520 = arith.subf %510, %519 : vector<16x32xf32>
    %521 = arith.mulf %520, %520 : vector<16x32xf32>
    %cst_157 = arith.constant dense<0.000000e+00> : vector<16xf32>
    %522 = vector.multi_reduction <add>, %521, %cst_157 [1] : vector<16x32xf32> to vector<16xf32>
    %523 = vector.shape_cast %522 : vector<16xf32> to vector<16x1xf32>
    %cst_158 = arith.constant 3.200000e+01 : f32
    %524 = vector.broadcast %cst_158 : f32 to vector<16x1xf32>
    %525 = arith.divf %523, %524 : vector<16x1xf32>
    %526 = vector.broadcast %518 : vector<16x1xf32> to vector<16x32xf32>
    %527 = arith.subf %510, %526 : vector<16x32xf32>
    %cst_159 = arith.constant 9.99999974E-6 : f32
    %528 = vector.broadcast %cst_159 : f32 to vector<16x1xf32>
    %529 = arith.addf %525, %528 : vector<16x1xf32>
    %530 = math.rsqrt %529 : vector<16x1xf32>
    %531 = vector.broadcast %530 : vector<16x1xf32> to vector<16x32xf32>
    %532 = arith.mulf %527, %531 : vector<16x32xf32>
    %533 = vector.broadcast %512 : vector<1x32xf32> to vector<16x32xf32>
    %534 = arith.mulf %532, %533 : vector<16x32xf32>
    %535 = vector.broadcast %514 : vector<1x32xf32> to vector<16x32xf32>
    %536 = arith.addf %534, %535 : vector<16x32xf32>
    %c0_160 = arith.constant 0 : index
    %c0_161 = arith.constant 0 : index
    %537 = vector.load %arg14[%c0_160, %c0_161] : memref<16x32xf32, #tpu.memory_space<vmem>>, vector<16x32xf32>
    tpu.vector_store %arg14[%c0_160, %c0_161], %536 {strides = array<i32>} : memref<16x32xf32, #tpu.memory_space<vmem>>, vector<16x32xf32>,
    return
  }
}

</mosaic_0001>

<llo_original>
// kernel: tpu_custom_call.1
$region0: #{tpu_custom_call.1}
  #allocation0 [shape = 'u32[]', space=smem, size = 0x4, offset = 0x4, fixed_abs, tag = 'smem constant byte address 0x4 - core index']
  #allocation1 [shape = 'u32[72,128]{1,0:T(1,128)}', space=vmem, size = 0x9000, scoped, tag = 'internal scratch']
  %s0 = inlined_call_operand.hbm [shape: f32[16,32], index: 0, kind: input, shape index: {}]
  %s1 = inlined_call_operand.hbm [shape: f32[16,32], index: 1, kind: input, shape index: {}]
  %s2 = inlined_call_operand.hbm [shape: f32[32,32], index: 2, kind: input, shape index: {}]
  %s3 = inlined_call_operand.hbm [shape: f32[32,32], index: 3, kind: input, shape index: {}]
  %s4 = inlined_call_operand.hbm [shape: f32[16,16], index: 4, kind: input, shape index: {}]
  %s5 = inlined_call_operand.hbm [shape: f32[16,32], index: 5, kind: input, shape index: {}]
  %s6 = inlined_call_operand.vmem [shape: f32[2,2,32,96], index: 6, kind: input, shape index: {}]
  %s7 = inlined_call_operand.vmem [shape: f32[2,2,1,96], index: 7, kind: input, shape index: {}]
  %s8 = inlined_call_operand.hbm [shape: f32[2,2,32,32], index: 8, kind: input, shape index: {}]
  %s9 = inlined_call_operand.vmem [shape: f32[2,32,64], index: 9, kind: input, shape index: {}]
  %s10 = inlined_call_operand.vmem [shape: f32[2,1,64], index: 10, kind: input, shape index: {}]
  %s11 = inlined_call_operand.vmem [shape: f32[2,64,32], index: 11, kind: input, shape index: {}]
  %s12 = inlined_call_operand.hbm [shape: f32[2,9,1,32], index: 12, kind: input, shape index: {}]
  %s13 = inlined_call_operand.vmem [shape: f32[2,1,32], index: 13, kind: input, shape index: {}]
  %s14 = inlined_call_operand.hbm [shape: f32[16,32], index: 14, kind: output, shape index: {}]
  %s15 = sld [smem:[#allocation0]]
  $region98: #{tpu_custom_call.1} parent=0
    _
  %s17 = ssub.s32 1, %s15
  %s18 = scalar_select 0, %s17, %s15
  $region1: #{tpu_custom_call.1} parent=0
    #allocation2 [shape = 'u8[8192]{0}', space=vmem, size = 0x2000, scoped, tag = 'input window, operand 0, single buffered']
    #allocation3 [shape = 's32[1]{0}', space=sflag, size = 0x4, scoped, tag = 'scoped memory for tpu_custom_call.1']
    #allocation4 [shape = 's32[1]{0}', space=sflag, size = 0x4, scoped, tag = 'scoped memory for tpu_custom_call.1']
    #allocation5 [shape = 'u8[8192]{0}', space=vmem, size = 0x2000, scoped, tag = 'input window, operand 1, single buffered']
    #allocation6 [shape = 's32[1]{0}', space=sflag, size = 0x4, scoped, tag = 'scoped memory for tpu_custom_call.1']
    #allocation7 [shape = 'u8[16384]{0}', space=vmem, size = 0x4000, scoped, tag = 'input window, operand 2, single buffered']
    #allocation8 [shape = 'u8[16384]{0}', space=vmem, size = 0x4000, scoped, tag = 'input window, operand 3, single buffered']
    #allocation9 [shape = 's32[1]{0}', space=sflag, size = 0x4, scoped, tag = 'scoped memory for tpu_custom_call.1']
    #allocation10 [shape = 'u8[8192]{0}', space=vmem, size = 0x2000, scoped, tag = 'input window, operand 4, single buffered']
    #allocation11 [shape = 'u8[8192]{0}', space=vmem, size = 0x2000, scoped, tag = 'input window, operand 5, single buffered']
    #allocation12 [shape = 's32[1]{0}', space=sflag, size = 0x4, scoped, tag = 'scoped memory for tpu_custom_call.1']
    #allocation13 [shape = 'u8[65536]{0}', space=vmem, size = 0x10000, scoped, tag = 'input window, operand 8, single buffered']
    #allocation14 [shape = 'u8[9216]{0}', space=vmem, size = 0x2400, scoped, tag = 'input window, operand 12, single buffered']
    #allocation15 [shape = 's32[1]{0}', space=sflag, size = 0x4, scoped, tag = 'scoped memory for tpu_custom_call.1']
    #allocation16 [shape = 'u8[8192]{0}', space=vmem, size = 0x2000, scoped, tag = 'output window, operand 0, single buffered']
    %19 = vsyncpa [#allocation3], 0
    %20 = vsyncpa [#allocation6], 0
    %21 = vsyncpa [#allocation9], 0
    %22 = vsyncpa [#allocation12], 0
    %23 = vsyncpa [#allocation15], 0
    %24 = vsyncpa [#allocation4], 0
    // Predicated region
    $region2: #{tpu_custom_call.1} parent=1 // pred_check
      _
    $region3: #{tpu_custom_call.1} parent=1 // pred_check_branch
      %26 = sbr.rel (0) target = $region5
    $region4: #{tpu_custom_call.1} parent=1 // pred_region
      %28 = vsyncadd [#allocation3], 0
      %s29 = sshll.u32 %s0, 4
      %s30 = int_to_ptr.hbm [resolvable:$true] %s29
      %s31 = sshll.u32 [#allocation2], 4
      %s32 = int_to_ptr.vmem [resolvable:$true] %s31
      %37 = dma.hbm_to_vmem [thread:$0]  %s30, 256, %s32, [#allocation3], 128, 128, 8
    $region5: #{tpu_custom_call.1} parent=1 // pred_fallthru
      _
    // Predicated region
    $region6: #{tpu_custom_call.1} parent=1 // pred_check
      _
    $region7: #{tpu_custom_call.1} parent=1 // pred_check_branch
      %39 = sbr.rel (0) target = $region9
    $region8: #{tpu_custom_call.1} parent=1 // pred_region
      %41 = vsyncadd [#allocation6], 0
      %s42 = sshll.u32 %s1, 4
      %s43 = int_to_ptr.hbm [resolvable:$true] %s42
      %s44 = sshll.u32 [#allocation5], 4
      %s45 = int_to_ptr.vmem [resolvable:$true] %s44
      %50 = dma.hbm_to_vmem [thread:$0]  %s43, 256, %s45, [#allocation6], 128, 128, 8
    $region9: #{tpu_custom_call.1} parent=1 // pred_fallthru
      _
    // Predicated region
    $region10: #{tpu_custom_call.1} parent=1 // pred_check
      _
    $region11: #{tpu_custom_call.1} parent=1 // pred_check_branch
      %52 = sbr.rel (0) target = $region13
    $region12: #{tpu_custom_call.1} parent=1 // pred_region
      %54 = vsyncadd [#allocation6], 0
      %s55 = sshll.u32 %s2, 4
      %s56 = int_to_ptr.hbm [resolvable:$true] %s55
      %s57 = sshll.u32 [#allocation7], 4
      %s58 = int_to_ptr.vmem [resolvable:$true] %s57
      %63 = dma.hbm_to_vmem [thread:$0]  %s56, 512, %s58, [#allocation6], 128, 128, 8
    $region13: #{tpu_custom_call.1} parent=1 // pred_fallthru
      _
    // Predicated region
    $region14: #{tpu_custom_call.1} parent=1 // pred_check
      _
    $region15: #{tpu_custom_call.1} parent=1 // pred_check_branch
      %65 = sbr.rel (0) target = $region17
    $region16: #{tpu_custom_call.1} parent=1 // pred_region
      %67 = vsyncadd [#allocation9], 0
      %s68 = sshll.u32 %s3, 4
      %s69 = int_to_ptr.hbm [resolvable:$true] %s68
      %s70 = sshll.u32 [#allocation8], 4
      %s71 = int_to_ptr.vmem [resolvable:$true] %s70
      %76 = dma.hbm_to_vmem [thread:$0]  %s69, 512, %s71, [#allocation9], 128, 128, 8
    $region17: #{tpu_custom_call.1} parent=1 // pred_fallthru
      _
    // Predicated region
    $region18: #{tpu_custom_call.1} parent=1 // pred_check
      _
    $region19: #{tpu_custom_call.1} parent=1 // pred_check_branch
      %78 = sbr.rel (0) target = $region21
    $region20: #{tpu_custom_call.1} parent=1 // pred_region
      %80 = vsyncadd [#allocation9], 0
      %s81 = sshll.u32 %s4, 4
      %s82 = int_to_ptr.hbm [resolvable:$true] %s81
      %s83 = sshll.u32 [#allocation10], 4
      %s84 = int_to_ptr.vmem [resolvable:$true] %s83
      %89 = dma.hbm_to_vmem [thread:$0]  %s82, 256, %s84, [#allocation9], 128, 128, 8
    $region21: #{tpu_custom_call.1} parent=1 // pred_fallthru
      _
    // Predicated region
    $region22: #{tpu_custom_call.1} parent=1 // pred_check
      _
    $region23: #{tpu_custom_call.1} parent=1 // pred_check_branch
      %91 = sbr.rel (0) target = $region25
    $region24: #{tpu_custom_call.1} parent=1 // pred_region
      %93 = vsyncadd [#allocation12], 0
      %s94 = sshll.u32 %s5, 4
      %s95 = int_to_ptr.hbm [resolvable:$true] %s94
      %s96 = sshll.u32 [#allocation11], 4
      %s97 = int_to_ptr.vmem [resolvable:$true] %s96
      %102 = dma.hbm_to_vmem [thread:$0]  %s95, 256, %s97, [#allocation12], 128, 128, 8
    $region25: #{tpu_custom_call.1} parent=1 // pred_fallthru
      _
    // Predicated region
    $region26: #{tpu_custom_call.1} parent=1 // pred_check
      _
    $region27: #{tpu_custom_call.1} parent=1 // pred_check_branch
      %104 = sbr.rel (0) target = $region29
    $region28: #{tpu_custom_call.1} parent=1 // pred_region
      _
    $region29: #{tpu_custom_call.1} parent=1 // pred_fallthru
      _
    // Predicated region
    $region30: #{tpu_custom_call.1} parent=1 // pred_check
      _
    $region31: #{tpu_custom_call.1} parent=1 // pred_check_branch
      %106 = sbr.rel (0) target = $region33
    $region32: #{tpu_custom_call.1} parent=1 // pred_region
      _
    $region33: #{tpu_custom_call.1} parent=1 // pred_fallthru
      _
    // Predicated region
    $region34: #{tpu_custom_call.1} parent=1 // pred_check
      _
    $region35: #{tpu_custom_call.1} parent=1 // pred_check_branch
      %108 = sbr.rel (0) target = $region37
    $region36: #{tpu_custom_call.1} parent=1 // pred_region
      %110 = vsyncadd [#allocation12], 0
      %s111 = sshll.u32 %s8, 4
      %s112 = int_to_ptr.hbm [resolvable:$true] %s111
      %s113 = sshll.u32 [#allocation13], 4
      %s114 = int_to_ptr.vmem [resolvable:$true] %s113
      %119 = dma.hbm_to_vmem [thread:$0]  %s112, 2048, %s114, [#allocation12], 128, 128, 8
    $region37: #{tpu_custom_call.1} parent=1 // pred_fallthru
      _
    // Predicated region
    $region38: #{tpu_custom_call.1} parent=1 // pred_check
      _
    $region39: #{tpu_custom_call.1} parent=1 // pred_check_branch
      %121 = sbr.rel (0) target = $region41
    $region40: #{tpu_custom_call.1} parent=1 // pred_region
      _
    $region41: #{tpu_custom_call.1} parent=1 // pred_fallthru
      _
    // Predicated region
    $region42: #{tpu_custom_call.1} parent=1 // pred_check
      _
    $region43: #{tpu_custom_call.1} parent=1 // pred_check_branch
      %123 = sbr.rel (0) target = $region45
    $region44: #{tpu_custom_call.1} parent=1 // pred_region
      _
    $region45: #{tpu_custom_call.1} parent=1 // pred_fallthru
      _
    // Predicated region
    $region46: #{tpu_custom_call.1} parent=1 // pred_check
      _
    $region47: #{tpu_custom_call.1} parent=1 // pred_check_branch
      %125 = sbr.rel (0) target = $region49
    $region48: #{tpu_custom_call.1} parent=1 // pred_region
      _
    $region49: #{tpu_custom_call.1} parent=1 // pred_fallthru
      _
    // Predicated region
    $region50: #{tpu_custom_call.1} parent=1 // pred_check
      _
    $region51: #{tpu_custom_call.1} parent=1 // pred_check_branch
      %127 = sbr.rel (0) target = $region53
    $region52: #{tpu_custom_call.1} parent=1 // pred_region
      %129 = vsyncadd [#allocation15], 0
      %s130 = sshll.u32 %s12, 4
      %s131 = int_to_ptr.hbm [resolvable:$true] %s130
      %s132 = sshll.u32 [#allocation14], 4
      %s133 = int_to_ptr.vmem [resolvable:$true] %s132
      %138 = dma.hbm_to_vmem [thread:$0]  %s131, 288, %s133, [#allocation15], 16, 16, 1
    $region53: #{tpu_custom_call.1} parent=1 // pred_fallthru
      _
    // Predicated region
    $region54: #{tpu_custom_call.1} parent=1 // pred_check
      _
    $region55: #{tpu_custom_call.1} parent=1 // pred_check_branch
      %140 = sbr.rel (0) target = $region57
    $region56: #{tpu_custom_call.1} parent=1 // pred_region
      _
    $region57: #{tpu_custom_call.1} parent=1 // pred_fallthru
      _
    // Predicated region
    $region58: #{tpu_custom_call.1} parent=1 // pred_check
      _
    $region59: #{tpu_custom_call.1} parent=1 // pred_check_branch
      %142 = sbr.rel (0) target = $region61
    $region60: #{tpu_custom_call.1} parent=1 // pred_region
      %144 = dma.done [#allocation3], 256
    $region61: #{tpu_custom_call.1} parent=1 // pred_fallthru
      _
    // Predicated region
    $region62: #{tpu_custom_call.1} parent=1 // pred_check
      _
    $region63: #{tpu_custom_call.1} parent=1 // pred_check_branch
      %146 = sbr.rel (0) target = $region65
    $region64: #{tpu_custom_call.1} parent=1 // pred_region
      %148 = dma.done [#allocation6], 256
    $region65: #{tpu_custom_call.1} parent=1 // pred_fallthru
      _
    // Predicated region
    $region66: #{tpu_custom_call.1} parent=1 // pred_check
      _
    $region67: #{tpu_custom_call.1} parent=1 // pred_check_branch
      %150 = sbr.rel (0) target = $region69
    $region68: #{tpu_custom_call.1} parent=1 // pred_region
      %152 = dma.done [#allocation6], 512
    $region69: #{tpu_custom_call.1} parent=1 // pred_fallthru
      _
    // Predicated region
    $region70: #{tpu_custom_call.1} parent=1 // pred_check
      _
    $region71: #{tpu_custom_call.1} parent=1 // pred_check_branch
      %154 = sbr.rel (0) target = $region73
    $region72: #{tpu_custom_call.1} parent=1 // pred_region
      %156 = dma.done [#allocation9], 512
    $region73: #{tpu_custom_call.1} parent=1 // pred_fallthru
      _
    // Predicated region
    $region74: #{tpu_custom_call.1} parent=1 // pred_check
      _
    $region75: #{tpu_custom_call.1} parent=1 // pred_check_branch
      %158 = sbr.rel (0) target = $region77
    $region76: #{tpu_custom_call.1} parent=1 // pred_region
      %160 = dma.done [#allocation9], 256
    $region77: #{tpu_custom_call.1} parent=1 // pred_fallthru
      _
    // Predicated region
    $region78: #{tpu_custom_call.1} parent=1 // pred_check
      _
    $region79: #{tpu_custom_call.1} parent=1 // pred_check_branch
      %162 = sbr.rel (0) target = $region81
    $region80: #{tpu_custom_call.1} parent=1 // pred_region
      %164 = dma.done [#allocation12], 256
    $region81: #{tpu_custom_call.1} parent=1 // pred_fallthru
      _
    // Predicated region
    $region82: #{tpu_custom_call.1} parent=1 // pred_check
      _
    $region83: #{tpu_custom_call.1} parent=1 // pred_check_branch
      %166 = sbr.rel (0) target = $region85
    $region84: #{tpu_custom_call.1} parent=1 // pred_region
      %168 = dma.done [#allocation12], 2048
    $region85: #{tpu_custom_call.1} parent=1 // pred_fallthru
      _
    // Predicated region
    $region86: #{tpu_custom_call.1} parent=1 // pred_check
      _
    $region87: #{tpu_custom_call.1} parent=1 // pred_check_branch
      %170 = sbr.rel (0) target = $region89
    $region88: #{tpu_custom_call.1} parent=1 // pred_region
      %172 = dma.done [#allocation15], 288
    $region89: #{tpu_custom_call.1} parent=1 // pred_fallthru
      _
    %v173 = vld [vmem:[#allocation2] sm:$0xff]
    %v174 = vld [vmem:[#allocation2 + $0x8] sm:$0xff]
    %v175 = vld [vmem:[#allocation5] sm:$0xff]
    %v176 = vld [vmem:[#allocation5 + $0x8] sm:$0xff]
    %v177 = vld [vmem:[#allocation7] sm:$0xff]
    %v178 = vld [vmem:[#allocation7 + $0x8] sm:$0xff]
    %v179 = vld [vmem:[#allocation7 + $0x10] sm:$0xff]
    %v180 = vld [vmem:[#allocation7 + $0x18] sm:$0xff]
    %v181 = vld [vmem:[#allocation8] sm:$0xff]
    %v182 = vld [vmem:[#allocation8 + $0x8] sm:$0xff]
    %v183 = vld [vmem:[#allocation8 + $0x10] sm:$0xff]
    %v184 = vld [vmem:[#allocation8 + $0x18] sm:$0xff]
    %v185 = vld [vmem:[#allocation10] sm:$0xff]
    %v186 = vld [vmem:[#allocation10 + $0x8] sm:$0xff]
    %v187 = vld [vmem:[#allocation11] sm:$0xff]
    %v188 = vld [vmem:[#allocation11 + $0x8] sm:$0xff]
    %v189 = vld [vmem:[#allocation14] sm:$0x1]
    %v190 = vld [vmem:[#allocation14 + $0x1] sm:$0x1]
    %v191 = vld [vmem:[#allocation14 + $0x2] sm:$0x1]
    %v192 = vld [vmem:[#allocation14 + $0x3] sm:$0x1]
    %v193 = vld [vmem:[#allocation14 + $0x4] sm:$0x1]
    %v194 = vld [vmem:[#allocation14 + $0x5] sm:$0x1]
    %v195 = vld [vmem:[#allocation14 + $0x6] sm:$0x1]
    %v196 = vld [vmem:[#allocation14 + $0x7] sm:$0x1]
    %v197 = vld [vmem:[#allocation14 + $0x8] sm:$0x1]
    %v198 = vld [vmem:[#allocation14 + $0x9] sm:$0x1]
    %v199 = vld [vmem:[#allocation14 + $0xa] sm:$0x1]
    %v200 = vld [vmem:[#allocation14 + $0xb] sm:$0x1]
    %v201 = vld [vmem:[#allocation14 + $0xc] sm:$0x1]
    %v202 = vld [vmem:[#allocation14 + $0xd] sm:$0x1]
    %v203 = vld [vmem:[#allocation14 + $0xe] sm:$0x1]
    %v204 = vld [vmem:[#allocation14 + $0xf] sm:$0x1]
    %v205 = vld [vmem:[#allocation14 + $0x10] sm:$0x1]
    %v206 = vld [vmem:[#allocation14 + $0x11] sm:$0x1]
    %v207 = vld [vmem:[%s6] sm:$0xff]
    %v208 = vld [vmem:[%s6 + $0x8] sm:$0xff]
    %v209 = vld [vmem:[%s6 + $0x10] sm:$0xff]
    %v210 = vld [vmem:[%s6 + $0x18] sm:$0xff]
    %v211 = vld [vmem:[%s7] sm:$0x1]
    %v212 = vadd.f32 %v173, %v175
    %v213 = vadd.f32 %v174, %v176
    %v215 = vperm.slane %v211, 0
    %vm217 = vcmask 261120
    %v219 = vsel %vm217, %v212, 0
    %v222 = vsel %vm217, %v213, 0
    %224 = vmatpush.msra.mxu0 0.0
    %225 = vmatpush.msra.mxu0 0.0
    %226 = vmatpush.msra.mxu0 0.0
    %227 = vmatpush.msra.mxu0 0.0
    %228 = vmatpush.msra.mxu0 0.0
    %229 = vmatpush.msra.mxu0 0.0
    %230 = vmatpush.msra.mxu0 0.0
    %231 = vmatpush.msra.mxu0 0.0
    %232 = vmatpush.msra.mxu0 0.0
    %233 = vmatpush.msra.mxu0 0.0
    %234 = vmatpush.msra.mxu0 0.0
    %235 = vmatpush.msra.mxu0 0.0
    %236 = vmatpush.msra.mxu0 %v210
    %237 = vmatpush.msra.mxu0 %v209
    %238 = vmatpush.msra.mxu0 %v208
    %239 = vmatpush.msra.mxu0 %v207
    %240 = vmatmul.f32.gmra.mxu0 %v219
    %v241 = vpop.f32.mrf.mxu0
    %v242 = vadd.f32 %v215, %v241
    %243 = vmatmul.f32.gmra.mxu0 %v222
    %v244 = vpop.f32.mrf.mxu0
    %v245 = vadd.f32 %v215, %v244
    %246 = vdwg.mxu0
    %251 = vrot.lane.b32.xlu0 %v207, 64
    %v252 = vpop.permute.xlu0 %251
    %253 = vrot.lane.b32.xlu0 %v208, 64
    %v254 = vpop.permute.xlu0 %253
    %255 = vrot.lane.b32.xlu0 %v209, 64
    %v256 = vpop.permute.xlu0 %255
    %257 = vrot.lane.b32.xlu0 %v210, 64
    %v258 = vpop.permute.xlu0 %257
    %263 = vrot.lane.b32.xlu0 %v215, 64
    %v264 = vpop.permute.xlu0 %263
    %v267 = vsel %vm217, %v173, 0
    %v270 = vsel %vm217, %v174, 0
    %272 = vmatpush.msra.mxu0 0.0
    %273 = vmatpush.msra.mxu0 0.0
    %274 = vmatpush.msra.mxu0 0.0
    %275 = vmatpush.msra.mxu0 0.0
    %276 = vmatpush.msra.mxu0 0.0
    %277 = vmatpush.msra.mxu0 0.0
    %278 = vmatpush.msra.mxu0 0.0
    %279 = vmatpush.msra.mxu0 0.0
    %280 = vmatpush.msra.mxu0 0.0
    %281 = vmatpush.msra.mxu0 0.0
    %282 = vmatpush.msra.mxu0 0.0
    %283 = vmatpush.msra.mxu0 0.0
    %284 = vmatpush.msra.mxu0 %v258
    %285 = vmatpush.msra.mxu0 %v256
    %286 = vmatpush.msra.mxu0 %v254
    %287 = vmatpush.msra.mxu0 %v252
    %288 = vmatmul.f32.gmra.mxu0 %v267
    %v289 = vpop.f32.mrf.mxu0
    %v290 = vadd.f32 %v264, %v289
    %291 = vmatmul.f32.gmra.mxu0 %v270
    %v292 = vpop.f32.mrf.mxu0
    %v293 = vadd.f32 %v264, %v292
    %294 = vdwg.mxu0
    %v295 = vmul.f32 %v242, 0.35355338
    %v296 = vmul.f32 %v245, 0.35355338
    %299 = vrot.lane.b32.xlu0 %v295, 120
    %v300 = vpop.permute.xlu0 %299
    %301 = vrot.lane.b32.xlu0 %v296, 120
    %v302 = vpop.permute.xlu0 %301
    %303 = vrot.lane.b32.xlu0 %v295, 112
    %v304 = vpop.permute.xlu0 %303
    %305 = vrot.lane.b32.xlu0 %v296, 112
    %v306 = vpop.permute.xlu0 %305
    %307 = vrot.lane.b32.xlu0 %v295, 104
    %v308 = vpop.permute.xlu0 %307
    %309 = vrot.lane.b32.xlu0 %v296, 104
    %v310 = vpop.permute.xlu0 %309
    %313 = vrot.lane.b32.xlu0 %v242, 120
    %v314 = vpop.permute.xlu0 %313
    %315 = vrot.lane.b32.xlu0 %v245, 120
    %v316 = vpop.permute.xlu0 %315
    %317 = vrot.lane.b32.xlu0 %v242, 112
    %v318 = vpop.permute.xlu0 %317
    %319 = vrot.lane.b32.xlu0 %v245, 112
    %v320 = vpop.permute.xlu0 %319
    %321 = vrot.lane.b32.xlu0 %v242, 104
    %v322 = vpop.permute.xlu0 %321
    %323 = vrot.lane.b32.xlu0 %v245, 104
    %v324 = vpop.permute.xlu0 %323
    %327 = vrot.lane.b32.xlu0 %v290, 120
    %v328 = vpop.permute.xlu0 %327
    %329 = vrot.lane.b32.xlu0 %v293, 120
    %v330 = vpop.permute.xlu0 %329
    %333 = vrot.lane.b32.xlu0 %v290, 112
    %v334 = vpop.permute.xlu0 %333
    %335 = vrot.lane.b32.xlu0 %v293, 112
    %v336 = vpop.permute.xlu0 %335
    %339 = vrot.lane.b32.xlu0 %v290, 104
    %v340 = vpop.permute.xlu0 %339
    %341 = vrot.lane.b32.xlu0 %v293, 104
    %v342 = vpop.permute.xlu0 %341
    %345 = vrot.lane.b32.xlu0 %v242, 96
    %v346 = vpop.permute.xlu0 %345
    %347 = vrot.lane.b32.xlu0 %v245, 96
    %v348 = vpop.permute.xlu0 %347
    %vm349 = vcmask 64512
    %v350 = vsel %vm349, %v295, 0
    %v352 = vsel %vm349, %v296, 0
    %v354 = vsel %vm349, %v346, 0
    %v356 = vsel %vm349, %v348, 0
    %358 = vmatpush.xpose.msra.mxu0 0.0
    %359 = vmatpush.xpose.msra.mxu0 0.0
    %360 = vmatpush.xpose.msra.mxu0 0.0
    %361 = vmatpush.xpose.msra.mxu0 0.0
    %362 = vmatpush.xpose.msra.mxu0 0.0
    %363 = vmatpush.xpose.msra.mxu0 0.0
    %364 = vmatpush.xpose.msra.mxu0 0.0
    %365 = vmatpush.xpose.msra.mxu0 0.0
    %366 = vmatpush.xpose.msra.mxu0 0.0
    %367 = vmatpush.xpose.msra.mxu0 0.0
    %368 = vmatpush.xpose.msra.mxu0 0.0
    %369 = vmatpush.xpose.msra.mxu0 0.0
    %370 = vmatpush.xpose.msra.mxu0 0.0
    %371 = vmatpush.xpose.msra.mxu0 0.0
    %372 = vmatpush.xpose.msra.mxu0 %v356
    %373 = vmatpush.xpose.msra.mxu0 %v354
    %374 = vmatmul.f32.gmra.mxu0 %v350
    %v375 = vpop.f32.mrf.mxu0
    %v376 = vadd.f32 %v185, %v375
    %377 = vmatmul.f32.gmra.mxu0 %v352
    %v378 = vpop.f32.mrf.mxu0
    %v379 = vadd.f32 %v186, %v378
    %380 = vdwg.mxu0
    %381 = vrot.lane.b32.xlu0 %v314, 96
    %v382 = vpop.permute.xlu0 %381
    %383 = vrot.lane.b32.xlu0 %v316, 96
    %v384 = vpop.permute.xlu0 %383
    %v385 = vsel %vm349, %v300, 0
    %v387 = vsel %vm349, %v302, 0
    %v389 = vsel %vm349, %v382, 0
    %v391 = vsel %vm349, %v384, 0
    %393 = vmatpush.xpose.msra.mxu0 0.0
    %394 = vmatpush.xpose.msra.mxu0 0.0
    %395 = vmatpush.xpose.msra.mxu0 0.0
    %396 = vmatpush.xpose.msra.mxu0 0.0
    %397 = vmatpush.xpose.msra.mxu0 0.0
    %398 = vmatpush.xpose.msra.mxu0 0.0
    %399 = vmatpush.xpose.msra.mxu0 0.0
    %400 = vmatpush.xpose.msra.mxu0 0.0
    %401 = vmatpush.xpose.msra.mxu0 0.0
    %402 = vmatpush.xpose.msra.mxu0 0.0
    %403 = vmatpush.xpose.msra.mxu0 0.0
    %404 = vmatpush.xpose.msra.mxu0 0.0
    %405 = vmatpush.xpose.msra.mxu0 0.0
    %406 = vmatpush.xpose.msra.mxu0 0.0
    %407 = vmatpush.xpose.msra.mxu0 %v391
    %408 = vmatpush.xpose.msra.mxu0 %v389
    %409 = vmatmul.f32.gmra.mxu0 %v385
    %v410 = vpop.f32.mrf.mxu0
    %v411 = vadd.f32 %v185, %v410
    %412 = vmatmul.f32.gmra.mxu0 %v387
    %v413 = vpop.f32.mrf.mxu0
    %v414 = vadd.f32 %v186, %v413
    %415 = vdwg.mxu0
    %416 = vrot.lane.b32.xlu0 %v318, 96
    %v417 = vpop.permute.xlu0 %416
    %418 = vrot.lane.b32.xlu0 %v320, 96
    %v419 = vpop.permute.xlu0 %418
    %v420 = vsel %vm349, %v304, 0
    %v422 = vsel %vm349, %v306, 0
    %v424 = vsel %vm349, %v417, 0
    %v426 = vsel %vm349, %v419, 0
    %428 = vmatpush.xpose.msra.mxu0 0.0
    %429 = vmatpush.xpose.msra.mxu0 0.0
    %430 = vmatpush.xpose.msra.mxu0 0.0
    %431 = vmatpush.xpose.msra.mxu0 0.0
    %432 = vmatpush.xpose.msra.mxu0 0.0
    %433 = vmatpush.xpose.msra.mxu0 0.0
    %434 = vmatpush.xpose.msra.mxu0 0.0
    %435 = vmatpush.xpose.msra.mxu0 0.0
    %436 = vmatpush.xpose.msra.mxu0 0.0
    %437 = vmatpush.xpose.msra.mxu0 0.0
    %438 = vmatpush.xpose.msra.mxu0 0.0
    %439 = vmatpush.xpose.msra.mxu0 0.0
    %440 = vmatpush.xpose.msra.mxu0 0.0
    %441 = vmatpush.xpose.msra.mxu0 0.0
    %442 = vmatpush.xpose.msra.mxu0 %v426
    %443 = vmatpush.xpose.msra.mxu0 %v424
    %444 = vmatmul.f32.gmra.mxu0 %v420
    %v445 = vpop.f32.mrf.mxu0
    %v446 = vadd.f32 %v185, %v445
    %447 = vmatmul.f32.gmra.mxu0 %v422
    %v448 = vpop.f32.mrf.mxu0
    %v449 = vadd.f32 %v186, %v448
    %450 = vdwg.mxu0
    %451 = vrot.lane.b32.xlu0 %v322, 96
    %v452 = vpop.permute.xlu0 %451
    %453 = vrot.lane.b32.xlu0 %v324, 96
    %v454 = vpop.permute.xlu0 %453
    %v455 = vsel %vm349, %v308, 0
    %v457 = vsel %vm349, %v310, 0
    %v459 = vsel %vm349, %v452, 0
    %v461 = vsel %vm349, %v454, 0
    %463 = vmatpush.xpose.msra.mxu0 0.0
    %464 = vmatpush.xpose.msra.mxu0 0.0
    %465 = vmatpush.xpose.msra.mxu0 0.0
    %466 = vmatpush.xpose.msra.mxu0 0.0
    %467 = vmatpush.xpose.msra.mxu0 0.0
    %468 = vmatpush.xpose.msra.mxu0 0.0
    %469 = vmatpush.xpose.msra.mxu0 0.0
    %470 = vmatpush.xpose.msra.mxu0 0.0
    %471 = vmatpush.xpose.msra.mxu0 0.0
    %472 = vmatpush.xpose.msra.mxu0 0.0
    %473 = vmatpush.xpose.msra.mxu0 0.0
    %474 = vmatpush.xpose.msra.mxu0 0.0
    %475 = vmatpush.xpose.msra.mxu0 0.0
    %476 = vmatpush.xpose.msra.mxu0 0.0
    %477 = vmatpush.xpose.msra.mxu0 %v461
    %478 = vmatpush.xpose.msra.mxu0 %v459
    %479 = vmatmul.f32.gmra.mxu0 %v455
    %v480 = vpop.f32.mrf.mxu0
    %v481 = vadd.f32 %v185, %v480
    %482 = vmatmul.f32.gmra.mxu0 %v457
    %v483 = vpop.f32.mrf.mxu0
    %v484 = vadd.f32 %v186, %v483
    %485 = vdwg.mxu0
    %vm486 = vcmask 130048
    %v487 = vsel %vm486, %v376, -inf
    %488 = vmax.xlane.f32.xlu0 %v487
    %v489 = vpop.xlane.xlu0 %488
    %v490 = vsel %vm486, %v379, -inf
    %491 = vmax.xlane.f32.xlu0 %v490
    %v492 = vpop.xlane.xlu0 %491
    %v493 = vsel %vm486, %v411, -inf
    %494 = vmax.xlane.f32.xlu0 %v493
    %v495 = vpop.xlane.xlu0 %494
    %v496 = vsel %vm486, %v414, -inf
    %497 = vmax.xlane.f32.xlu0 %v496
    %v498 = vpop.xlane.xlu0 %497
    %v499 = vsel %vm486, %v446, -inf
    %500 = vmax.xlane.f32.xlu0 %v499
    %v501 = vpop.xlane.xlu0 %500
    %v502 = vsel %vm486, %v449, -inf
    %503 = vmax.xlane.f32.xlu0 %v502
    %v504 = vpop.xlane.xlu0 %503
    %v505 = vsel %vm486, %v481, -inf
    %506 = vmax.xlane.f32.xlu0 %v505
    %v507 = vpop.xlane.xlu0 %506
    %v508 = vsel %vm486, %v484, -inf
    %509 = vmax.xlane.f32.xlu0 %v508
    %v510 = vpop.xlane.xlu0 %509
    %v511 = vsub.f32 %v376, %v489
    %v512 = vsub.f32 %v379, %v492
    %v513 = vsub.f32 %v411, %v495
    %v514 = vsub.f32 %v414, %v498
    %v515 = vsub.f32 %v446, %v501
    %v516 = vsub.f32 %v449, %v504
    %v517 = vsub.f32 %v481, %v507
    %v518 = vsub.f32 %v484, %v510
    %v519 = vmul.f32 %v511, 1.442695
    %v520 = vpow.pop %v519
    %v521 = vmul.f32 %v512, 1.442695
    %v522 = vpow.pop %v521
    %v523 = vmul.f32 %v513, 1.442695
    %v524 = vpow.pop %v523
    %v525 = vmul.f32 %v514, 1.442695
    %v526 = vpow.pop %v525
    %v527 = vmul.f32 %v515, 1.442695
    %v528 = vpow.pop %v527
    %v529 = vmul.f32 %v516, 1.442695
    %v530 = vpow.pop %v529
    %v531 = vmul.f32 %v517, 1.442695
    %v532 = vpow.pop %v531
    %v533 = vmul.f32 %v518, 1.442695
    %v534 = vpow.pop %v533
    %v535 = vsel %vm486, %v520, 0.0
    %536 = vadd.xlane.f32.xlu0 %v535
    %v537 = vpop.xlane.xlu0 %536
    %v538 = vsel %vm486, %v522, 0.0
    %539 = vadd.xlane.f32.xlu0 %v538
    %v540 = vpop.xlane.xlu0 %539
    %v541 = vsel %vm486, %v524, 0.0
    %542 = vadd.xlane.f32.xlu0 %v541
    %v543 = vpop.xlane.xlu0 %542
    %v544 = vsel %vm486, %v526, 0.0
    %545 = vadd.xlane.f32.xlu0 %v544
    %v546 = vpop.xlane.xlu0 %545
    %v547 = vsel %vm486, %v528, 0.0
    %548 = vadd.xlane.f32.xlu0 %v547
    %v549 = vpop.xlane.xlu0 %548
    %v550 = vsel %vm486, %v530, 0.0
    %551 = vadd.xlane.f32.xlu0 %v550
    %v552 = vpop.xlane.xlu0 %551
    %v553 = vsel %vm486, %v532, 0.0
    %554 = vadd.xlane.f32.xlu0 %v553
    %v555 = vpop.xlane.xlu0 %554
    %v556 = vsel %vm486, %v534, 0.0
    %557 = vadd.xlane.f32.xlu0 %v556
    %v558 = vpop.xlane.xlu0 %557
    %v559 = vrcp.pop %v537
    %v560 = vmul.f32 %v537, %v559
    %v561 = vsub.f32 1.0, %v560
    %v562 = vmul.f32 %v559, %v561
    %v563 = vadd.f32 %v559, %v562
    %vm564 = vweird.f32 %v537
    %vm565 = vweird.f32 %v559
    %vm566 = vmor %vm564, %vm565
    %v567 = vsel %vm566, %v559, %v563
    %v568 = vand.u32 2147483647, %v537
    %vm569 = vcmp.eq.f32.partialorder %v568, 8.507059e+37
    %v570 = vand.u32 %v537, 2147483648
    %v571 = vor.u32 1.1754944e-38, %v570
    %v572 = vsel %vm569, %v571, %v567
    %v573 = vmul.f32 %v520, %v572
    %v574 = vrcp.pop %v540
    %v575 = vmul.f32 %v540, %v574
    %v576 = vsub.f32 1.0, %v575
    %v577 = vmul.f32 %v574, %v576
    %v578 = vadd.f32 %v574, %v577
    %vm579 = vweird.f32 %v540
    %vm580 = vweird.f32 %v574
    %vm581 = vmor %vm579, %vm580
    %v582 = vsel %vm581, %v574, %v578
    %v583 = vand.u32 2147483647, %v540
    %vm584 = vcmp.eq.f32.partialorder %v583, 8.507059e+37
    %v585 = vand.u32 %v540, 2147483648
    %v586 = vor.u32 1.1754944e-38, %v585
    %v587 = vsel %vm584, %v586, %v582
    %v588 = vmul.f32 %v522, %v587
    %v589 = vrcp.pop %v543
    %v590 = vmul.f32 %v543, %v589
    %v591 = vsub.f32 1.0, %v590
    %v592 = vmul.f32 %v589, %v591
    %v593 = vadd.f32 %v589, %v592
    %vm594 = vweird.f32 %v543
    %vm595 = vweird.f32 %v589
    %vm596 = vmor %vm594, %vm595
    %v597 = vsel %vm596, %v589, %v593
    %v598 = vand.u32 2147483647, %v543
    %vm599 = vcmp.eq.f32.partialorder %v598, 8.507059e+37
    %v600 = vand.u32 %v543, 2147483648
    %v601 = vor.u32 1.1754944e-38, %v600
    %v602 = vsel %vm599, %v601, %v597
    %v603 = vmul.f32 %v524, %v602
    %v604 = vrcp.pop %v546
    %v605 = vmul.f32 %v546, %v604
    %v606 = vsub.f32 1.0, %v605
    %v607 = vmul.f32 %v604, %v606
    %v608 = vadd.f32 %v604, %v607
    %vm609 = vweird.f32 %v546
    %vm610 = vweird.f32 %v604
    %vm611 = vmor %vm609, %vm610
    %v612 = vsel %vm611, %v604, %v608
    %v613 = vand.u32 2147483647, %v546
    %vm614 = vcmp.eq.f32.partialorder %v613, 8.507059e+37
    %v615 = vand.u32 %v546, 2147483648
    %v616 = vor.u32 1.1754944e-38, %v615
    %v617 = vsel %vm614, %v616, %v612
    %v618 = vmul.f32 %v526, %v617
    %v619 = vrcp.pop %v549
    %v620 = vmul.f32 %v549, %v619
    %v621 = vsub.f32 1.0, %v620
    %v622 = vmul.f32 %v619, %v621
    %v623 = vadd.f32 %v619, %v622
    %vm624 = vweird.f32 %v549
    %vm625 = vweird.f32 %v619
    %vm626 = vmor %vm624, %vm625
    %v627 = vsel %vm626, %v619, %v623
    %v628 = vand.u32 2147483647, %v549
    %vm629 = vcmp.eq.f32.partialorder %v628, 8.507059e+37
    %v630 = vand.u32 %v549, 2147483648
    %v631 = vor.u32 1.1754944e-38, %v630
    %v632 = vsel %vm629, %v631, %v627
    %v633 = vmul.f32 %v528, %v632
    %v634 = vrcp.pop %v552
    %v635 = vmul.f32 %v552, %v634
    %v636 = vsub.f32 1.0, %v635
    %v637 = vmul.f32 %v634, %v636
    %v638 = vadd.f32 %v634, %v637
    %vm639 = vweird.f32 %v552
    %vm640 = vweird.f32 %v634
    %vm641 = vmor %vm639, %vm640
    %v642 = vsel %vm641, %v634, %v638
    %v643 = vand.u32 2147483647, %v552
    %vm644 = vcmp.eq.f32.partialorder %v643, 8.507059e+37
    %v645 = vand.u32 %v552, 2147483648
    %v646 = vor.u32 1.1754944e-38, %v645
    %v647 = vsel %vm644, %v646, %v642
    %v648 = vmul.f32 %v530, %v647
    %v649 = vrcp.pop %v555
    %v650 = vmul.f32 %v555, %v649
    %v651 = vsub.f32 1.0, %v650
    %v652 = vmul.f32 %v649, %v651
    %v653 = vadd.f32 %v649, %v652
    %vm654 = vweird.f32 %v555
    %vm655 = vweird.f32 %v649
    %vm656 = vmor %vm654, %vm655
    %v657 = vsel %vm656, %v649, %v653
    %v658 = vand.u32 2147483647, %v555
    %vm659 = vcmp.eq.f32.partialorder %v658, 8.507059e+37
    %v660 = vand.u32 %v555, 2147483648
    %v661 = vor.u32 1.1754944e-38, %v660
    %v662 = vsel %vm659, %v661, %v657
    %v663 = vmul.f32 %v532, %v662
    %v664 = vrcp.pop %v558
    %v665 = vmul.f32 %v558, %v664
    %v666 = vsub.f32 1.0, %v665
    %v667 = vmul.f32 %v664, %v666
    %v668 = vadd.f32 %v664, %v667
    %vm669 = vweird.f32 %v558
    %vm670 = vweird.f32 %v664
    %vm671 = vmor %vm669, %vm670
    %v672 = vsel %vm671, %v664, %v668
    %v673 = vand.u32 2147483647, %v558
    %vm674 = vcmp.eq.f32.partialorder %v673, 8.507059e+37
    %v675 = vand.u32 %v558, 2147483648
    %v676 = vor.u32 1.1754944e-38, %v675
    %v677 = vsel %vm674, %v676, %v672
    %v678 = vmul.f32 %v534, %v677
    %v680 = vsel %vm486, %v573, 0
    %v683 = vsel %vm486, %v588, 0
    %685 = vmatpush.msra.mxu0 0.0
    %686 = vmatpush.msra.mxu0 0.0
    %687 = vmatpush.msra.mxu0 0.0
    %688 = vmatpush.msra.mxu0 0.0
    %689 = vmatpush.msra.mxu0 0.0
    %690 = vmatpush.msra.mxu0 0.0
    %691 = vmatpush.msra.mxu0 0.0
    %692 = vmatpush.msra.mxu0 0.0
    %693 = vmatpush.msra.mxu0 0.0
    %694 = vmatpush.msra.mxu0 0.0
    %695 = vmatpush.msra.mxu0 0.0
    %696 = vmatpush.msra.mxu0 0.0
    %697 = vmatpush.msra.mxu0 0.0
    %698 = vmatpush.msra.mxu0 0.0
    %699 = vmatpush.msra.mxu0 %v293
    %700 = vmatpush.msra.mxu0 %v290
    %701 = vmatmul.f32.gmra.mxu0 %v680
    %v702 = vpop.f32.mrf.mxu0
    %v703 = vadd.f32 0.0, %v702
    %704 = vmatmul.f32.gmra.mxu0 %v683
    %v705 = vpop.f32.mrf.mxu0
    %v706 = vadd.f32 0.0, %v705
    %707 = vdwg.mxu0
    %v709 = vsel %vm486, %v603, 0
    %v712 = vsel %vm486, %v618, 0
    %714 = vmatpush.msra.mxu0 0.0
    %715 = vmatpush.msra.mxu0 0.0
    %716 = vmatpush.msra.mxu0 0.0
    %717 = vmatpush.msra.mxu0 0.0
    %718 = vmatpush.msra.mxu0 0.0
    %719 = vmatpush.msra.mxu0 0.0
    %720 = vmatpush.msra.mxu0 0.0
    %721 = vmatpush.msra.mxu0 0.0
    %722 = vmatpush.msra.mxu0 0.0
    %723 = vmatpush.msra.mxu0 0.0
    %724 = vmatpush.msra.mxu0 0.0
    %725 = vmatpush.msra.mxu0 0.0
    %726 = vmatpush.msra.mxu0 0.0
    %727 = vmatpush.msra.mxu0 0.0
    %728 = vmatpush.msra.mxu0 %v330
    %729 = vmatpush.msra.mxu0 %v328
    %730 = vmatmul.f32.gmra.mxu0 %v709
    %v731 = vpop.f32.mrf.mxu0
    %v732 = vadd.f32 0.0, %v731
    %733 = vmatmul.f32.gmra.mxu0 %v712
    %v734 = vpop.f32.mrf.mxu0
    %v735 = vadd.f32 0.0, %v734
    %736 = vdwg.mxu0
    %v738 = vsel %vm486, %v633, 0
    %v741 = vsel %vm486, %v648, 0
    %743 = vmatpush.msra.mxu0 0.0
    %744 = vmatpush.msra.mxu0 0.0
    %745 = vmatpush.msra.mxu0 0.0
    %746 = vmatpush.msra.mxu0 0.0
    %747 = vmatpush.msra.mxu0 0.0
    %748 = vmatpush.msra.mxu0 0.0
    %749 = vmatpush.msra.mxu0 0.0
    %750 = vmatpush.msra.mxu0 0.0
    %751 = vmatpush.msra.mxu0 0.0
    %752 = vmatpush.msra.mxu0 0.0
    %753 = vmatpush.msra.mxu0 0.0
    %754 = vmatpush.msra.mxu0 0.0
    %755 = vmatpush.msra.mxu0 0.0
    %756 = vmatpush.msra.mxu0 0.0
    %757 = vmatpush.msra.mxu0 %v336
    %758 = vmatpush.msra.mxu0 %v334
    %759 = vmatmul.f32.gmra.mxu0 %v738
    %v760 = vpop.f32.mrf.mxu0
    %v761 = vadd.f32 0.0, %v760
    %762 = vmatmul.f32.gmra.mxu0 %v741
    %v763 = vpop.f32.mrf.mxu0
    %v764 = vadd.f32 0.0, %v763
    %765 = vdwg.mxu0
    %v767 = vsel %vm486, %v663, 0
    %v770 = vsel %vm486, %v678, 0
    %772 = vmatpush.msra.mxu0 0.0
    %773 = vmatpush.msra.mxu0 0.0
    %774 = vmatpush.msra.mxu0 0.0
    %775 = vmatpush.msra.mxu0 0.0
    %776 = vmatpush.msra.mxu0 0.0
    %777 = vmatpush.msra.mxu0 0.0
    %778 = vmatpush.msra.mxu0 0.0
    %779 = vmatpush.msra.mxu0 0.0
    %780 = vmatpush.msra.mxu0 0.0
    %781 = vmatpush.msra.mxu0 0.0
    %782 = vmatpush.msra.mxu0 0.0
    %783 = vmatpush.msra.mxu0 0.0
    %784 = vmatpush.msra.mxu0 0.0
    %785 = vmatpush.msra.mxu0 0.0
    %786 = vmatpush.msra.mxu0 %v342
    %787 = vmatpush.msra.mxu0 %v340
    %788 = vmatmul.f32.gmra.mxu0 %v767
    %v789 = vpop.f32.mrf.mxu0
    %v790 = vadd.f32 0.0, %v789
    %791 = vmatmul.f32.gmra.mxu0 %v770
    %v792 = vpop.f32.mrf.mxu0
    %v793 = vadd.f32 0.0, %v792
    %794 = vdwg.mxu0
    %797 = vrot.lane.b32.xlu0 %v732, 8
    %v798 = vpop.permute.xlu0 %797
    %799 = vrot.lane.b32.xlu0 %v735, 8
    %v800 = vpop.permute.xlu0 %799
    %805 = vrot.lane.b32.xlu0 %v761, 16
    %v806 = vpop.permute.xlu0 %805
    %807 = vrot.lane.b32.xlu0 %v764, 16
    %v808 = vpop.permute.xlu0 %807
    %813 = vrot.lane.b32.xlu0 %v790, 24
    %v814 = vpop.permute.xlu0 %813
    %815 = vrot.lane.b32.xlu0 %v793, 24
    %v816 = vpop.permute.xlu0 %815
    %v819 = vsel %vm349, %v703, %v798
    %v820 = vsel %vm349, %v706, %v800
    %v821 = vsel %vm486, %v819, %v806
    %v822 = vsel %vm486, %v820, %v808
    %vm823 = vcmask 195584
    %v824 = vsel %vm823, %v821, %v814
    %v825 = vsel %vm823, %v822, %v816
    %v826 = vld [vmem:[#allocation13] sm:$0xff]
    %v827 = vld [vmem:[#allocation13 + $0x8] sm:$0xff]
    %v828 = vld [vmem:[#allocation13 + $0x10] sm:$0xff]
    %v829 = vld [vmem:[#allocation13 + $0x18] sm:$0xff]
    %v831 = vperm.slane %v189, 0
    %v834 = vsel %vm217, %v824, 0
    %v837 = vsel %vm217, %v825, 0
    %839 = vmatpush.msra.mxu0 0.0
    %840 = vmatpush.msra.mxu0 0.0
    %841 = vmatpush.msra.mxu0 0.0
    %842 = vmatpush.msra.mxu0 0.0
    %843 = vmatpush.msra.mxu0 0.0
    %844 = vmatpush.msra.mxu0 0.0
    %845 = vmatpush.msra.mxu0 0.0
    %846 = vmatpush.msra.mxu0 0.0
    %847 = vmatpush.msra.mxu0 0.0
    %848 = vmatpush.msra.mxu0 0.0
    %849 = vmatpush.msra.mxu0 0.0
    %850 = vmatpush.msra.mxu0 0.0
    %851 = vmatpush.msra.mxu0 %v829
    %852 = vmatpush.msra.mxu0 %v828
    %853 = vmatpush.msra.mxu0 %v827
    %854 = vmatpush.msra.mxu0 %v826
    %855 = vmatmul.f32.gmra.mxu0 %v834
    %v856 = vpop.f32.mrf.mxu0
    %v857 = vadd.f32 %v831, %v856
    %858 = vmatmul.f32.gmra.mxu0 %v837
    %v859 = vpop.f32.mrf.mxu0
    %v860 = vadd.f32 %v831, %v859
    %861 = vdwg.mxu0
    %v862 = vadd.f32 %v173, %v857
    %v863 = vadd.f32 %v174, %v860
    %v864 = vsel %vm217, %v862, 0.0
    %865 = vadd.xlane.f32.xlu0 %v864
    %v866 = vpop.xlane.xlu0 %865
    %v867 = vsel %vm217, %v863, 0.0
    %868 = vadd.xlane.f32.xlu0 %v867
    %v869 = vpop.xlane.xlu0 %868
    %v870 = vrcp.pop 32.0
    %v871 = vmul.f32 32.0, %v870
    %v872 = vsub.f32 1.0, %v871
    %v873 = vmul.f32 %v870, %v872
    %v874 = vadd.f32 %v870, %v873
    %vm875 = vweird.f32 %v870
    %v876 = vsel %vm875, %v870, %v874
    %v877 = vmul.f32 %v866, %v876
    %v878 = vmul.f32 %v869, %v876
    %v879 = vsub.f32 %v862, %v877
    %v880 = vsub.f32 %v863, %v878
    %v881 = vmul.f32 %v879, %v879
    %v882 = vmul.f32 %v880, %v880
    %v883 = vsel %vm217, %v881, 0.0
    %884 = vadd.xlane.f32.xlu0 %v883
    %v885 = vpop.xlane.xlu0 %884
    %v886 = vsel %vm217, %v882, 0.0
    %887 = vadd.xlane.f32.xlu0 %v886
    %v888 = vpop.xlane.xlu0 %887
    %v889 = vmul.f32 %v885, %v876
    %v890 = vmul.f32 %v888, %v876
    %v891 = vadd.f32 %v889, 1e-05
    %v892 = vadd.f32 %v890, 1e-05
    %v893 = vrsqrt.pop %v891
    %v894 = vmul.f32 %v893, %v891
    %v895 = vmul.f32 %v894, %v893
    %v896 = vmul.f32 0.5, %v895
    %v897 = vsub.f32 1.5, %v896
    %v898 = vmul.f32 %v893, %v897
    %vm899 = vweird.f32 %v891
    %vm900 = vweird.f32 %v893
    %vm901 = vmor %vm899, %vm900
    %v902 = vsel %vm901, %v893, %v898
    %v903 = vrsqrt.pop %v892
    %v904 = vmul.f32 %v903, %v892
    %v905 = vmul.f32 %v904, %v903
    %v906 = vmul.f32 0.5, %v905
    %v907 = vsub.f32 1.5, %v906
    %v908 = vmul.f32 %v903, %v907
    %vm909 = vweird.f32 %v892
    %vm910 = vweird.f32 %v903
    %vm911 = vmor %vm909, %vm910
    %v912 = vsel %vm911, %v903, %v908
    %v913 = vmul.f32 %v879, %v902
    %v914 = vmul.f32 %v880, %v912
    %v916 = vperm.slane %v192, 0
    %v918 = vmul.f32 %v913, %v916
    %v919 = vmul.f32 %v914, %v916
    %v921 = vperm.slane %v193, 0
    %v923 = vadd.f32 %v918, %v921
    %v924 = vadd.f32 %v919, %v921
    %s925 = scalar_lea.vmem %s6, 32
    %v926 = vld [vmem:[%s925] sm:$0xff]
    %v927 = vld [vmem:[%s925 + $0x8] sm:$0xff]
    %v928 = vld [vmem:[%s925 + $0x10] sm:$0xff]
    %v929 = vld [vmem:[%s925 + $0x18] sm:$0xff]
    %s930 = scalar_lea.vmem %s7, 1
    %v931 = vld [vmem:[%s930] sm:$0x1]
    %v932 = vadd.f32 %v923, %v175
    %v933 = vadd.f32 %v924, %v176
    %v935 = vperm.slane %v931, 0
    %v938 = vsel %vm217, %v932, 0
    %v941 = vsel %vm217, %v933, 0
    %943 = vmatpush.msra.mxu0 0.0
    %944 = vmatpush.msra.mxu0 0.0
    %945 = vmatpush.msra.mxu0 0.0
    %946 = vmatpush.msra.mxu0 0.0
    %947 = vmatpush.msra.mxu0 0.0
    %948 = vmatpush.msra.mxu0 0.0
    %949 = vmatpush.msra.mxu0 0.0
    %950 = vmatpush.msra.mxu0 0.0
    %951 = vmatpush.msra.mxu0 0.0
    %952 = vmatpush.msra.mxu0 0.0
    %953 = vmatpush.msra.mxu0 0.0
    %954 = vmatpush.msra.mxu0 0.0
    %955 = vmatpush.msra.mxu0 %v929
    %956 = vmatpush.msra.mxu0 %v928
    %957 = vmatpush.msra.mxu0 %v927
    %958 = vmatpush.msra.mxu0 %v926
    %959 = vmatmul.f32.gmra.mxu0 %v938
    %v960 = vpop.f32.mrf.mxu0
    %v961 = vadd.f32 %v935, %v960
    %962 = vmatmul.f32.gmra.mxu0 %v941
    %v963 = vpop.f32.mrf.mxu0
    %v964 = vadd.f32 %v935, %v963
    %965 = vdwg.mxu0
    %v966 = vmul.f32 %v961, 0.35355338
    %v967 = vmul.f32 %v964, 0.35355338
    %972 = vrot.lane.b32.xlu0 %v926, 96
    %v973 = vpop.permute.xlu0 %972
    %974 = vrot.lane.b32.xlu0 %v927, 96
    %v975 = vpop.permute.xlu0 %974
    %976 = vrot.lane.b32.xlu0 %v928, 96
    %v977 = vpop.permute.xlu0 %976
    %978 = vrot.lane.b32.xlu0 %v929, 96
    %v979 = vpop.permute.xlu0 %978
    %984 = vrot.lane.b32.xlu0 %v935, 96
    %v985 = vpop.permute.xlu0 %984
    %v988 = vsel %vm217, %v181, 0
    %v991 = vsel %vm217, %v182, 0
    %v994 = vsel %vm217, %v183, 0
    %v997 = vsel %vm217, %v184, 0
    %999 = vmatpush.msra.mxu0 0.0
    %1000 = vmatpush.msra.mxu0 0.0
    %1001 = vmatpush.msra.mxu0 0.0
    %1002 = vmatpush.msra.mxu0 0.0
    %1003 = vmatpush.msra.mxu0 0.0
    %1004 = vmatpush.msra.mxu0 0.0
    %1005 = vmatpush.msra.mxu0 0.0
    %1006 = vmatpush.msra.mxu0 0.0
    %1007 = vmatpush.msra.mxu0 0.0
    %1008 = vmatpush.msra.mxu0 0.0
    %1009 = vmatpush.msra.mxu0 0.0
    %1010 = vmatpush.msra.mxu0 0.0
    %1011 = vmatpush.msra.mxu0 %v979
    %1012 = vmatpush.msra.mxu0 %v977
    %1013 = vmatpush.msra.mxu0 %v975
    %1014 = vmatpush.msra.mxu0 %v973
    %1015 = vmatmul.f32.gmra.mxu0 %v988
    %v1016 = vpop.f32.mrf.mxu0
    %v1017 = vadd.f32 %v985, %v1016
    %1018 = vmatmul.f32.gmra.mxu0 %v991
    %v1019 = vpop.f32.mrf.mxu0
    %v1020 = vadd.f32 %v985, %v1019
    %1021 = vmatmul.f32.gmra.mxu0 %v994
    %v1022 = vpop.f32.mrf.mxu0
    %v1023 = vadd.f32 %v985, %v1022
    %1024 = vmatmul.f32.gmra.mxu0 %v997
    %v1025 = vpop.f32.mrf.mxu0
    %v1026 = vadd.f32 %v985, %v1025
    %1027 = vdwg.mxu0
    %1028 = vrot.lane.b32.xlu0 %v926, 64
    %v1029 = vpop.permute.xlu0 %1028
    %1030 = vrot.lane.b32.xlu0 %v927, 64
    %v1031 = vpop.permute.xlu0 %1030
    %1032 = vrot.lane.b32.xlu0 %v928, 64
    %v1033 = vpop.permute.xlu0 %1032
    %1034 = vrot.lane.b32.xlu0 %v929, 64
    %v1035 = vpop.permute.xlu0 %1034
    %1040 = vrot.lane.b32.xlu0 %v935, 64
    %v1041 = vpop.permute.xlu0 %1040
    %v1044 = vsel %vm217, %v177, 0
    %v1047 = vsel %vm217, %v178, 0
    %v1050 = vsel %vm217, %v179, 0
    %v1053 = vsel %vm217, %v180, 0
    %1055 = vmatpush.msra.mxu0 0.0
    %1056 = vmatpush.msra.mxu0 0.0
    %1057 = vmatpush.msra.mxu0 0.0
    %1058 = vmatpush.msra.mxu0 0.0
    %1059 = vmatpush.msra.mxu0 0.0
    %1060 = vmatpush.msra.mxu0 0.0
    %1061 = vmatpush.msra.mxu0 0.0
    %1062 = vmatpush.msra.mxu0 0.0
    %1063 = vmatpush.msra.mxu0 0.0
    %1064 = vmatpush.msra.mxu0 0.0
    %1065 = vmatpush.msra.mxu0 0.0
    %1066 = vmatpush.msra.mxu0 0.0
    %1067 = vmatpush.msra.mxu0 %v1035
    %1068 = vmatpush.msra.mxu0 %v1033
    %1069 = vmatpush.msra.mxu0 %v1031
    %1070 = vmatpush.msra.mxu0 %v1029
    %1071 = vmatmul.f32.gmra.mxu0 %v1044
    %v1072 = vpop.f32.mrf.mxu0
    %v1073 = vadd.f32 %v1041, %v1072
    %1074 = vmatmul.f32.gmra.mxu0 %v1047
    %v1075 = vpop.f32.mrf.mxu0
    %v1076 = vadd.f32 %v1041, %v1075
    %1077 = vmatmul.f32.gmra.mxu0 %v1050
    %v1078 = vpop.f32.mrf.mxu0
    %v1079 = vadd.f32 %v1041, %v1078
    %1080 = vmatmul.f32.gmra.mxu0 %v1053
    %v1081 = vpop.f32.mrf.mxu0
    %v1082 = vadd.f32 %v1041, %v1081
    %1083 = vdwg.mxu0
    %1086 = vrot.lane.b32.xlu0 %v966, 120
    %v1087 = vpop.permute.xlu0 %1086
    %1088 = vrot.lane.b32.xlu0 %v967, 120
    %v1089 = vpop.permute.xlu0 %1088
    %1090 = vrot.lane.b32.xlu0 %v966, 112
    %v1091 = vpop.permute.xlu0 %1090
    %1092 = vrot.lane.b32.xlu0 %v967, 112
    %v1093 = vpop.permute.xlu0 %1092
    %1094 = vrot.lane.b32.xlu0 %v966, 104
    %v1095 = vpop.permute.xlu0 %1094
    %1096 = vrot.lane.b32.xlu0 %v967, 104
    %v1097 = vpop.permute.xlu0 %1096
    %1102 = vrot.lane.b32.xlu0 %v1017, 120
    %v1103 = vpop.permute.xlu0 %1102
    %1104 = vrot.lane.b32.xlu0 %v1020, 120
    %v1105 = vpop.permute.xlu0 %1104
    %1106 = vrot.lane.b32.xlu0 %v1023, 120
    %v1107 = vpop.permute.xlu0 %1106
    %1108 = vrot.lane.b32.xlu0 %v1026, 120
    %v1109 = vpop.permute.xlu0 %1108
    %1110 = vrot.lane.b32.xlu0 %v1017, 112
    %v1111 = vpop.permute.xlu0 %1110
    %1112 = vrot.lane.b32.xlu0 %v1020, 112
    %v1113 = vpop.permute.xlu0 %1112
    %1114 = vrot.lane.b32.xlu0 %v1023, 112
    %v1115 = vpop.permute.xlu0 %1114
    %1116 = vrot.lane.b32.xlu0 %v1026, 112
    %v1117 = vpop.permute.xlu0 %1116
    %1118 = vrot.lane.b32.xlu0 %v1017, 104
    %v1119 = vpop.permute.xlu0 %1118
    %1120 = vrot.lane.b32.xlu0 %v1020, 104
    %v1121 = vpop.permute.xlu0 %1120
    %1122 = vrot.lane.b32.xlu0 %v1023, 104
    %v1123 = vpop.permute.xlu0 %1122
    %1124 = vrot.lane.b32.xlu0 %v1026, 104
    %v1125 = vpop.permute.xlu0 %1124
    %1130 = vrot.lane.b32.xlu0 %v1073, 120
    %v1131 = vpop.permute.xlu0 %1130
    %1132 = vrot.lane.b32.xlu0 %v1076, 120
    %v1133 = vpop.permute.xlu0 %1132
    %1134 = vrot.lane.b32.xlu0 %v1079, 120
    %v1135 = vpop.permute.xlu0 %1134
    %1136 = vrot.lane.b32.xlu0 %v1082, 120
    %v1137 = vpop.permute.xlu0 %1136
    %1142 = vrot.lane.b32.xlu0 %v1073, 112
    %v1143 = vpop.permute.xlu0 %1142
    %1144 = vrot.lane.b32.xlu0 %v1076, 112
    %v1145 = vpop.permute.xlu0 %1144
    %1146 = vrot.lane.b32.xlu0 %v1079, 112
    %v1147 = vpop.permute.xlu0 %1146
    %1148 = vrot.lane.b32.xlu0 %v1082, 112
    %v1149 = vpop.permute.xlu0 %1148
    %1154 = vrot.lane.b32.xlu0 %v1073, 104
    %v1155 = vpop.permute.xlu0 %1154
    %1156 = vrot.lane.b32.xlu0 %v1076, 104
    %v1157 = vpop.permute.xlu0 %1156
    %1158 = vrot.lane.b32.xlu0 %v1079, 104
    %v1159 = vpop.permute.xlu0 %1158
    %1160 = vrot.lane.b32.xlu0 %v1082, 104
    %v1161 = vpop.permute.xlu0 %1160
    %v1166 = vsel %vm349, %v966, 0
    %v1168 = vsel %vm349, %v967, 0
    %v1170 = vsel %vm349, %v1017, 0
    %v1172 = vsel %vm349, %v1020, 0
    %v1174 = vsel %vm349, %v1023, 0
    %v1176 = vsel %vm349, %v1026, 0
    %1178 = vmatpush.xpose.msra.mxu0 0.0
    %1179 = vmatpush.xpose.msra.mxu0 0.0
    %1180 = vmatpush.xpose.msra.mxu0 0.0
    %1181 = vmatpush.xpose.msra.mxu0 0.0
    %1182 = vmatpush.xpose.msra.mxu0 0.0
    %1183 = vmatpush.xpose.msra.mxu0 0.0
    %1184 = vmatpush.xpose.msra.mxu0 0.0
    %1185 = vmatpush.xpose.msra.mxu0 0.0
    %1186 = vmatpush.xpose.msra.mxu0 0.0
    %1187 = vmatpush.xpose.msra.mxu0 0.0
    %1188 = vmatpush.xpose.msra.mxu0 0.0
    %1189 = vmatpush.xpose.msra.mxu0 0.0
    %1190 = vmatpush.xpose.msra.mxu0 %v1176
    %1191 = vmatpush.xpose.msra.mxu0 %v1174
    %1192 = vmatpush.xpose.msra.mxu0 %v1172
    %1193 = vmatpush.xpose.msra.mxu0 %v1170
    %1194 = vmatmul.f32.gmra.mxu0 %v1166
    %v1195 = vpop.f32.mrf.mxu0
    %v1196 = vadd.f32 %v187, %v1195
    %1197 = vmatmul.f32.gmra.mxu0 %v1168
    %v1198 = vpop.f32.mrf.mxu0
    %v1199 = vadd.f32 %v188, %v1198
    %1200 = vdwg.mxu0
    %v1201 = vsel %vm349, %v1087, 0
    %v1203 = vsel %vm349, %v1089, 0
    %v1205 = vsel %vm349, %v1103, 0
    %v1207 = vsel %vm349, %v1105, 0
    %v1209 = vsel %vm349, %v1107, 0
    %v1211 = vsel %vm349, %v1109, 0
    %1213 = vmatpush.xpose.msra.mxu0 0.0
    %1214 = vmatpush.xpose.msra.mxu0 0.0
    %1215 = vmatpush.xpose.msra.mxu0 0.0
    %1216 = vmatpush.xpose.msra.mxu0 0.0
    %1217 = vmatpush.xpose.msra.mxu0 0.0
    %1218 = vmatpush.xpose.msra.mxu0 0.0
    %1219 = vmatpush.xpose.msra.mxu0 0.0
    %1220 = vmatpush.xpose.msra.mxu0 0.0
    %1221 = vmatpush.xpose.msra.mxu0 0.0
    %1222 = vmatpush.xpose.msra.mxu0 0.0
    %1223 = vmatpush.xpose.msra.mxu0 0.0
    %1224 = vmatpush.xpose.msra.mxu0 0.0
    %1225 = vmatpush.xpose.msra.mxu0 %v1211
    %1226 = vmatpush.xpose.msra.mxu0 %v1209
    %1227 = vmatpush.xpose.msra.mxu0 %v1207
    %1228 = vmatpush.xpose.msra.mxu0 %v1205
    %1229 = vmatmul.f32.gmra.mxu0 %v1201
    %v1230 = vpop.f32.mrf.mxu0
    %v1231 = vadd.f32 %v187, %v1230
    %1232 = vmatmul.f32.gmra.mxu0 %v1203
    %v1233 = vpop.f32.mrf.mxu0
    %v1234 = vadd.f32 %v188, %v1233
    %1235 = vdwg.mxu0
    %v1236 = vsel %vm349, %v1091, 0
    %v1238 = vsel %vm349, %v1093, 0
    %v1240 = vsel %vm349, %v1111, 0
    %v1242 = vsel %vm349, %v1113, 0
    %v1244 = vsel %vm349, %v1115, 0
    %v1246 = vsel %vm349, %v1117, 0
    %1248 = vmatpush.xpose.msra.mxu0 0.0
    %1249 = vmatpush.xpose.msra.mxu0 0.0
    %1250 = vmatpush.xpose.msra.mxu0 0.0
    %1251 = vmatpush.xpose.msra.mxu0 0.0
    %1252 = vmatpush.xpose.msra.mxu0 0.0
    %1253 = vmatpush.xpose.msra.mxu0 0.0
    %1254 = vmatpush.xpose.msra.mxu0 0.0
    %1255 = vmatpush.xpose.msra.mxu0 0.0
    %1256 = vmatpush.xpose.msra.mxu0 0.0
    %1257 = vmatpush.xpose.msra.mxu0 0.0
    %1258 = vmatpush.xpose.msra.mxu0 0.0
    %1259 = vmatpush.xpose.msra.mxu0 0.0
    %1260 = vmatpush.xpose.msra.mxu0 %v1246
    %1261 = vmatpush.xpose.msra.mxu0 %v1244
    %1262 = vmatpush.xpose.msra.mxu0 %v1242
    %1263 = vmatpush.xpose.msra.mxu0 %v1240
    %1264 = vmatmul.f32.gmra.mxu0 %v1236
    %v1265 = vpop.f32.mrf.mxu0
    %v1266 = vadd.f32 %v187, %v1265
    %1267 = vmatmul.f32.gmra.mxu0 %v1238
    %v1268 = vpop.f32.mrf.mxu0
    %v1269 = vadd.f32 %v188, %v1268
    %1270 = vdwg.mxu0
    %v1271 = vsel %vm349, %v1095, 0
    %v1273 = vsel %vm349, %v1097, 0
    %v1275 = vsel %vm349, %v1119, 0
    %v1277 = vsel %vm349, %v1121, 0
    %v1279 = vsel %vm349, %v1123, 0
    %v1281 = vsel %vm349, %v1125, 0
    %1283 = vmatpush.xpose.msra.mxu0 0.0
    %1284 = vmatpush.xpose.msra.mxu0 0.0
    %1285 = vmatpush.xpose.msra.mxu0 0.0
    %1286 = vmatpush.xpose.msra.mxu0 0.0
    %1287 = vmatpush.xpose.msra.mxu0 0.0
    %1288 = vmatpush.xpose.msra.mxu0 0.0
    %1289 = vmatpush.xpose.msra.mxu0 0.0
    %1290 = vmatpush.xpose.msra.mxu0 0.0
    %1291 = vmatpush.xpose.msra.mxu0 0.0
    %1292 = vmatpush.xpose.msra.mxu0 0.0
    %1293 = vmatpush.xpose.msra.mxu0 0.0
    %1294 = vmatpush.xpose.msra.mxu0 0.0
    %1295 = vmatpush.xpose.msra.mxu0 %v1281
    %1296 = vmatpush.xpose.msra.mxu0 %v1279
    %1297 = vmatpush.xpose.msra.mxu0 %v1277
    %1298 = vmatpush.xpose.msra.mxu0 %v1275
    %1299 = vmatmul.f32.gmra.mxu0 %v1271
    %v1300 = vpop.f32.mrf.mxu0
    %v1301 = vadd.f32 %v187, %v1300
    %1302 = vmatmul.f32.gmra.mxu0 %v1273
    %v1303 = vpop.f32.mrf.mxu0
    %v1304 = vadd.f32 %v188, %v1303
    %1305 = vdwg.mxu0
    %v1306 = vsel %vm217, %v1196, -inf
    %1307 = vmax.xlane.f32.xlu0 %v1306
    %v1308 = vpop.xlane.xlu0 %1307
    %v1309 = vsel %vm217, %v1199, -inf
    %1310 = vmax.xlane.f32.xlu0 %v1309
    %v1311 = vpop.xlane.xlu0 %1310
    %v1312 = vsel %vm217, %v1231, -inf
    %1313 = vmax.xlane.f32.xlu0 %v1312
    %v1314 = vpop.xlane.xlu0 %1313
    %v1315 = vsel %vm217, %v1234, -inf
    %1316 = vmax.xlane.f32.xlu0 %v1315
    %v1317 = vpop.xlane.xlu0 %1316
    %v1318 = vsel %vm217, %v1266, -inf
    %1319 = vmax.xlane.f32.xlu0 %v1318
    %v1320 = vpop.xlane.xlu0 %1319
    %v1321 = vsel %vm217, %v1269, -inf
    %1322 = vmax.xlane.f32.xlu0 %v1321
    %v1323 = vpop.xlane.xlu0 %1322
    %v1324 = vsel %vm217, %v1301, -inf
    %1325 = vmax.xlane.f32.xlu0 %v1324
    %v1326 = vpop.xlane.xlu0 %1325
    %v1327 = vsel %vm217, %v1304, -inf
    %1328 = vmax.xlane.f32.xlu0 %v1327
    %v1329 = vpop.xlane.xlu0 %1328
    %v1330 = vsub.f32 %v1196, %v1308
    %v1331 = vsub.f32 %v1199, %v1311
    %v1332 = vsub.f32 %v1231, %v1314
    %v1333 = vsub.f32 %v1234, %v1317
    %v1334 = vsub.f32 %v1266, %v1320
    %v1335 = vsub.f32 %v1269, %v1323
    %v1336 = vsub.f32 %v1301, %v1326
    %v1337 = vsub.f32 %v1304, %v1329
    %v1338 = vmul.f32 %v1330, 1.442695
    %v1339 = vpow.pop %v1338
    %v1340 = vmul.f32 %v1331, 1.442695
    %v1341 = vpow.pop %v1340
    %v1342 = vmul.f32 %v1332, 1.442695
    %v1343 = vpow.pop %v1342
    %v1344 = vmul.f32 %v1333, 1.442695
    %v1345 = vpow.pop %v1344
    %v1346 = vmul.f32 %v1334, 1.442695
    %v1347 = vpow.pop %v1346
    %v1348 = vmul.f32 %v1335, 1.442695
    %v1349 = vpow.pop %v1348
    %v1350 = vmul.f32 %v1336, 1.442695
    %v1351 = vpow.pop %v1350
    %v1352 = vmul.f32 %v1337, 1.442695
    %v1353 = vpow.pop %v1352
    %v1354 = vsel %vm217, %v1339, 0.0
    %1355 = vadd.xlane.f32.xlu0 %v1354
    %v1356 = vpop.xlane.xlu0 %1355
    %v1357 = vsel %vm217, %v1341, 0.0
    %1358 = vadd.xlane.f32.xlu0 %v1357
    %v1359 = vpop.xlane.xlu0 %1358
    %v1360 = vsel %vm217, %v1343, 0.0
    %1361 = vadd.xlane.f32.xlu0 %v1360
    %v1362 = vpop.xlane.xlu0 %1361
    %v1363 = vsel %vm217, %v1345, 0.0
    %1364 = vadd.xlane.f32.xlu0 %v1363
    %v1365 = vpop.xlane.xlu0 %1364
    %v1366 = vsel %vm217, %v1347, 0.0
    %1367 = vadd.xlane.f32.xlu0 %v1366
    %v1368 = vpop.xlane.xlu0 %1367
    %v1369 = vsel %vm217, %v1349, 0.0
    %1370 = vadd.xlane.f32.xlu0 %v1369
    %v1371 = vpop.xlane.xlu0 %1370
    %v1372 = vsel %vm217, %v1351, 0.0
    %1373 = vadd.xlane.f32.xlu0 %v1372
    %v1374 = vpop.xlane.xlu0 %1373
    %v1375 = vsel %vm217, %v1353, 0.0
    %1376 = vadd.xlane.f32.xlu0 %v1375
    %v1377 = vpop.xlane.xlu0 %1376
    %v1378 = vrcp.pop %v1356
    %v1379 = vmul.f32 %v1356, %v1378
    %v1380 = vsub.f32 1.0, %v1379
    %v1381 = vmul.f32 %v1378, %v1380
    %v1382 = vadd.f32 %v1378, %v1381
    %vm1383 = vweird.f32 %v1356
    %vm1384 = vweird.f32 %v1378
    %vm1385 = vmor %vm1383, %vm1384
    %v1386 = vsel %vm1385, %v1378, %v1382
    %v1387 = vand.u32 2147483647, %v1356
    %vm1388 = vcmp.eq.f32.partialorder %v1387, 8.507059e+37
    %v1389 = vand.u32 %v1356, 2147483648
    %v1390 = vor.u32 1.1754944e-38, %v1389
    %v1391 = vsel %vm1388, %v1390, %v1386
    %v1392 = vmul.f32 %v1339, %v1391
    %v1393 = vrcp.pop %v1359
    %v1394 = vmul.f32 %v1359, %v1393
    %v1395 = vsub.f32 1.0, %v1394
    %v1396 = vmul.f32 %v1393, %v1395
    %v1397 = vadd.f32 %v1393, %v1396
    %vm1398 = vweird.f32 %v1359
    %vm1399 = vweird.f32 %v1393
    %vm1400 = vmor %vm1398, %vm1399
    %v1401 = vsel %vm1400, %v1393, %v1397
    %v1402 = vand.u32 2147483647, %v1359
    %vm1403 = vcmp.eq.f32.partialorder %v1402, 8.507059e+37
    %v1404 = vand.u32 %v1359, 2147483648
    %v1405 = vor.u32 1.1754944e-38, %v1404
    %v1406 = vsel %vm1403, %v1405, %v1401
    %v1407 = vmul.f32 %v1341, %v1406
    %v1408 = vrcp.pop %v1362
    %v1409 = vmul.f32 %v1362, %v1408
    %v1410 = vsub.f32 1.0, %v1409
    %v1411 = vmul.f32 %v1408, %v1410
    %v1412 = vadd.f32 %v1408, %v1411
    %vm1413 = vweird.f32 %v1362
    %vm1414 = vweird.f32 %v1408
    %vm1415 = vmor %vm1413, %vm1414
    %v1416 = vsel %vm1415, %v1408, %v1412
    %v1417 = vand.u32 2147483647, %v1362
    %vm1418 = vcmp.eq.f32.partialorder %v1417, 8.507059e+37
    %v1419 = vand.u32 %v1362, 2147483648
    %v1420 = vor.u32 1.1754944e-38, %v1419
    %v1421 = vsel %vm1418, %v1420, %v1416
    %v1422 = vmul.f32 %v1343, %v1421
    %v1423 = vrcp.pop %v1365
    %v1424 = vmul.f32 %v1365, %v1423
    %v1425 = vsub.f32 1.0, %v1424
    %v1426 = vmul.f32 %v1423, %v1425
    %v1427 = vadd.f32 %v1423, %v1426
    %vm1428 = vweird.f32 %v1365
    %vm1429 = vweird.f32 %v1423
    %vm1430 = vmor %vm1428, %vm1429
    %v1431 = vsel %vm1430, %v1423, %v1427
    %v1432 = vand.u32 2147483647, %v1365
    %vm1433 = vcmp.eq.f32.partialorder %v1432, 8.507059e+37
    %v1434 = vand.u32 %v1365, 2147483648
    %v1435 = vor.u32 1.1754944e-38, %v1434
    %v1436 = vsel %vm1433, %v1435, %v1431
    %v1437 = vmul.f32 %v1345, %v1436
    %v1438 = vrcp.pop %v1368
    %v1439 = vmul.f32 %v1368, %v1438
    %v1440 = vsub.f32 1.0, %v1439
    %v1441 = vmul.f32 %v1438, %v1440
    %v1442 = vadd.f32 %v1438, %v1441
    %vm1443 = vweird.f32 %v1368
    %vm1444 = vweird.f32 %v1438
    %vm1445 = vmor %vm1443, %vm1444
    %v1446 = vsel %vm1445, %v1438, %v1442
    %v1447 = vand.u32 2147483647, %v1368
    %vm1448 = vcmp.eq.f32.partialorder %v1447, 8.507059e+37
    %v1449 = vand.u32 %v1368, 2147483648
    %v1450 = vor.u32 1.1754944e-38, %v1449
    %v1451 = vsel %vm1448, %v1450, %v1446
    %v1452 = vmul.f32 %v1347, %v1451
    %v1453 = vrcp.pop %v1371
    %v1454 = vmul.f32 %v1371, %v1453
    %v1455 = vsub.f32 1.0, %v1454
    %v1456 = vmul.f32 %v1453, %v1455
    %v1457 = vadd.f32 %v1453, %v1456
    %vm1458 = vweird.f32 %v1371
    %vm1459 = vweird.f32 %v1453
    %vm1460 = vmor %vm1458, %vm1459
    %v1461 = vsel %vm1460, %v1453, %v1457
    %v1462 = vand.u32 2147483647, %v1371
    %vm1463 = vcmp.eq.f32.partialorder %v1462, 8.507059e+37
    %v1464 = vand.u32 %v1371, 2147483648
    %v1465 = vor.u32 1.1754944e-38, %v1464
    %v1466 = vsel %vm1463, %v1465, %v1461
    %v1467 = vmul.f32 %v1349, %v1466
    %v1468 = vrcp.pop %v1374
    %v1469 = vmul.f32 %v1374, %v1468
    %v1470 = vsub.f32 1.0, %v1469
    %v1471 = vmul.f32 %v1468, %v1470
    %v1472 = vadd.f32 %v1468, %v1471
    %vm1473 = vweird.f32 %v1374
    %vm1474 = vweird.f32 %v1468
    %vm1475 = vmor %vm1473, %vm1474
    %v1476 = vsel %vm1475, %v1468, %v1472
    %v1477 = vand.u32 2147483647, %v1374
    %vm1478 = vcmp.eq.f32.partialorder %v1477, 8.507059e+37
    %v1479 = vand.u32 %v1374, 2147483648
    %v1480 = vor.u32 1.1754944e-38, %v1479
    %v1481 = vsel %vm1478, %v1480, %v1476
    %v1482 = vmul.f32 %v1351, %v1481
    %v1483 = vrcp.pop %v1377
    %v1484 = vmul.f32 %v1377, %v1483
    %v1485 = vsub.f32 1.0, %v1484
    %v1486 = vmul.f32 %v1483, %v1485
    %v1487 = vadd.f32 %v1483, %v1486
    %vm1488 = vweird.f32 %v1377
    %vm1489 = vweird.f32 %v1483
    %vm1490 = vmor %vm1488, %vm1489
    %v1491 = vsel %vm1490, %v1483, %v1487
    %v1492 = vand.u32 2147483647, %v1377
    %vm1493 = vcmp.eq.f32.partialorder %v1492, 8.507059e+37
    %v1494 = vand.u32 %v1377, 2147483648
    %v1495 = vor.u32 1.1754944e-38, %v1494
    %v1496 = vsel %vm1493, %v1495, %v1491
    %v1497 = vmul.f32 %v1353, %v1496
    %v1499 = vsel %vm217, %v1392, 0
    %v1502 = vsel %vm217, %v1407, 0
    %1504 = vmatpush.msra.mxu0 0.0
    %1505 = vmatpush.msra.mxu0 0.0
    %1506 = vmatpush.msra.mxu0 0.0
    %1507 = vmatpush.msra.mxu0 0.0
    %1508 = vmatpush.msra.mxu0 0.0
    %1509 = vmatpush.msra.mxu0 0.0
    %1510 = vmatpush.msra.mxu0 0.0
    %1511 = vmatpush.msra.mxu0 0.0
    %1512 = vmatpush.msra.mxu0 0.0
    %1513 = vmatpush.msra.mxu0 0.0
    %1514 = vmatpush.msra.mxu0 0.0
    %1515 = vmatpush.msra.mxu0 0.0
    %1516 = vmatpush.msra.mxu0 %v1082
    %1517 = vmatpush.msra.mxu0 %v1079
    %1518 = vmatpush.msra.mxu0 %v1076
    %1519 = vmatpush.msra.mxu0 %v1073
    %1520 = vmatmul.f32.gmra.mxu0 %v1499
    %v1521 = vpop.f32.mrf.mxu0
    %v1522 = vadd.f32 0.0, %v1521
    %1523 = vmatmul.f32.gmra.mxu0 %v1502
    %v1524 = vpop.f32.mrf.mxu0
    %v1525 = vadd.f32 0.0, %v1524
    %1526 = vdwg.mxu0
    %v1528 = vsel %vm217, %v1422, 0
    %v1531 = vsel %vm217, %v1437, 0
    %1533 = vmatpush.msra.mxu0 0.0
    %1534 = vmatpush.msra.mxu0 0.0
    %1535 = vmatpush.msra.mxu0 0.0
    %1536 = vmatpush.msra.mxu0 0.0
    %1537 = vmatpush.msra.mxu0 0.0
    %1538 = vmatpush.msra.mxu0 0.0
    %1539 = vmatpush.msra.mxu0 0.0
    %1540 = vmatpush.msra.mxu0 0.0
    %1541 = vmatpush.msra.mxu0 0.0
    %1542 = vmatpush.msra.mxu0 0.0
    %1543 = vmatpush.msra.mxu0 0.0
    %1544 = vmatpush.msra.mxu0 0.0
    %1545 = vmatpush.msra.mxu0 %v1137
    %1546 = vmatpush.msra.mxu0 %v1135
    %1547 = vmatpush.msra.mxu0 %v1133
    %1548 = vmatpush.msra.mxu0 %v1131
    %1549 = vmatmul.f32.gmra.mxu0 %v1528
    %v1550 = vpop.f32.mrf.mxu0
    %v1551 = vadd.f32 0.0, %v1550
    %1552 = vmatmul.f32.gmra.mxu0 %v1531
    %v1553 = vpop.f32.mrf.mxu0
    %v1554 = vadd.f32 0.0, %v1553
    %1555 = vdwg.mxu0
    %v1557 = vsel %vm217, %v1452, 0
    %v1560 = vsel %vm217, %v1467, 0
    %1562 = vmatpush.msra.mxu0 0.0
    %1563 = vmatpush.msra.mxu0 0.0
    %1564 = vmatpush.msra.mxu0 0.0
    %1565 = vmatpush.msra.mxu0 0.0
    %1566 = vmatpush.msra.mxu0 0.0
    %1567 = vmatpush.msra.mxu0 0.0
    %1568 = vmatpush.msra.mxu0 0.0
    %1569 = vmatpush.msra.mxu0 0.0
    %1570 = vmatpush.msra.mxu0 0.0
    %1571 = vmatpush.msra.mxu0 0.0
    %1572 = vmatpush.msra.mxu0 0.0
    %1573 = vmatpush.msra.mxu0 0.0
    %1574 = vmatpush.msra.mxu0 %v1149
    %1575 = vmatpush.msra.mxu0 %v1147
    %1576 = vmatpush.msra.mxu0 %v1145
    %1577 = vmatpush.msra.mxu0 %v1143
    %1578 = vmatmul.f32.gmra.mxu0 %v1557
    %v1579 = vpop.f32.mrf.mxu0
    %v1580 = vadd.f32 0.0, %v1579
    %1581 = vmatmul.f32.gmra.mxu0 %v1560
    %v1582 = vpop.f32.mrf.mxu0
    %v1583 = vadd.f32 0.0, %v1582
    %1584 = vdwg.mxu0
    %v1586 = vsel %vm217, %v1482, 0
    %v1589 = vsel %vm217, %v1497, 0
    %1591 = vmatpush.msra.mxu0 0.0
    %1592 = vmatpush.msra.mxu0 0.0
    %1593 = vmatpush.msra.mxu0 0.0
    %1594 = vmatpush.msra.mxu0 0.0
    %1595 = vmatpush.msra.mxu0 0.0
    %1596 = vmatpush.msra.mxu0 0.0
    %1597 = vmatpush.msra.mxu0 0.0
    %1598 = vmatpush.msra.mxu0 0.0
    %1599 = vmatpush.msra.mxu0 0.0
    %1600 = vmatpush.msra.mxu0 0.0
    %1601 = vmatpush.msra.mxu0 0.0
    %1602 = vmatpush.msra.mxu0 0.0
    %1603 = vmatpush.msra.mxu0 %v1161
    %1604 = vmatpush.msra.mxu0 %v1159
    %1605 = vmatpush.msra.mxu0 %v1157
    %1606 = vmatpush.msra.mxu0 %v1155
    %1607 = vmatmul.f32.gmra.mxu0 %v1586
    %v1608 = vpop.f32.mrf.mxu0
    %v1609 = vadd.f32 0.0, %v1608
    %1610 = vmatmul.f32.gmra.mxu0 %v1589
    %v1611 = vpop.f32.mrf.mxu0
    %v1612 = vadd.f32 0.0, %v1611
    %1613 = vdwg.mxu0
    %1616 = vrot.lane.b32.xlu0 %v1551, 8
    %v1617 = vpop.permute.xlu0 %1616
    %1618 = vrot.lane.b32.xlu0 %v1554, 8
    %v1619 = vpop.permute.xlu0 %1618
    %1624 = vrot.lane.b32.xlu0 %v1580, 16
    %v1625 = vpop.permute.xlu0 %1624
    %1626 = vrot.lane.b32.xlu0 %v1583, 16
    %v1627 = vpop.permute.xlu0 %1626
    %1632 = vrot.lane.b32.xlu0 %v1609, 24
    %v1633 = vpop.permute.xlu0 %1632
    %1634 = vrot.lane.b32.xlu0 %v1612, 24
    %v1635 = vpop.permute.xlu0 %1634
    %v1638 = vsel %vm349, %v1522, %v1617
    %v1639 = vsel %vm349, %v1525, %v1619
    %v1640 = vsel %vm486, %v1638, %v1625
    %v1641 = vsel %vm486, %v1639, %v1627
    %v1642 = vsel %vm823, %v1640, %v1633
    %v1643 = vsel %vm823, %v1641, %v1635
    %s1644 = scalar_lea.vmem [#allocation13], 32
    %v1645 = vld [vmem:[%s1644] sm:$0xff]
    %v1646 = vld [vmem:[%s1644 + $0x8] sm:$0xff]
    %v1647 = vld [vmem:[%s1644 + $0x10] sm:$0xff]
    %v1648 = vld [vmem:[%s1644 + $0x18] sm:$0xff]
    %v1650 = vperm.slane %v190, 0
    %v1653 = vsel %vm217, %v1642, 0
    %v1656 = vsel %vm217, %v1643, 0
    %1658 = vmatpush.msra.mxu0 0.0
    %1659 = vmatpush.msra.mxu0 0.0
    %1660 = vmatpush.msra.mxu0 0.0
    %1661 = vmatpush.msra.mxu0 0.0
    %1662 = vmatpush.msra.mxu0 0.0
    %1663 = vmatpush.msra.mxu0 0.0
    %1664 = vmatpush.msra.mxu0 0.0
    %1665 = vmatpush.msra.mxu0 0.0
    %1666 = vmatpush.msra.mxu0 0.0
    %1667 = vmatpush.msra.mxu0 0.0
    %1668 = vmatpush.msra.mxu0 0.0
    %1669 = vmatpush.msra.mxu0 0.0
    %1670 = vmatpush.msra.mxu0 %v1648
    %1671 = vmatpush.msra.mxu0 %v1647
    %1672 = vmatpush.msra.mxu0 %v1646
    %1673 = vmatpush.msra.mxu0 %v1645
    %1674 = vmatmul.f32.gmra.mxu0 %v1653
    %v1675 = vpop.f32.mrf.mxu0
    %v1676 = vadd.f32 %v1650, %v1675
    %1677 = vmatmul.f32.gmra.mxu0 %v1656
    %v1678 = vpop.f32.mrf.mxu0
    %v1679 = vadd.f32 %v1650, %v1678
    %1680 = vdwg.mxu0
    %v1681 = vadd.f32 %v923, %v1676
    %v1682 = vadd.f32 %v924, %v1679
    %v1683 = vsel %vm217, %v1681, 0.0
    %1684 = vadd.xlane.f32.xlu0 %v1683
    %v1685 = vpop.xlane.xlu0 %1684
    %v1686 = vsel %vm217, %v1682, 0.0
    %1687 = vadd.xlane.f32.xlu0 %v1686
    %v1688 = vpop.xlane.xlu0 %1687
    %v1689 = vmul.f32 %v1685, %v876
    %v1690 = vmul.f32 %v1688, %v876
    %v1691 = vsub.f32 %v1681, %v1689
    %v1692 = vsub.f32 %v1682, %v1690
    %v1693 = vmul.f32 %v1691, %v1691
    %v1694 = vmul.f32 %v1692, %v1692
    %v1695 = vsel %vm217, %v1693, 0.0
    %1696 = vadd.xlane.f32.xlu0 %v1695
    %v1697 = vpop.xlane.xlu0 %1696
    %v1698 = vsel %vm217, %v1694, 0.0
    %1699 = vadd.xlane.f32.xlu0 %v1698
    %v1700 = vpop.xlane.xlu0 %1699
    %v1701 = vmul.f32 %v1697, %v876
    %v1702 = vmul.f32 %v1700, %v876
    %v1703 = vadd.f32 %v1701, 1e-05
    %v1704 = vadd.f32 %v1702, 1e-05
    %v1705 = vrsqrt.pop %v1703
    %v1706 = vmul.f32 %v1705, %v1703
    %v1707 = vmul.f32 %v1706, %v1705
    %v1708 = vmul.f32 0.5, %v1707
    %v1709 = vsub.f32 1.5, %v1708
    %v1710 = vmul.f32 %v1705, %v1709
    %vm1711 = vweird.f32 %v1703
    %vm1712 = vweird.f32 %v1705
    %vm1713 = vmor %vm1711, %vm1712
    %v1714 = vsel %vm1713, %v1705, %v1710
    %v1715 = vrsqrt.pop %v1704
    %v1716 = vmul.f32 %v1715, %v1704
    %v1717 = vmul.f32 %v1716, %v1715
    %v1718 = vmul.f32 0.5, %v1717
    %v1719 = vsub.f32 1.5, %v1718
    %v1720 = vmul.f32 %v1715, %v1719
    %vm1721 = vweird.f32 %v1704
    %vm1722 = vweird.f32 %v1715
    %vm1723 = vmor %vm1721, %vm1722
    %v1724 = vsel %vm1723, %v1715, %v1720
    %v1725 = vmul.f32 %v1691, %v1714
    %v1726 = vmul.f32 %v1692, %v1724
    %v1728 = vperm.slane %v194, 0
    %v1730 = vmul.f32 %v1725, %v1728
    %v1731 = vmul.f32 %v1726, %v1728
    %v1733 = vperm.slane %v195, 0
    %v1735 = vadd.f32 %v1730, %v1733
    %v1736 = vadd.f32 %v1731, %v1733
    %v1737 = vld [vmem:[%s9] sm:$0xff]
    %v1738 = vld [vmem:[%s9 + $0x8] sm:$0xff]
    %v1739 = vld [vmem:[%s9 + $0x10] sm:$0xff]
    %v1740 = vld [vmem:[%s9 + $0x18] sm:$0xff]
    %v1741 = vld [vmem:[%s10] sm:$0x1]
    %v1743 = vperm.slane %v1741, 0
    %v1746 = vsel %vm217, %v1735, 0
    %v1749 = vsel %vm217, %v1736, 0
    %1751 = vmatpush.msra.mxu0 0.0
    %1752 = vmatpush.msra.mxu0 0.0
    %1753 = vmatpush.msra.mxu0 0.0
    %1754 = vmatpush.msra.mxu0 0.0
    %1755 = vmatpush.msra.mxu0 0.0
    %1756 = vmatpush.msra.mxu0 0.0
    %1757 = vmatpush.msra.mxu0 0.0
    %1758 = vmatpush.msra.mxu0 0.0
    %1759 = vmatpush.msra.mxu0 0.0
    %1760 = vmatpush.msra.mxu0 0.0
    %1761 = vmatpush.msra.mxu0 0.0
    %1762 = vmatpush.msra.mxu0 0.0
    %1763 = vmatpush.msra.mxu0 %v1740
    %1764 = vmatpush.msra.mxu0 %v1739
    %1765 = vmatpush.msra.mxu0 %v1738
    %1766 = vmatpush.msra.mxu0 %v1737
    %1767 = vmatmul.f32.gmra.mxu0 %v1746
    %v1768 = vpop.f32.mrf.mxu0
    %v1769 = vadd.f32 %v1743, %v1768
    %1770 = vmatmul.f32.gmra.mxu0 %v1749
    %v1771 = vpop.f32.mrf.mxu0
    %v1772 = vadd.f32 %v1743, %v1771
    %1773 = vdwg.mxu0
    %v1774 = vmax.f32 %v1769, 0.0
    %v1775 = vmax.f32 %v1772, 0.0
    %v1776 = vld [vmem:[%s11] sm:$0xff]
    %v1777 = vld [vmem:[%s11 + $0x8] sm:$0xff]
    %v1778 = vld [vmem:[%s11 + $0x10] sm:$0xff]
    %v1779 = vld [vmem:[%s11 + $0x18] sm:$0xff]
    %v1780 = vld [vmem:[%s11 + $0x20] sm:$0xff]
    %v1781 = vld [vmem:[%s11 + $0x28] sm:$0xff]
    %v1782 = vld [vmem:[%s11 + $0x30] sm:$0xff]
    %v1783 = vld [vmem:[%s11 + $0x38] sm:$0xff]
    %v1785 = vperm.slane %v191, 0
    %vm1787 = vcmask 523264
    %v1789 = vsel %vm1787, %v1774, 0
    %v1792 = vsel %vm1787, %v1775, 0
    %1794 = vmatpush.msra.mxu0 0.0
    %1795 = vmatpush.msra.mxu0 0.0
    %1796 = vmatpush.msra.mxu0 0.0
    %1797 = vmatpush.msra.mxu0 0.0
    %1798 = vmatpush.msra.mxu0 0.0
    %1799 = vmatpush.msra.mxu0 0.0
    %1800 = vmatpush.msra.mxu0 0.0
    %1801 = vmatpush.msra.mxu0 0.0
    %1802 = vmatpush.msra.mxu0 %v1783
    %1803 = vmatpush.msra.mxu0 %v1782
    %1804 = vmatpush.msra.mxu0 %v1781
    %1805 = vmatpush.msra.mxu0 %v1780
    %1806 = vmatpush.msra.mxu0 %v1779
    %1807 = vmatpush.msra.mxu0 %v1778
    %1808 = vmatpush.msra.mxu0 %v1777
    %1809 = vmatpush.msra.mxu0 %v1776
    %1810 = vmatmul.f32.gmra.mxu0 %v1789
    %v1811 = vpop.f32.mrf.mxu0
    %v1812 = vadd.f32 %v1785, %v1811
    %1813 = vmatmul.f32.gmra.mxu0 %v1792
    %v1814 = vpop.f32.mrf.mxu0
    %v1815 = vadd.f32 %v1785, %v1814
    %1816 = vdwg.mxu0
    %v1817 = vadd.f32 %v1735, %v1812
    %v1818 = vadd.f32 %v1736, %v1815
    %v1819 = vsel %vm217, %v1817, 0.0
    %1820 = vadd.xlane.f32.xlu0 %v1819
    %v1821 = vpop.xlane.xlu0 %1820
    %v1822 = vsel %vm217, %v1818, 0.0
    %1823 = vadd.xlane.f32.xlu0 %v1822
    %v1824 = vpop.xlane.xlu0 %1823
    %v1825 = vmul.f32 %v1821, %v876
    %v1826 = vmul.f32 %v1824, %v876
    %v1827 = vsub.f32 %v1817, %v1825
    %v1828 = vsub.f32 %v1818, %v1826
    %v1829 = vmul.f32 %v1827, %v1827
    %v1830 = vmul.f32 %v1828, %v1828
    %v1831 = vsel %vm217, %v1829, 0.0
    %1832 = vadd.xlane.f32.xlu0 %v1831
    %v1833 = vpop.xlane.xlu0 %1832
    %v1834 = vsel %vm217, %v1830, 0.0
    %1835 = vadd.xlane.f32.xlu0 %v1834
    %v1836 = vpop.xlane.xlu0 %1835
    %v1837 = vmul.f32 %v1833, %v876
    %v1838 = vmul.f32 %v1836, %v876
    %v1839 = vadd.f32 %v1837, 1e-05
    %v1840 = vadd.f32 %v1838, 1e-05
    %v1841 = vrsqrt.pop %v1839
    %v1842 = vmul.f32 %v1841, %v1839
    %v1843 = vmul.f32 %v1842, %v1841
    %v1844 = vmul.f32 0.5, %v1843
    %v1845 = vsub.f32 1.5, %v1844
    %v1846 = vmul.f32 %v1841, %v1845
    %vm1847 = vweird.f32 %v1839
    %vm1848 = vweird.f32 %v1841
    %vm1849 = vmor %vm1847, %vm1848
    %v1850 = vsel %vm1849, %v1841, %v1846
    %v1851 = vrsqrt.pop %v1840
    %v1852 = vmul.f32 %v1851, %v1840
    %v1853 = vmul.f32 %v1852, %v1851
    %v1854 = vmul.f32 0.5, %v1853
    %v1855 = vsub.f32 1.5, %v1854
    %v1856 = vmul.f32 %v1851, %v1855
    %vm1857 = vweird.f32 %v1840
    %vm1858 = vweird.f32 %v1851
    %vm1859 = vmor %vm1857, %vm1858
    %v1860 = vsel %vm1859, %v1851, %v1856
    %v1861 = vmul.f32 %v1827, %v1850
    %v1862 = vmul.f32 %v1828, %v1860
    %v1864 = vperm.slane %v196, 0
    %v1866 = vmul.f32 %v1861, %v1864
    %v1867 = vmul.f32 %v1862, %v1864
    %v1869 = vperm.slane %v197, 0
    %v1871 = vadd.f32 %v1866, %v1869
    %v1872 = vadd.f32 %v1867, %v1869
    %s1873 = scalar_lea.vmem %s6, 64
    %v1874 = vld [vmem:[%s1873] sm:$0xff]
    %v1875 = vld [vmem:[%s1873 + $0x8] sm:$0xff]
    %v1876 = vld [vmem:[%s1873 + $0x10] sm:$0xff]
    %v1877 = vld [vmem:[%s1873 + $0x18] sm:$0xff]
    %s1878 = scalar_lea.vmem %s7, 2
    %v1879 = vld [vmem:[%s1878] sm:$0x1]
    %v1880 = vadd.f32 %v1871, %v175
    %v1881 = vadd.f32 %v1872, %v176
    %v1883 = vperm.slane %v1879, 0
    %v1886 = vsel %vm217, %v1880, 0
    %v1889 = vsel %vm217, %v1881, 0
    %1891 = vmatpush.msra.mxu0 0.0
    %1892 = vmatpush.msra.mxu0 0.0
    %1893 = vmatpush.msra.mxu0 0.0
    %1894 = vmatpush.msra.mxu0 0.0
    %1895 = vmatpush.msra.mxu0 0.0
    %1896 = vmatpush.msra.mxu0 0.0
    %1897 = vmatpush.msra.mxu0 0.0
    %1898 = vmatpush.msra.mxu0 0.0
    %1899 = vmatpush.msra.mxu0 0.0
    %1900 = vmatpush.msra.mxu0 0.0
    %1901 = vmatpush.msra.mxu0 0.0
    %1902 = vmatpush.msra.mxu0 0.0
    %1903 = vmatpush.msra.mxu0 %v1877
    %1904 = vmatpush.msra.mxu0 %v1876
    %1905 = vmatpush.msra.mxu0 %v1875
    %1906 = vmatpush.msra.mxu0 %v1874
    %1907 = vmatmul.f32.gmra.mxu0 %v1886
    %v1908 = vpop.f32.mrf.mxu0
    %v1909 = vadd.f32 %v1883, %v1908
    %1910 = vmatmul.f32.gmra.mxu0 %v1889
    %v1911 = vpop.f32.mrf.mxu0
    %v1912 = vadd.f32 %v1883, %v1911
    %1913 = vdwg.mxu0
    %1918 = vrot.lane.b32.xlu0 %v1874, 64
    %v1919 = vpop.permute.xlu0 %1918
    %1920 = vrot.lane.b32.xlu0 %v1875, 64
    %v1921 = vpop.permute.xlu0 %1920
    %1922 = vrot.lane.b32.xlu0 %v1876, 64
    %v1923 = vpop.permute.xlu0 %1922
    %1924 = vrot.lane.b32.xlu0 %v1877, 64
    %v1925 = vpop.permute.xlu0 %1924
    %1930 = vrot.lane.b32.xlu0 %v1883, 64
    %v1931 = vpop.permute.xlu0 %1930
    %v1934 = vsel %vm217, %v1871, 0
    %v1937 = vsel %vm217, %v1872, 0
    %1939 = vmatpush.msra.mxu0 0.0
    %1940 = vmatpush.msra.mxu0 0.0
    %1941 = vmatpush.msra.mxu0 0.0
    %1942 = vmatpush.msra.mxu0 0.0
    %1943 = vmatpush.msra.mxu0 0.0
    %1944 = vmatpush.msra.mxu0 0.0
    %1945 = vmatpush.msra.mxu0 0.0
    %1946 = vmatpush.msra.mxu0 0.0
    %1947 = vmatpush.msra.mxu0 0.0
    %1948 = vmatpush.msra.mxu0 0.0
    %1949 = vmatpush.msra.mxu0 0.0
    %1950 = vmatpush.msra.mxu0 0.0
    %1951 = vmatpush.msra.mxu0 %v1925
    %1952 = vmatpush.msra.mxu0 %v1923
    %1953 = vmatpush.msra.mxu0 %v1921
    %1954 = vmatpush.msra.mxu0 %v1919
    %1955 = vmatmul.f32.gmra.mxu0 %v1934
    %v1956 = vpop.f32.mrf.mxu0
    %v1957 = vadd.f32 %v1931, %v1956
    %1958 = vmatmul.f32.gmra.mxu0 %v1937
    %v1959 = vpop.f32.mrf.mxu0
    %v1960 = vadd.f32 %v1931, %v1959
    %1961 = vdwg.mxu0
    %v1962 = vmul.f32 %v1909, 0.35355338
    %v1963 = vmul.f32 %v1912, 0.35355338
    %1966 = vrot.lane.b32.xlu0 %v1962, 120
    %v1967 = vpop.permute.xlu0 %1966
    %1968 = vrot.lane.b32.xlu0 %v1963, 120
    %v1969 = vpop.permute.xlu0 %1968
    %1970 = vrot.lane.b32.xlu0 %v1962, 112
    %v1971 = vpop.permute.xlu0 %1970
    %1972 = vrot.lane.b32.xlu0 %v1963, 112
    %v1973 = vpop.permute.xlu0 %1972
    %1974 = vrot.lane.b32.xlu0 %v1962, 104
    %v1975 = vpop.permute.xlu0 %1974
    %1976 = vrot.lane.b32.xlu0 %v1963, 104
    %v1977 = vpop.permute.xlu0 %1976
    %1980 = vrot.lane.b32.xlu0 %v1909, 120
    %v1981 = vpop.permute.xlu0 %1980
    %1982 = vrot.lane.b32.xlu0 %v1912, 120
    %v1983 = vpop.permute.xlu0 %1982
    %1984 = vrot.lane.b32.xlu0 %v1909, 112
    %v1985 = vpop.permute.xlu0 %1984
    %1986 = vrot.lane.b32.xlu0 %v1912, 112
    %v1987 = vpop.permute.xlu0 %1986
    %1988 = vrot.lane.b32.xlu0 %v1909, 104
    %v1989 = vpop.permute.xlu0 %1988
    %1990 = vrot.lane.b32.xlu0 %v1912, 104
    %v1991 = vpop.permute.xlu0 %1990
    %1994 = vrot.lane.b32.xlu0 %v1957, 120
    %v1995 = vpop.permute.xlu0 %1994
    %1996 = vrot.lane.b32.xlu0 %v1960, 120
    %v1997 = vpop.permute.xlu0 %1996
    %2000 = vrot.lane.b32.xlu0 %v1957, 112
    %v2001 = vpop.permute.xlu0 %2000
    %2002 = vrot.lane.b32.xlu0 %v1960, 112
    %v2003 = vpop.permute.xlu0 %2002
    %2006 = vrot.lane.b32.xlu0 %v1957, 104
    %v2007 = vpop.permute.xlu0 %2006
    %2008 = vrot.lane.b32.xlu0 %v1960, 104
    %v2009 = vpop.permute.xlu0 %2008
    %2012 = vrot.lane.b32.xlu0 %v1909, 96
    %v2013 = vpop.permute.xlu0 %2012
    %2014 = vrot.lane.b32.xlu0 %v1912, 96
    %v2015 = vpop.permute.xlu0 %2014
    %v2016 = vsel %vm349, %v1962, 0
    %v2018 = vsel %vm349, %v1963, 0
    %v2020 = vsel %vm349, %v2013, 0
    %v2022 = vsel %vm349, %v2015, 0
    %2024 = vmatpush.xpose.msra.mxu0 0.0
    %2025 = vmatpush.xpose.msra.mxu0 0.0
    %2026 = vmatpush.xpose.msra.mxu0 0.0
    %2027 = vmatpush.xpose.msra.mxu0 0.0
    %2028 = vmatpush.xpose.msra.mxu0 0.0
    %2029 = vmatpush.xpose.msra.mxu0 0.0
    %2030 = vmatpush.xpose.msra.mxu0 0.0
    %2031 = vmatpush.xpose.msra.mxu0 0.0
    %2032 = vmatpush.xpose.msra.mxu0 0.0
    %2033 = vmatpush.xpose.msra.mxu0 0.0
    %2034 = vmatpush.xpose.msra.mxu0 0.0
    %2035 = vmatpush.xpose.msra.mxu0 0.0
    %2036 = vmatpush.xpose.msra.mxu0 0.0
    %2037 = vmatpush.xpose.msra.mxu0 0.0
    %2038 = vmatpush.xpose.msra.mxu0 %v2022
    %2039 = vmatpush.xpose.msra.mxu0 %v2020
    %2040 = vmatmul.f32.gmra.mxu0 %v2016
    %v2041 = vpop.f32.mrf.mxu0
    %v2042 = vadd.f32 %v185, %v2041
    %2043 = vmatmul.f32.gmra.mxu0 %v2018
    %v2044 = vpop.f32.mrf.mxu0
    %v2045 = vadd.f32 %v186, %v2044
    %2046 = vdwg.mxu0
    %2047 = vrot.lane.b32.xlu0 %v1981, 96
    %v2048 = vpop.permute.xlu0 %2047
    %2049 = vrot.lane.b32.xlu0 %v1983, 96
    %v2050 = vpop.permute.xlu0 %2049
    %v2051 = vsel %vm349, %v1967, 0
    %v2053 = vsel %vm349, %v1969, 0
    %v2055 = vsel %vm349, %v2048, 0
    %v2057 = vsel %vm349, %v2050, 0
    %2059 = vmatpush.xpose.msra.mxu0 0.0
    %2060 = vmatpush.xpose.msra.mxu0 0.0
    %2061 = vmatpush.xpose.msra.mxu0 0.0
    %2062 = vmatpush.xpose.msra.mxu0 0.0
    %2063 = vmatpush.xpose.msra.mxu0 0.0
    %2064 = vmatpush.xpose.msra.mxu0 0.0
    %2065 = vmatpush.xpose.msra.mxu0 0.0
    %2066 = vmatpush.xpose.msra.mxu0 0.0
    %2067 = vmatpush.xpose.msra.mxu0 0.0
    %2068 = vmatpush.xpose.msra.mxu0 0.0
    %2069 = vmatpush.xpose.msra.mxu0 0.0
    %2070 = vmatpush.xpose.msra.mxu0 0.0
    %2071 = vmatpush.xpose.msra.mxu0 0.0
    %2072 = vmatpush.xpose.msra.mxu0 0.0
    %2073 = vmatpush.xpose.msra.mxu0 %v2057
    %2074 = vmatpush.xpose.msra.mxu0 %v2055
    %2075 = vmatmul.f32.gmra.mxu0 %v2051
    %v2076 = vpop.f32.mrf.mxu0
    %v2077 = vadd.f32 %v185, %v2076
    %2078 = vmatmul.f32.gmra.mxu0 %v2053
    %v2079 = vpop.f32.mrf.mxu0
    %v2080 = vadd.f32 %v186, %v2079
    %2081 = vdwg.mxu0
    %2082 = vrot.lane.b32.xlu0 %v1985, 96
    %v2083 = vpop.permute.xlu0 %2082
    %2084 = vrot.lane.b32.xlu0 %v1987, 96
    %v2085 = vpop.permute.xlu0 %2084
    %v2086 = vsel %vm349, %v1971, 0
    %v2088 = vsel %vm349, %v1973, 0
    %v2090 = vsel %vm349, %v2083, 0
    %v2092 = vsel %vm349, %v2085, 0
    %2094 = vmatpush.xpose.msra.mxu0 0.0
    %2095 = vmatpush.xpose.msra.mxu0 0.0
    %2096 = vmatpush.xpose.msra.mxu0 0.0
    %2097 = vmatpush.xpose.msra.mxu0 0.0
    %2098 = vmatpush.xpose.msra.mxu0 0.0
    %2099 = vmatpush.xpose.msra.mxu0 0.0
    %2100 = vmatpush.xpose.msra.mxu0 0.0
    %2101 = vmatpush.xpose.msra.mxu0 0.0
    %2102 = vmatpush.xpose.msra.mxu0 0.0
    %2103 = vmatpush.xpose.msra.mxu0 0.0
    %2104 = vmatpush.xpose.msra.mxu0 0.0
    %2105 = vmatpush.xpose.msra.mxu0 0.0
    %2106 = vmatpush.xpose.msra.mxu0 0.0
    %2107 = vmatpush.xpose.msra.mxu0 0.0
    %2108 = vmatpush.xpose.msra.mxu0 %v2092
    %2109 = vmatpush.xpose.msra.mxu0 %v2090
    %2110 = vmatmul.f32.gmra.mxu0 %v2086
    %v2111 = vpop.f32.mrf.mxu0
    %v2112 = vadd.f32 %v185, %v2111
    %2113 = vmatmul.f32.gmra.mxu0 %v2088
    %v2114 = vpop.f32.mrf.mxu0
    %v2115 = vadd.f32 %v186, %v2114
    %2116 = vdwg.mxu0
    %2117 = vrot.lane.b32.xlu0 %v1989, 96
    %v2118 = vpop.permute.xlu0 %2117
    %2119 = vrot.lane.b32.xlu0 %v1991, 96
    %v2120 = vpop.permute.xlu0 %2119
    %v2121 = vsel %vm349, %v1975, 0
    %v2123 = vsel %vm349, %v1977, 0
    %v2125 = vsel %vm349, %v2118, 0
    %v2127 = vsel %vm349, %v2120, 0
    %2129 = vmatpush.xpose.msra.mxu0 0.0
    %2130 = vmatpush.xpose.msra.mxu0 0.0
    %2131 = vmatpush.xpose.msra.mxu0 0.0
    %2132 = vmatpush.xpose.msra.mxu0 0.0
    %2133 = vmatpush.xpose.msra.mxu0 0.0
    %2134 = vmatpush.xpose.msra.mxu0 0.0
    %2135 = vmatpush.xpose.msra.mxu0 0.0
    %2136 = vmatpush.xpose.msra.mxu0 0.0
    %2137 = vmatpush.xpose.msra.mxu0 0.0
    %2138 = vmatpush.xpose.msra.mxu0 0.0
    %2139 = vmatpush.xpose.msra.mxu0 0.0
    %2140 = vmatpush.xpose.msra.mxu0 0.0
    %2141 = vmatpush.xpose.msra.mxu0 0.0
    %2142 = vmatpush.xpose.msra.mxu0 0.0
    %2143 = vmatpush.xpose.msra.mxu0 %v2127
    %2144 = vmatpush.xpose.msra.mxu0 %v2125
    %2145 = vmatmul.f32.gmra.mxu0 %v2121
    %v2146 = vpop.f32.mrf.mxu0
    %v2147 = vadd.f32 %v185, %v2146
    %2148 = vmatmul.f32.gmra.mxu0 %v2123
    %v2149 = vpop.f32.mrf.mxu0
    %v2150 = vadd.f32 %v186, %v2149
    %2151 = vdwg.mxu0
    %v2152 = vsel %vm486, %v2042, -inf
    %2153 = vmax.xlane.f32.xlu0 %v2152
    %v2154 = vpop.xlane.xlu0 %2153
    %v2155 = vsel %vm486, %v2045, -inf
    %2156 = vmax.xlane.f32.xlu0 %v2155
    %v2157 = vpop.xlane.xlu0 %2156
    %v2158 = vsel %vm486, %v2077, -inf
    %2159 = vmax.xlane.f32.xlu0 %v2158
    %v2160 = vpop.xlane.xlu0 %2159
    %v2161 = vsel %vm486, %v2080, -inf
    %2162 = vmax.xlane.f32.xlu0 %v2161
    %v2163 = vpop.xlane.xlu0 %2162
    %v2164 = vsel %vm486, %v2112, -inf
    %2165 = vmax.xlane.f32.xlu0 %v2164
    %v2166 = vpop.xlane.xlu0 %2165
    %v2167 = vsel %vm486, %v2115, -inf
    %2168 = vmax.xlane.f32.xlu0 %v2167
    %v2169 = vpop.xlane.xlu0 %2168
    %v2170 = vsel %vm486, %v2147, -inf
    %2171 = vmax.xlane.f32.xlu0 %v2170
    %v2172 = vpop.xlane.xlu0 %2171
    %v2173 = vsel %vm486, %v2150, -inf
    %2174 = vmax.xlane.f32.xlu0 %v2173
    %v2175 = vpop.xlane.xlu0 %2174
    %v2176 = vsub.f32 %v2042, %v2154
    %v2177 = vsub.f32 %v2045, %v2157
    %v2178 = vsub.f32 %v2077, %v2160
    %v2179 = vsub.f32 %v2080, %v2163
    %v2180 = vsub.f32 %v2112, %v2166
    %v2181 = vsub.f32 %v2115, %v2169
    %v2182 = vsub.f32 %v2147, %v2172
    %v2183 = vsub.f32 %v2150, %v2175
    %v2184 = vmul.f32 %v2176, 1.442695
    %v2185 = vpow.pop %v2184
    %v2186 = vmul.f32 %v2177, 1.442695
    %v2187 = vpow.pop %v2186
    %v2188 = vmul.f32 %v2178, 1.442695
    %v2189 = vpow.pop %v2188
    %v2190 = vmul.f32 %v2179, 1.442695
    %v2191 = vpow.pop %v2190
    %v2192 = vmul.f32 %v2180, 1.442695
    %v2193 = vpow.pop %v2192
    %v2194 = vmul.f32 %v2181, 1.442695
    %v2195 = vpow.pop %v2194
    %v2196 = vmul.f32 %v2182, 1.442695
    %v2197 = vpow.pop %v2196
    %v2198 = vmul.f32 %v2183, 1.442695
    %v2199 = vpow.pop %v2198
    %v2200 = vsel %vm486, %v2185, 0.0
    %2201 = vadd.xlane.f32.xlu0 %v2200
    %v2202 = vpop.xlane.xlu0 %2201
    %v2203 = vsel %vm486, %v2187, 0.0
    %2204 = vadd.xlane.f32.xlu0 %v2203
    %v2205 = vpop.xlane.xlu0 %2204
    %v2206 = vsel %vm486, %v2189, 0.0
    %2207 = vadd.xlane.f32.xlu0 %v2206
    %v2208 = vpop.xlane.xlu0 %2207
    %v2209 = vsel %vm486, %v2191, 0.0
    %2210 = vadd.xlane.f32.xlu0 %v2209
    %v2211 = vpop.xlane.xlu0 %2210
    %v2212 = vsel %vm486, %v2193, 0.0
    %2213 = vadd.xlane.f32.xlu0 %v2212
    %v2214 = vpop.xlane.xlu0 %2213
    %v2215 = vsel %vm486, %v2195, 0.0
    %2216 = vadd.xlane.f32.xlu0 %v2215
    %v2217 = vpop.xlane.xlu0 %2216
    %v2218 = vsel %vm486, %v2197, 0.0
    %2219 = vadd.xlane.f32.xlu0 %v2218
    %v2220 = vpop.xlane.xlu0 %2219
    %v2221 = vsel %vm486, %v2199, 0.0
    %2222 = vadd.xlane.f32.xlu0 %v2221
    %v2223 = vpop.xlane.xlu0 %2222
    %v2224 = vrcp.pop %v2202
    %v2225 = vmul.f32 %v2202, %v2224
    %v2226 = vsub.f32 1.0, %v2225
    %v2227 = vmul.f32 %v2224, %v2226
    %v2228 = vadd.f32 %v2224, %v2227
    %vm2229 = vweird.f32 %v2202
    %vm2230 = vweird.f32 %v2224
    %vm2231 = vmor %vm2229, %vm2230
    %v2232 = vsel %vm2231, %v2224, %v2228
    %v2233 = vand.u32 2147483647, %v2202
    %vm2234 = vcmp.eq.f32.partialorder %v2233, 8.507059e+37
    %v2235 = vand.u32 %v2202, 2147483648
    %v2236 = vor.u32 1.1754944e-38, %v2235
    %v2237 = vsel %vm2234, %v2236, %v2232
    %v2238 = vmul.f32 %v2185, %v2237
    %v2239 = vrcp.pop %v2205
    %v2240 = vmul.f32 %v2205, %v2239
    %v2241 = vsub.f32 1.0, %v2240
    %v2242 = vmul.f32 %v2239, %v2241
    %v2243 = vadd.f32 %v2239, %v2242
    %vm2244 = vweird.f32 %v2205
    %vm2245 = vweird.f32 %v2239
    %vm2246 = vmor %vm2244, %vm2245
    %v2247 = vsel %vm2246, %v2239, %v2243
    %v2248 = vand.u32 2147483647, %v2205
    %vm2249 = vcmp.eq.f32.partialorder %v2248, 8.507059e+37
    %v2250 = vand.u32 %v2205, 2147483648
    %v2251 = vor.u32 1.1754944e-38, %v2250
    %v2252 = vsel %vm2249, %v2251, %v2247
    %v2253 = vmul.f32 %v2187, %v2252
    %v2254 = vrcp.pop %v2208
    %v2255 = vmul.f32 %v2208, %v2254
    %v2256 = vsub.f32 1.0, %v2255
    %v2257 = vmul.f32 %v2254, %v2256
    %v2258 = vadd.f32 %v2254, %v2257
    %vm2259 = vweird.f32 %v2208
    %vm2260 = vweird.f32 %v2254
    %vm2261 = vmor %vm2259, %vm2260
    %v2262 = vsel %vm2261, %v2254, %v2258
    %v2263 = vand.u32 2147483647, %v2208
    %vm2264 = vcmp.eq.f32.partialorder %v2263, 8.507059e+37
    %v2265 = vand.u32 %v2208, 2147483648
    %v2266 = vor.u32 1.1754944e-38, %v2265
    %v2267 = vsel %vm2264, %v2266, %v2262
    %v2268 = vmul.f32 %v2189, %v2267
    %v2269 = vrcp.pop %v2211
    %v2270 = vmul.f32 %v2211, %v2269
    %v2271 = vsub.f32 1.0, %v2270
    %v2272 = vmul.f32 %v2269, %v2271
    %v2273 = vadd.f32 %v2269, %v2272
    %vm2274 = vweird.f32 %v2211
    %vm2275 = vweird.f32 %v2269
    %vm2276 = vmor %vm2274, %vm2275
    %v2277 = vsel %vm2276, %v2269, %v2273
    %v2278 = vand.u32 2147483647, %v2211
    %vm2279 = vcmp.eq.f32.partialorder %v2278, 8.507059e+37
    %v2280 = vand.u32 %v2211, 2147483648
    %v2281 = vor.u32 1.1754944e-38, %v2280
    %v2282 = vsel %vm2279, %v2281, %v2277
    %v2283 = vmul.f32 %v2191, %v2282
    %v2284 = vrcp.pop %v2214
    %v2285 = vmul.f32 %v2214, %v2284
    %v2286 = vsub.f32 1.0, %v2285
    %v2287 = vmul.f32 %v2284, %v2286
    %v2288 = vadd.f32 %v2284, %v2287
    %vm2289 = vweird.f32 %v2214
    %vm2290 = vweird.f32 %v2284
    %vm2291 = vmor %vm2289, %vm2290
    %v2292 = vsel %vm2291, %v2284, %v2288
    %v2293 = vand.u32 2147483647, %v2214
    %vm2294 = vcmp.eq.f32.partialorder %v2293, 8.507059e+37
    %v2295 = vand.u32 %v2214, 2147483648
    %v2296 = vor.u32 1.1754944e-38, %v2295
    %v2297 = vsel %vm2294, %v2296, %v2292
    %v2298 = vmul.f32 %v2193, %v2297
    %v2299 = vrcp.pop %v2217
    %v2300 = vmul.f32 %v2217, %v2299
    %v2301 = vsub.f32 1.0, %v2300
    %v2302 = vmul.f32 %v2299, %v2301
    %v2303 = vadd.f32 %v2299, %v2302
    %vm2304 = vweird.f32 %v2217
    %vm2305 = vweird.f32 %v2299
    %vm2306 = vmor %vm2304, %vm2305
    %v2307 = vsel %vm2306, %v2299, %v2303
    %v2308 = vand.u32 2147483647, %v2217
    %vm2309 = vcmp.eq.f32.partialorder %v2308, 8.507059e+37
    %v2310 = vand.u32 %v2217, 2147483648
    %v2311 = vor.u32 1.1754944e-38, %v2310
    %v2312 = vsel %vm2309, %v2311, %v2307
    %v2313 = vmul.f32 %v2195, %v2312
    %v2314 = vrcp.pop %v2220
    %v2315 = vmul.f32 %v2220, %v2314
    %v2316 = vsub.f32 1.0, %v2315
    %v2317 = vmul.f32 %v2314, %v2316
    %v2318 = vadd.f32 %v2314, %v2317
    %vm2319 = vweird.f32 %v2220
    %vm2320 = vweird.f32 %v2314
    %vm2321 = vmor %vm2319, %vm2320
    %v2322 = vsel %vm2321, %v2314, %v2318
    %v2323 = vand.u32 2147483647, %v2220
    %vm2324 = vcmp.eq.f32.partialorder %v2323, 8.507059e+37
    %v2325 = vand.u32 %v2220, 2147483648
    %v2326 = vor.u32 1.1754944e-38, %v2325
    %v2327 = vsel %vm2324, %v2326, %v2322
    %v2328 = vmul.f32 %v2197, %v2327
    %v2329 = vrcp.pop %v2223
    %v2330 = vmul.f32 %v2223, %v2329
    %v2331 = vsub.f32 1.0, %v2330
    %v2332 = vmul.f32 %v2329, %v2331
    %v2333 = vadd.f32 %v2329, %v2332
    %vm2334 = vweird.f32 %v2223
    %vm2335 = vweird.f32 %v2329
    %vm2336 = vmor %vm2334, %vm2335
    %v2337 = vsel %vm2336, %v2329, %v2333
    %v2338 = vand.u32 2147483647, %v2223
    %vm2339 = vcmp.eq.f32.partialorder %v2338, 8.507059e+37
    %v2340 = vand.u32 %v2223, 2147483648
    %v2341 = vor.u32 1.1754944e-38, %v2340
    %v2342 = vsel %vm2339, %v2341, %v2337
    %v2343 = vmul.f32 %v2199, %v2342
    %v2345 = vsel %vm486, %v2238, 0
    %v2348 = vsel %vm486, %v2253, 0
    %2350 = vmatpush.msra.mxu0 0.0
    %2351 = vmatpush.msra.mxu0 0.0
    %2352 = vmatpush.msra.mxu0 0.0
    %2353 = vmatpush.msra.mxu0 0.0
    %2354 = vmatpush.msra.mxu0 0.0
    %2355 = vmatpush.msra.mxu0 0.0
    %2356 = vmatpush.msra.mxu0 0.0
    %2357 = vmatpush.msra.mxu0 0.0
    %2358 = vmatpush.msra.mxu0 0.0
    %2359 = vmatpush.msra.mxu0 0.0
    %2360 = vmatpush.msra.mxu0 0.0
    %2361 = vmatpush.msra.mxu0 0.0
    %2362 = vmatpush.msra.mxu0 0.0
    %2363 = vmatpush.msra.mxu0 0.0
    %2364 = vmatpush.msra.mxu0 %v1960
    %2365 = vmatpush.msra.mxu0 %v1957
    %2366 = vmatmul.f32.gmra.mxu0 %v2345
    %v2367 = vpop.f32.mrf.mxu0
    %v2368 = vadd.f32 0.0, %v2367
    %2369 = vmatmul.f32.gmra.mxu0 %v2348
    %v2370 = vpop.f32.mrf.mxu0
    %v2371 = vadd.f32 0.0, %v2370
    %2372 = vdwg.mxu0
    %v2374 = vsel %vm486, %v2268, 0
    %v2377 = vsel %vm486, %v2283, 0
    %2379 = vmatpush.msra.mxu0 0.0
    %2380 = vmatpush.msra.mxu0 0.0
    %2381 = vmatpush.msra.mxu0 0.0
    %2382 = vmatpush.msra.mxu0 0.0
    %2383 = vmatpush.msra.mxu0 0.0
    %2384 = vmatpush.msra.mxu0 0.0
    %2385 = vmatpush.msra.mxu0 0.0
    %2386 = vmatpush.msra.mxu0 0.0
    %2387 = vmatpush.msra.mxu0 0.0
    %2388 = vmatpush.msra.mxu0 0.0
    %2389 = vmatpush.msra.mxu0 0.0
    %2390 = vmatpush.msra.mxu0 0.0
    %2391 = vmatpush.msra.mxu0 0.0
    %2392 = vmatpush.msra.mxu0 0.0
    %2393 = vmatpush.msra.mxu0 %v1997
    %2394 = vmatpush.msra.mxu0 %v1995
    %2395 = vmatmul.f32.gmra.mxu0 %v2374
    %v2396 = vpop.f32.mrf.mxu0
    %v2397 = vadd.f32 0.0, %v2396
    %2398 = vmatmul.f32.gmra.mxu0 %v2377
    %v2399 = vpop.f32.mrf.mxu0
    %v2400 = vadd.f32 0.0, %v2399
    %2401 = vdwg.mxu0
    %v2403 = vsel %vm486, %v2298, 0
    %v2406 = vsel %vm486, %v2313, 0
    %2408 = vmatpush.msra.mxu0 0.0
    %2409 = vmatpush.msra.mxu0 0.0
    %2410 = vmatpush.msra.mxu0 0.0
    %2411 = vmatpush.msra.mxu0 0.0
    %2412 = vmatpush.msra.mxu0 0.0
    %2413 = vmatpush.msra.mxu0 0.0
    %2414 = vmatpush.msra.mxu0 0.0
    %2415 = vmatpush.msra.mxu0 0.0
    %2416 = vmatpush.msra.mxu0 0.0
    %2417 = vmatpush.msra.mxu0 0.0
    %2418 = vmatpush.msra.mxu0 0.0
    %2419 = vmatpush.msra.mxu0 0.0
    %2420 = vmatpush.msra.mxu0 0.0
    %2421 = vmatpush.msra.mxu0 0.0
    %2422 = vmatpush.msra.mxu0 %v2003
    %2423 = vmatpush.msra.mxu0 %v2001
    %2424 = vmatmul.f32.gmra.mxu0 %v2403
    %v2425 = vpop.f32.mrf.mxu0
    %v2426 = vadd.f32 0.0, %v2425
    %2427 = vmatmul.f32.gmra.mxu0 %v2406
    %v2428 = vpop.f32.mrf.mxu0
    %v2429 = vadd.f32 0.0, %v2428
    %2430 = vdwg.mxu0
    %v2432 = vsel %vm486, %v2328, 0
    %v2435 = vsel %vm486, %v2343, 0
    %2437 = vmatpush.msra.mxu0 0.0
    %2438 = vmatpush.msra.mxu0 0.0
    %2439 = vmatpush.msra.mxu0 0.0
    %2440 = vmatpush.msra.mxu0 0.0
    %2441 = vmatpush.msra.mxu0 0.0
    %2442 = vmatpush.msra.mxu0 0.0
    %2443 = vmatpush.msra.mxu0 0.0
    %2444 = vmatpush.msra.mxu0 0.0
    %2445 = vmatpush.msra.mxu0 0.0
    %2446 = vmatpush.msra.mxu0 0.0
    %2447 = vmatpush.msra.mxu0 0.0
    %2448 = vmatpush.msra.mxu0 0.0
    %2449 = vmatpush.msra.mxu0 0.0
    %2450 = vmatpush.msra.mxu0 0.0
    %2451 = vmatpush.msra.mxu0 %v2009
    %2452 = vmatpush.msra.mxu0 %v2007
    %2453 = vmatmul.f32.gmra.mxu0 %v2432
    %v2454 = vpop.f32.mrf.mxu0
    %v2455 = vadd.f32 0.0, %v2454
    %2456 = vmatmul.f32.gmra.mxu0 %v2435
    %v2457 = vpop.f32.mrf.mxu0
    %v2458 = vadd.f32 0.0, %v2457
    %2459 = vdwg.mxu0
    %2462 = vrot.lane.b32.xlu0 %v2397, 8
    %v2463 = vpop.permute.xlu0 %2462
    %2464 = vrot.lane.b32.xlu0 %v2400, 8
    %v2465 = vpop.permute.xlu0 %2464
    %2470 = vrot.lane.b32.xlu0 %v2426, 16
    %v2471 = vpop.permute.xlu0 %2470
    %2472 = vrot.lane.b32.xlu0 %v2429, 16
    %v2473 = vpop.permute.xlu0 %2472
    %2478 = vrot.lane.b32.xlu0 %v2455, 24
    %v2479 = vpop.permute.xlu0 %2478
    %2480 = vrot.lane.b32.xlu0 %v2458, 24
    %v2481 = vpop.permute.xlu0 %2480
    %v2484 = vsel %vm349, %v2368, %v2463
    %v2485 = vsel %vm349, %v2371, %v2465
    %v2486 = vsel %vm486, %v2484, %v2471
    %v2487 = vsel %vm486, %v2485, %v2473
    %v2488 = vsel %vm823, %v2486, %v2479
    %v2489 = vsel %vm823, %v2487, %v2481
    %s2490 = scalar_lea.vmem [#allocation13], 64
    %v2491 = vld [vmem:[%s2490] sm:$0xff]
    %v2492 = vld [vmem:[%s2490 + $0x8] sm:$0xff]
    %v2493 = vld [vmem:[%s2490 + $0x10] sm:$0xff]
    %v2494 = vld [vmem:[%s2490 + $0x18] sm:$0xff]
    %v2496 = vperm.slane %v198, 0
    %v2499 = vsel %vm217, %v2488, 0
    %v2502 = vsel %vm217, %v2489, 0
    %2504 = vmatpush.msra.mxu0 0.0
    %2505 = vmatpush.msra.mxu0 0.0
    %2506 = vmatpush.msra.mxu0 0.0
    %2507 = vmatpush.msra.mxu0 0.0
    %2508 = vmatpush.msra.mxu0 0.0
    %2509 = vmatpush.msra.mxu0 0.0
    %2510 = vmatpush.msra.mxu0 0.0
    %2511 = vmatpush.msra.mxu0 0.0
    %2512 = vmatpush.msra.mxu0 0.0
    %2513 = vmatpush.msra.mxu0 0.0
    %2514 = vmatpush.msra.mxu0 0.0
    %2515 = vmatpush.msra.mxu0 0.0
    %2516 = vmatpush.msra.mxu0 %v2494
    %2517 = vmatpush.msra.mxu0 %v2493
    %2518 = vmatpush.msra.mxu0 %v2492
    %2519 = vmatpush.msra.mxu0 %v2491
    %2520 = vmatmul.f32.gmra.mxu0 %v2499
    %v2521 = vpop.f32.mrf.mxu0
    %v2522 = vadd.f32 %v2496, %v2521
    %2523 = vmatmul.f32.gmra.mxu0 %v2502
    %v2524 = vpop.f32.mrf.mxu0
    %v2525 = vadd.f32 %v2496, %v2524
    %2526 = vdwg.mxu0
    %v2527 = vadd.f32 %v1871, %v2522
    %v2528 = vadd.f32 %v1872, %v2525
    %v2529 = vsel %vm217, %v2527, 0.0
    %2530 = vadd.xlane.f32.xlu0 %v2529
    %v2531 = vpop.xlane.xlu0 %2530
    %v2532 = vsel %vm217, %v2528, 0.0
    %2533 = vadd.xlane.f32.xlu0 %v2532
    %v2534 = vpop.xlane.xlu0 %2533
    %v2535 = vmul.f32 %v2531, %v876
    %v2536 = vmul.f32 %v2534, %v876
    %v2537 = vsub.f32 %v2527, %v2535
    %v2538 = vsub.f32 %v2528, %v2536
    %v2539 = vmul.f32 %v2537, %v2537
    %v2540 = vmul.f32 %v2538, %v2538
    %v2541 = vsel %vm217, %v2539, 0.0
    %2542 = vadd.xlane.f32.xlu0 %v2541
    %v2543 = vpop.xlane.xlu0 %2542
    %v2544 = vsel %vm217, %v2540, 0.0
    %2545 = vadd.xlane.f32.xlu0 %v2544
    %v2546 = vpop.xlane.xlu0 %2545
    %v2547 = vmul.f32 %v2543, %v876
    %v2548 = vmul.f32 %v2546, %v876
    %v2549 = vadd.f32 %v2547, 1e-05
    %v2550 = vadd.f32 %v2548, 1e-05
    %v2551 = vrsqrt.pop %v2549
    %v2552 = vmul.f32 %v2551, %v2549
    %v2553 = vmul.f32 %v2552, %v2551
    %v2554 = vmul.f32 0.5, %v2553
    %v2555 = vsub.f32 1.5, %v2554
    %v2556 = vmul.f32 %v2551, %v2555
    %vm2557 = vweird.f32 %v2549
    %vm2558 = vweird.f32 %v2551
    %vm2559 = vmor %vm2557, %vm2558
    %v2560 = vsel %vm2559, %v2551, %v2556
    %v2561 = vrsqrt.pop %v2550
    %v2562 = vmul.f32 %v2561, %v2550
    %v2563 = vmul.f32 %v2562, %v2561
    %v2564 = vmul.f32 0.5, %v2563
    %v2565 = vsub.f32 1.5, %v2564
    %v2566 = vmul.f32 %v2561, %v2565
    %vm2567 = vweird.f32 %v2550
    %vm2568 = vweird.f32 %v2561
    %vm2569 = vmor %vm2567, %vm2568
    %v2570 = vsel %vm2569, %v2561, %v2566
    %v2571 = vmul.f32 %v2537, %v2560
    %v2572 = vmul.f32 %v2538, %v2570
    %v2574 = vperm.slane %v201, 0
    %v2576 = vmul.f32 %v2571, %v2574
    %v2577 = vmul.f32 %v2572, %v2574
    %v2579 = vperm.slane %v202, 0
    %v2581 = vadd.f32 %v2576, %v2579
    %v2582 = vadd.f32 %v2577, %v2579
    %s2583 = scalar_lea.vmem %s6, 96
    %v2584 = vld [vmem:[%s2583] sm:$0xff]
    %v2585 = vld [vmem:[%s2583 + $0x8] sm:$0xff]
    %v2586 = vld [vmem:[%s2583 + $0x10] sm:$0xff]
    %v2587 = vld [vmem:[%s2583 + $0x18] sm:$0xff]
    %s2588 = scalar_lea.vmem %s7, 3
    %v2589 = vld [vmem:[%s2588] sm:$0x1]
    %v2590 = vadd.f32 %v2581, %v175
    %v2591 = vadd.f32 %v2582, %v176
    %v2593 = vperm.slane %v2589, 0
    %v2596 = vsel %vm217, %v2590, 0
    %v2599 = vsel %vm217, %v2591, 0
    %2601 = vmatpush.msra.mxu0 0.0
    %2602 = vmatpush.msra.mxu0 0.0
    %2603 = vmatpush.msra.mxu0 0.0
    %2604 = vmatpush.msra.mxu0 0.0
    %2605 = vmatpush.msra.mxu0 0.0
    %2606 = vmatpush.msra.mxu0 0.0
    %2607 = vmatpush.msra.mxu0 0.0
    %2608 = vmatpush.msra.mxu0 0.0
    %2609 = vmatpush.msra.mxu0 0.0
    %2610 = vmatpush.msra.mxu0 0.0
    %2611 = vmatpush.msra.mxu0 0.0
    %2612 = vmatpush.msra.mxu0 0.0
    %2613 = vmatpush.msra.mxu0 %v2587
    %2614 = vmatpush.msra.mxu0 %v2586
    %2615 = vmatpush.msra.mxu0 %v2585
    %2616 = vmatpush.msra.mxu0 %v2584
    %2617 = vmatmul.f32.gmra.mxu0 %v2596
    %v2618 = vpop.f32.mrf.mxu0
    %v2619 = vadd.f32 %v2593, %v2618
    %2620 = vmatmul.f32.gmra.mxu0 %v2599
    %v2621 = vpop.f32.mrf.mxu0
    %v2622 = vadd.f32 %v2593, %v2621
    %2623 = vdwg.mxu0
    %v2624 = vmul.f32 %v2619, 0.35355338
    %v2625 = vmul.f32 %v2622, 0.35355338
    %2630 = vrot.lane.b32.xlu0 %v2584, 96
    %v2631 = vpop.permute.xlu0 %2630
    %2632 = vrot.lane.b32.xlu0 %v2585, 96
    %v2633 = vpop.permute.xlu0 %2632
    %2634 = vrot.lane.b32.xlu0 %v2586, 96
    %v2635 = vpop.permute.xlu0 %2634
    %2636 = vrot.lane.b32.xlu0 %v2587, 96
    %v2637 = vpop.permute.xlu0 %2636
    %2642 = vrot.lane.b32.xlu0 %v2593, 96
    %v2643 = vpop.permute.xlu0 %2642
    %2645 = vmatpush.msra.mxu0 0.0
    %2646 = vmatpush.msra.mxu0 0.0
    %2647 = vmatpush.msra.mxu0 0.0
    %2648 = vmatpush.msra.mxu0 0.0
    %2649 = vmatpush.msra.mxu0 0.0
    %2650 = vmatpush.msra.mxu0 0.0
    %2651 = vmatpush.msra.mxu0 0.0
    %2652 = vmatpush.msra.mxu0 0.0
    %2653 = vmatpush.msra.mxu0 0.0
    %2654 = vmatpush.msra.mxu0 0.0
    %2655 = vmatpush.msra.mxu0 0.0
    %2656 = vmatpush.msra.mxu0 0.0
    %2657 = vmatpush.msra.mxu0 %v2637
    %2658 = vmatpush.msra.mxu0 %v2635
    %2659 = vmatpush.msra.mxu0 %v2633
    %2660 = vmatpush.msra.mxu0 %v2631
    %2661 = vmatmul.f32.gmra.mxu0 %v988
    %v2662 = vpop.f32.mrf.mxu0
    %v2663 = vadd.f32 %v2643, %v2662
    %2664 = vmatmul.f32.gmra.mxu0 %v991
    %v2665 = vpop.f32.mrf.mxu0
    %v2666 = vadd.f32 %v2643, %v2665
    %2667 = vmatmul.f32.gmra.mxu0 %v994
    %v2668 = vpop.f32.mrf.mxu0
    %v2669 = vadd.f32 %v2643, %v2668
    %2670 = vmatmul.f32.gmra.mxu0 %v997
    %v2671 = vpop.f32.mrf.mxu0
    %v2672 = vadd.f32 %v2643, %v2671
    %2673 = vdwg.mxu0
    %2674 = vrot.lane.b32.xlu0 %v2584, 64
    %v2675 = vpop.permute.xlu0 %2674
    %2676 = vrot.lane.b32.xlu0 %v2585, 64
    %v2677 = vpop.permute.xlu0 %2676
    %2678 = vrot.lane.b32.xlu0 %v2586, 64
    %v2679 = vpop.permute.xlu0 %2678
    %2680 = vrot.lane.b32.xlu0 %v2587, 64
    %v2681 = vpop.permute.xlu0 %2680
    %2686 = vrot.lane.b32.xlu0 %v2593, 64
    %v2687 = vpop.permute.xlu0 %2686
    %2689 = vmatpush.msra.mxu0 0.0
    %2690 = vmatpush.msra.mxu0 0.0
    %2691 = vmatpush.msra.mxu0 0.0
    %2692 = vmatpush.msra.mxu0 0.0
    %2693 = vmatpush.msra.mxu0 0.0
    %2694 = vmatpush.msra.mxu0 0.0
    %2695 = vmatpush.msra.mxu0 0.0
    %2696 = vmatpush.msra.mxu0 0.0
    %2697 = vmatpush.msra.mxu0 0.0
    %2698 = vmatpush.msra.mxu0 0.0
    %2699 = vmatpush.msra.mxu0 0.0
    %2700 = vmatpush.msra.mxu0 0.0
    %2701 = vmatpush.msra.mxu0 %v2681
    %2702 = vmatpush.msra.mxu0 %v2679
    %2703 = vmatpush.msra.mxu0 %v2677
    %2704 = vmatpush.msra.mxu0 %v2675
    %2705 = vmatmul.f32.gmra.mxu0 %v1044
    %v2706 = vpop.f32.mrf.mxu0
    %v2707 = vadd.f32 %v2687, %v2706
    %2708 = vmatmul.f32.gmra.mxu0 %v1047
    %v2709 = vpop.f32.mrf.mxu0
    %v2710 = vadd.f32 %v2687, %v2709
    %2711 = vmatmul.f32.gmra.mxu0 %v1050
    %v2712 = vpop.f32.mrf.mxu0
    %v2713 = vadd.f32 %v2687, %v2712
    %2714 = vmatmul.f32.gmra.mxu0 %v1053
    %v2715 = vpop.f32.mrf.mxu0
    %v2716 = vadd.f32 %v2687, %v2715
    %2717 = vdwg.mxu0
    %2720 = vrot.lane.b32.xlu0 %v2624, 120
    %v2721 = vpop.permute.xlu0 %2720
    %2722 = vrot.lane.b32.xlu0 %v2625, 120
    %v2723 = vpop.permute.xlu0 %2722
    %2724 = vrot.lane.b32.xlu0 %v2624, 112
    %v2725 = vpop.permute.xlu0 %2724
    %2726 = vrot.lane.b32.xlu0 %v2625, 112
    %v2727 = vpop.permute.xlu0 %2726
    %2728 = vrot.lane.b32.xlu0 %v2624, 104
    %v2729 = vpop.permute.xlu0 %2728
    %2730 = vrot.lane.b32.xlu0 %v2625, 104
    %v2731 = vpop.permute.xlu0 %2730
    %2736 = vrot.lane.b32.xlu0 %v2663, 120
    %v2737 = vpop.permute.xlu0 %2736
    %2738 = vrot.lane.b32.xlu0 %v2666, 120
    %v2739 = vpop.permute.xlu0 %2738
    %2740 = vrot.lane.b32.xlu0 %v2669, 120
    %v2741 = vpop.permute.xlu0 %2740
    %2742 = vrot.lane.b32.xlu0 %v2672, 120
    %v2743 = vpop.permute.xlu0 %2742
    %2744 = vrot.lane.b32.xlu0 %v2663, 112
    %v2745 = vpop.permute.xlu0 %2744
    %2746 = vrot.lane.b32.xlu0 %v2666, 112
    %v2747 = vpop.permute.xlu0 %2746
    %2748 = vrot.lane.b32.xlu0 %v2669, 112
    %v2749 = vpop.permute.xlu0 %2748
    %2750 = vrot.lane.b32.xlu0 %v2672, 112
    %v2751 = vpop.permute.xlu0 %2750
    %2752 = vrot.lane.b32.xlu0 %v2663, 104
    %v2753 = vpop.permute.xlu0 %2752
    %2754 = vrot.lane.b32.xlu0 %v2666, 104
    %v2755 = vpop.permute.xlu0 %2754
    %2756 = vrot.lane.b32.xlu0 %v2669, 104
    %v2757 = vpop.permute.xlu0 %2756
    %2758 = vrot.lane.b32.xlu0 %v2672, 104
    %v2759 = vpop.permute.xlu0 %2758
    %2764 = vrot.lane.b32.xlu0 %v2707, 120
    %v2765 = vpop.permute.xlu0 %2764
    %2766 = vrot.lane.b32.xlu0 %v2710, 120
    %v2767 = vpop.permute.xlu0 %2766
    %2768 = vrot.lane.b32.xlu0 %v2713, 120
    %v2769 = vpop.permute.xlu0 %2768
    %2770 = vrot.lane.b32.xlu0 %v2716, 120
    %v2771 = vpop.permute.xlu0 %2770
    %2776 = vrot.lane.b32.xlu0 %v2707, 112
    %v2777 = vpop.permute.xlu0 %2776
    %2778 = vrot.lane.b32.xlu0 %v2710, 112
    %v2779 = vpop.permute.xlu0 %2778
    %2780 = vrot.lane.b32.xlu0 %v2713, 112
    %v2781 = vpop.permute.xlu0 %2780
    %2782 = vrot.lane.b32.xlu0 %v2716, 112
    %v2783 = vpop.permute.xlu0 %2782
    %2788 = vrot.lane.b32.xlu0 %v2707, 104
    %v2789 = vpop.permute.xlu0 %2788
    %2790 = vrot.lane.b32.xlu0 %v2710, 104
    %v2791 = vpop.permute.xlu0 %2790
    %2792 = vrot.lane.b32.xlu0 %v2713, 104
    %v2793 = vpop.permute.xlu0 %2792
    %2794 = vrot.lane.b32.xlu0 %v2716, 104
    %v2795 = vpop.permute.xlu0 %2794
    %v2800 = vsel %vm349, %v2624, 0
    %v2802 = vsel %vm349, %v2625, 0
    %v2804 = vsel %vm349, %v2663, 0
    %v2806 = vsel %vm349, %v2666, 0
    %v2808 = vsel %vm349, %v2669, 0
    %v2810 = vsel %vm349, %v2672, 0
    %2812 = vmatpush.xpose.msra.mxu0 0.0
    %2813 = vmatpush.xpose.msra.mxu0 0.0
    %2814 = vmatpush.xpose.msra.mxu0 0.0
    %2815 = vmatpush.xpose.msra.mxu0 0.0
    %2816 = vmatpush.xpose.msra.mxu0 0.0
    %2817 = vmatpush.xpose.msra.mxu0 0.0
    %2818 = vmatpush.xpose.msra.mxu0 0.0
    %2819 = vmatpush.xpose.msra.mxu0 0.0
    %2820 = vmatpush.xpose.msra.mxu0 0.0
    %2821 = vmatpush.xpose.msra.mxu0 0.0
    %2822 = vmatpush.xpose.msra.mxu0 0.0
    %2823 = vmatpush.xpose.msra.mxu0 0.0
    %2824 = vmatpush.xpose.msra.mxu0 %v2810
    %2825 = vmatpush.xpose.msra.mxu0 %v2808
    %2826 = vmatpush.xpose.msra.mxu0 %v2806
    %2827 = vmatpush.xpose.msra.mxu0 %v2804
    %2828 = vmatmul.f32.gmra.mxu0 %v2800
    %v2829 = vpop.f32.mrf.mxu0
    %v2830 = vadd.f32 %v187, %v2829
    %2831 = vmatmul.f32.gmra.mxu0 %v2802
    %v2832 = vpop.f32.mrf.mxu0
    %v2833 = vadd.f32 %v188, %v2832
    %2834 = vdwg.mxu0
    %v2835 = vsel %vm349, %v2721, 0
    %v2837 = vsel %vm349, %v2723, 0
    %v2839 = vsel %vm349, %v2737, 0
    %v2841 = vsel %vm349, %v2739, 0
    %v2843 = vsel %vm349, %v2741, 0
    %v2845 = vsel %vm349, %v2743, 0
    %2847 = vmatpush.xpose.msra.mxu0 0.0
    %2848 = vmatpush.xpose.msra.mxu0 0.0
    %2849 = vmatpush.xpose.msra.mxu0 0.0
    %2850 = vmatpush.xpose.msra.mxu0 0.0
    %2851 = vmatpush.xpose.msra.mxu0 0.0
    %2852 = vmatpush.xpose.msra.mxu0 0.0
    %2853 = vmatpush.xpose.msra.mxu0 0.0
    %2854 = vmatpush.xpose.msra.mxu0 0.0
    %2855 = vmatpush.xpose.msra.mxu0 0.0
    %2856 = vmatpush.xpose.msra.mxu0 0.0
    %2857 = vmatpush.xpose.msra.mxu0 0.0
    %2858 = vmatpush.xpose.msra.mxu0 0.0
    %2859 = vmatpush.xpose.msra.mxu0 %v2845
    %2860 = vmatpush.xpose.msra.mxu0 %v2843
    %2861 = vmatpush.xpose.msra.mxu0 %v2841
    %2862 = vmatpush.xpose.msra.mxu0 %v2839
    %2863 = vmatmul.f32.gmra.mxu0 %v2835
    %v2864 = vpop.f32.mrf.mxu0
    %v2865 = vadd.f32 %v187, %v2864
    %2866 = vmatmul.f32.gmra.mxu0 %v2837
    %v2867 = vpop.f32.mrf.mxu0
    %v2868 = vadd.f32 %v188, %v2867
    %2869 = vdwg.mxu0
    %v2870 = vsel %vm349, %v2725, 0
    %v2872 = vsel %vm349, %v2727, 0
    %v2874 = vsel %vm349, %v2745, 0
    %v2876 = vsel %vm349, %v2747, 0
    %v2878 = vsel %vm349, %v2749, 0
    %v2880 = vsel %vm349, %v2751, 0
    %2882 = vmatpush.xpose.msra.mxu0 0.0
    %2883 = vmatpush.xpose.msra.mxu0 0.0
    %2884 = vmatpush.xpose.msra.mxu0 0.0
    %2885 = vmatpush.xpose.msra.mxu0 0.0
    %2886 = vmatpush.xpose.msra.mxu0 0.0
    %2887 = vmatpush.xpose.msra.mxu0 0.0
    %2888 = vmatpush.xpose.msra.mxu0 0.0
    %2889 = vmatpush.xpose.msra.mxu0 0.0
    %2890 = vmatpush.xpose.msra.mxu0 0.0
    %2891 = vmatpush.xpose.msra.mxu0 0.0
    %2892 = vmatpush.xpose.msra.mxu0 0.0
    %2893 = vmatpush.xpose.msra.mxu0 0.0
    %2894 = vmatpush.xpose.msra.mxu0 %v2880
    %2895 = vmatpush.xpose.msra.mxu0 %v2878
    %2896 = vmatpush.xpose.msra.mxu0 %v2876
    %2897 = vmatpush.xpose.msra.mxu0 %v2874
    %2898 = vmatmul.f32.gmra.mxu0 %v2870
    %v2899 = vpop.f32.mrf.mxu0
    %v2900 = vadd.f32 %v187, %v2899
    %2901 = vmatmul.f32.gmra.mxu0 %v2872
    %v2902 = vpop.f32.mrf.mxu0
    %v2903 = vadd.f32 %v188, %v2902
    %2904 = vdwg.mxu0
    %v2905 = vsel %vm349, %v2729, 0
    %v2907 = vsel %vm349, %v2731, 0
    %v2909 = vsel %vm349, %v2753, 0
    %v2911 = vsel %vm349, %v2755, 0
    %v2913 = vsel %vm349, %v2757, 0
    %v2915 = vsel %vm349, %v2759, 0
    %2917 = vmatpush.xpose.msra.mxu0 0.0
    %2918 = vmatpush.xpose.msra.mxu0 0.0
    %2919 = vmatpush.xpose.msra.mxu0 0.0
    %2920 = vmatpush.xpose.msra.mxu0 0.0
    %2921 = vmatpush.xpose.msra.mxu0 0.0
    %2922 = vmatpush.xpose.msra.mxu0 0.0
    %2923 = vmatpush.xpose.msra.mxu0 0.0
    %2924 = vmatpush.xpose.msra.mxu0 0.0
    %2925 = vmatpush.xpose.msra.mxu0 0.0
    %2926 = vmatpush.xpose.msra.mxu0 0.0
    %2927 = vmatpush.xpose.msra.mxu0 0.0
    %2928 = vmatpush.xpose.msra.mxu0 0.0
    %2929 = vmatpush.xpose.msra.mxu0 %v2915
    %2930 = vmatpush.xpose.msra.mxu0 %v2913
    %2931 = vmatpush.xpose.msra.mxu0 %v2911
    %2932 = vmatpush.xpose.msra.mxu0 %v2909
    %2933 = vmatmul.f32.gmra.mxu0 %v2905
    %v2934 = vpop.f32.mrf.mxu0
    %v2935 = vadd.f32 %v187, %v2934
    %2936 = vmatmul.f32.gmra.mxu0 %v2907
    %v2937 = vpop.f32.mrf.mxu0
    %v2938 = vadd.f32 %v188, %v2937
    %2939 = vdwg.mxu0
    %v2940 = vsel %vm217, %v2830, -inf
    %2941 = vmax.xlane.f32.xlu0 %v2940
    %v2942 = vpop.xlane.xlu0 %2941
    %v2943 = vsel %vm217, %v2833, -inf
    %2944 = vmax.xlane.f32.xlu0 %v2943
    %v2945 = vpop.xlane.xlu0 %2944
    %v2946 = vsel %vm217, %v2865, -inf
    %2947 = vmax.xlane.f32.xlu0 %v2946
    %v2948 = vpop.xlane.xlu0 %2947
    %v2949 = vsel %vm217, %v2868, -inf
    %2950 = vmax.xlane.f32.xlu0 %v2949
    %v2951 = vpop.xlane.xlu0 %2950
    %v2952 = vsel %vm217, %v2900, -inf
    %2953 = vmax.xlane.f32.xlu0 %v2952
    %v2954 = vpop.xlane.xlu0 %2953
    %v2955 = vsel %vm217, %v2903, -inf
    %2956 = vmax.xlane.f32.xlu0 %v2955
    %v2957 = vpop.xlane.xlu0 %2956
    %v2958 = vsel %vm217, %v2935, -inf
    %2959 = vmax.xlane.f32.xlu0 %v2958
    %v2960 = vpop.xlane.xlu0 %2959
    %v2961 = vsel %vm217, %v2938, -inf
    %2962 = vmax.xlane.f32.xlu0 %v2961
    %v2963 = vpop.xlane.xlu0 %2962
    %v2964 = vsub.f32 %v2830, %v2942
    %v2965 = vsub.f32 %v2833, %v2945
    %v2966 = vsub.f32 %v2865, %v2948
    %v2967 = vsub.f32 %v2868, %v2951
    %v2968 = vsub.f32 %v2900, %v2954
    %v2969 = vsub.f32 %v2903, %v2957
    %v2970 = vsub.f32 %v2935, %v2960
    %v2971 = vsub.f32 %v2938, %v2963
    %v2972 = vmul.f32 %v2964, 1.442695
    %v2973 = vpow.pop %v2972
    %v2974 = vmul.f32 %v2965, 1.442695
    %v2975 = vpow.pop %v2974
    %v2976 = vmul.f32 %v2966, 1.442695
    %v2977 = vpow.pop %v2976
    %v2978 = vmul.f32 %v2967, 1.442695
    %v2979 = vpow.pop %v2978
    %v2980 = vmul.f32 %v2968, 1.442695
    %v2981 = vpow.pop %v2980
    %v2982 = vmul.f32 %v2969, 1.442695
    %v2983 = vpow.pop %v2982
    %v2984 = vmul.f32 %v2970, 1.442695
    %v2985 = vpow.pop %v2984
    %v2986 = vmul.f32 %v2971, 1.442695
    %v2987 = vpow.pop %v2986
    %v2988 = vsel %vm217, %v2973, 0.0
    %2989 = vadd.xlane.f32.xlu0 %v2988
    %v2990 = vpop.xlane.xlu0 %2989
    %v2991 = vsel %vm217, %v2975, 0.0
    %2992 = vadd.xlane.f32.xlu0 %v2991
    %v2993 = vpop.xlane.xlu0 %2992
    %v2994 = vsel %vm217, %v2977, 0.0
    %2995 = vadd.xlane.f32.xlu0 %v2994
    %v2996 = vpop.xlane.xlu0 %2995
    %v2997 = vsel %vm217, %v2979, 0.0
    %2998 = vadd.xlane.f32.xlu0 %v2997
    %v2999 = vpop.xlane.xlu0 %2998
    %v3000 = vsel %vm217, %v2981, 0.0
    %3001 = vadd.xlane.f32.xlu0 %v3000
    %v3002 = vpop.xlane.xlu0 %3001
    %v3003 = vsel %vm217, %v2983, 0.0
    %3004 = vadd.xlane.f32.xlu0 %v3003
    %v3005 = vpop.xlane.xlu0 %3004
    %v3006 = vsel %vm217, %v2985, 0.0
    %3007 = vadd.xlane.f32.xlu0 %v3006
    %v3008 = vpop.xlane.xlu0 %3007
    %v3009 = vsel %vm217, %v2987, 0.0
    %3010 = vadd.xlane.f32.xlu0 %v3009
    %v3011 = vpop.xlane.xlu0 %3010
    %v3012 = vrcp.pop %v2990
    %v3013 = vmul.f32 %v2990, %v3012
    %v3014 = vsub.f32 1.0, %v3013
    %v3015 = vmul.f32 %v3012, %v3014
    %v3016 = vadd.f32 %v3012, %v3015
    %vm3017 = vweird.f32 %v2990
    %vm3018 = vweird.f32 %v3012
    %vm3019 = vmor %vm3017, %vm3018
    %v3020 = vsel %vm3019, %v3012, %v3016
    %v3021 = vand.u32 2147483647, %v2990
    %vm3022 = vcmp.eq.f32.partialorder %v3021, 8.507059e+37
    %v3023 = vand.u32 %v2990, 2147483648
    %v3024 = vor.u32 1.1754944e-38, %v3023
    %v3025 = vsel %vm3022, %v3024, %v3020
    %v3026 = vmul.f32 %v2973, %v3025
    %v3027 = vrcp.pop %v2993
    %v3028 = vmul.f32 %v2993, %v3027
    %v3029 = vsub.f32 1.0, %v3028
    %v3030 = vmul.f32 %v3027, %v3029
    %v3031 = vadd.f32 %v3027, %v3030
    %vm3032 = vweird.f32 %v2993
    %vm3033 = vweird.f32 %v3027
    %vm3034 = vmor %vm3032, %vm3033
    %v3035 = vsel %vm3034, %v3027, %v3031
    %v3036 = vand.u32 2147483647, %v2993
    %vm3037 = vcmp.eq.f32.partialorder %v3036, 8.507059e+37
    %v3038 = vand.u32 %v2993, 2147483648
    %v3039 = vor.u32 1.1754944e-38, %v3038
    %v3040 = vsel %vm3037, %v3039, %v3035
    %v3041 = vmul.f32 %v2975, %v3040
    %v3042 = vrcp.pop %v2996
    %v3043 = vmul.f32 %v2996, %v3042
    %v3044 = vsub.f32 1.0, %v3043
    %v3045 = vmul.f32 %v3042, %v3044
    %v3046 = vadd.f32 %v3042, %v3045
    %vm3047 = vweird.f32 %v2996
    %vm3048 = vweird.f32 %v3042
    %vm3049 = vmor %vm3047, %vm3048
    %v3050 = vsel %vm3049, %v3042, %v3046
    %v3051 = vand.u32 2147483647, %v2996
    %vm3052 = vcmp.eq.f32.partialorder %v3051, 8.507059e+37
    %v3053 = vand.u32 %v2996, 2147483648
    %v3054 = vor.u32 1.1754944e-38, %v3053
    %v3055 = vsel %vm3052, %v3054, %v3050
    %v3056 = vmul.f32 %v2977, %v3055
    %v3057 = vrcp.pop %v2999
    %v3058 = vmul.f32 %v2999, %v3057
    %v3059 = vsub.f32 1.0, %v3058
    %v3060 = vmul.f32 %v3057, %v3059
    %v3061 = vadd.f32 %v3057, %v3060
    %vm3062 = vweird.f32 %v2999
    %vm3063 = vweird.f32 %v3057
    %vm3064 = vmor %vm3062, %vm3063
    %v3065 = vsel %vm3064, %v3057, %v3061
    %v3066 = vand.u32 2147483647, %v2999
    %vm3067 = vcmp.eq.f32.partialorder %v3066, 8.507059e+37
    %v3068 = vand.u32 %v2999, 2147483648
    %v3069 = vor.u32 1.1754944e-38, %v3068
    %v3070 = vsel %vm3067, %v3069, %v3065
    %v3071 = vmul.f32 %v2979, %v3070
    %v3072 = vrcp.pop %v3002
    %v3073 = vmul.f32 %v3002, %v3072
    %v3074 = vsub.f32 1.0, %v3073
    %v3075 = vmul.f32 %v3072, %v3074
    %v3076 = vadd.f32 %v3072, %v3075
    %vm3077 = vweird.f32 %v3002
    %vm3078 = vweird.f32 %v3072
    %vm3079 = vmor %vm3077, %vm3078
    %v3080 = vsel %vm3079, %v3072, %v3076
    %v3081 = vand.u32 2147483647, %v3002
    %vm3082 = vcmp.eq.f32.partialorder %v3081, 8.507059e+37
    %v3083 = vand.u32 %v3002, 2147483648
    %v3084 = vor.u32 1.1754944e-38, %v3083
    %v3085 = vsel %vm3082, %v3084, %v3080
    %v3086 = vmul.f32 %v2981, %v3085
    %v3087 = vrcp.pop %v3005
    %v3088 = vmul.f32 %v3005, %v3087
    %v3089 = vsub.f32 1.0, %v3088
    %v3090 = vmul.f32 %v3087, %v3089
    %v3091 = vadd.f32 %v3087, %v3090
    %vm3092 = vweird.f32 %v3005
    %vm3093 = vweird.f32 %v3087
    %vm3094 = vmor %vm3092, %vm3093
    %v3095 = vsel %vm3094, %v3087, %v3091
    %v3096 = vand.u32 2147483647, %v3005
    %vm3097 = vcmp.eq.f32.partialorder %v3096, 8.507059e+37
    %v3098 = vand.u32 %v3005, 2147483648
    %v3099 = vor.u32 1.1754944e-38, %v3098
    %v3100 = vsel %vm3097, %v3099, %v3095
    %v3101 = vmul.f32 %v2983, %v3100
    %v3102 = vrcp.pop %v3008
    %v3103 = vmul.f32 %v3008, %v3102
    %v3104 = vsub.f32 1.0, %v3103
    %v3105 = vmul.f32 %v3102, %v3104
    %v3106 = vadd.f32 %v3102, %v3105
    %vm3107 = vweird.f32 %v3008
    %vm3108 = vweird.f32 %v3102
    %vm3109 = vmor %vm3107, %vm3108
    %v3110 = vsel %vm3109, %v3102, %v3106
    %v3111 = vand.u32 2147483647, %v3008
    %vm3112 = vcmp.eq.f32.partialorder %v3111, 8.507059e+37
    %v3113 = vand.u32 %v3008, 2147483648
    %v3114 = vor.u32 1.1754944e-38, %v3113
    %v3115 = vsel %vm3112, %v3114, %v3110
    %v3116 = vmul.f32 %v2985, %v3115
    %v3117 = vrcp.pop %v3011
    %v3118 = vmul.f32 %v3011, %v3117
    %v3119 = vsub.f32 1.0, %v3118
    %v3120 = vmul.f32 %v3117, %v3119
    %v3121 = vadd.f32 %v3117, %v3120
    %vm3122 = vweird.f32 %v3011
    %vm3123 = vweird.f32 %v3117
    %vm3124 = vmor %vm3122, %vm3123
    %v3125 = vsel %vm3124, %v3117, %v3121
    %v3126 = vand.u32 2147483647, %v3011
    %vm3127 = vcmp.eq.f32.partialorder %v3126, 8.507059e+37
    %v3128 = vand.u32 %v3011, 2147483648
    %v3129 = vor.u32 1.1754944e-38, %v3128
    %v3130 = vsel %vm3127, %v3129, %v3125
    %v3131 = vmul.f32 %v2987, %v3130
    %v3133 = vsel %vm217, %v3026, 0
    %v3136 = vsel %vm217, %v3041, 0
    %3138 = vmatpush.msra.mxu0 0.0
    %3139 = vmatpush.msra.mxu0 0.0
    %3140 = vmatpush.msra.mxu0 0.0
    %3141 = vmatpush.msra.mxu0 0.0
    %3142 = vmatpush.msra.mxu0 0.0
    %3143 = vmatpush.msra.mxu0 0.0
    %3144 = vmatpush.msra.mxu0 0.0
    %3145 = vmatpush.msra.mxu0 0.0
    %3146 = vmatpush.msra.mxu0 0.0
    %3147 = vmatpush.msra.mxu0 0.0
    %3148 = vmatpush.msra.mxu0 0.0
    %3149 = vmatpush.msra.mxu0 0.0
    %3150 = vmatpush.msra.mxu0 %v2716
    %3151 = vmatpush.msra.mxu0 %v2713
    %3152 = vmatpush.msra.mxu0 %v2710
    %3153 = vmatpush.msra.mxu0 %v2707
    %3154 = vmatmul.f32.gmra.mxu0 %v3133
    %v3155 = vpop.f32.mrf.mxu0
    %v3156 = vadd.f32 0.0, %v3155
    %3157 = vmatmul.f32.gmra.mxu0 %v3136
    %v3158 = vpop.f32.mrf.mxu0
    %v3159 = vadd.f32 0.0, %v3158
    %3160 = vdwg.mxu0
    %v3162 = vsel %vm217, %v3056, 0
    %v3165 = vsel %vm217, %v3071, 0
    %3167 = vmatpush.msra.mxu0 0.0
    %3168 = vmatpush.msra.mxu0 0.0
    %3169 = vmatpush.msra.mxu0 0.0
    %3170 = vmatpush.msra.mxu0 0.0
    %3171 = vmatpush.msra.mxu0 0.0
    %3172 = vmatpush.msra.mxu0 0.0
    %3173 = vmatpush.msra.mxu0 0.0
    %3174 = vmatpush.msra.mxu0 0.0
    %3175 = vmatpush.msra.mxu0 0.0
    %3176 = vmatpush.msra.mxu0 0.0
    %3177 = vmatpush.msra.mxu0 0.0
    %3178 = vmatpush.msra.mxu0 0.0
    %3179 = vmatpush.msra.mxu0 %v2771
    %3180 = vmatpush.msra.mxu0 %v2769
    %3181 = vmatpush.msra.mxu0 %v2767
    %3182 = vmatpush.msra.mxu0 %v2765
    %3183 = vmatmul.f32.gmra.mxu0 %v3162
    %v3184 = vpop.f32.mrf.mxu0
    %v3185 = vadd.f32 0.0, %v3184
    %3186 = vmatmul.f32.gmra.mxu0 %v3165
    %v3187 = vpop.f32.mrf.mxu0
    %v3188 = vadd.f32 0.0, %v3187
    %3189 = vdwg.mxu0
    %v3191 = vsel %vm217, %v3086, 0
    %v3194 = vsel %vm217, %v3101, 0
    %3196 = vmatpush.msra.mxu0 0.0
    %3197 = vmatpush.msra.mxu0 0.0
    %3198 = vmatpush.msra.mxu0 0.0
    %3199 = vmatpush.msra.mxu0 0.0
    %3200 = vmatpush.msra.mxu0 0.0
    %3201 = vmatpush.msra.mxu0 0.0
    %3202 = vmatpush.msra.mxu0 0.0
    %3203 = vmatpush.msra.mxu0 0.0
    %3204 = vmatpush.msra.mxu0 0.0
    %3205 = vmatpush.msra.mxu0 0.0
    %3206 = vmatpush.msra.mxu0 0.0
    %3207 = vmatpush.msra.mxu0 0.0
    %3208 = vmatpush.msra.mxu0 %v2783
    %3209 = vmatpush.msra.mxu0 %v2781
    %3210 = vmatpush.msra.mxu0 %v2779
    %3211 = vmatpush.msra.mxu0 %v2777
    %3212 = vmatmul.f32.gmra.mxu0 %v3191
    %v3213 = vpop.f32.mrf.mxu0
    %v3214 = vadd.f32 0.0, %v3213
    %3215 = vmatmul.f32.gmra.mxu0 %v3194
    %v3216 = vpop.f32.mrf.mxu0
    %v3217 = vadd.f32 0.0, %v3216
    %3218 = vdwg.mxu0
    %v3220 = vsel %vm217, %v3116, 0
    %v3223 = vsel %vm217, %v3131, 0
    %3225 = vmatpush.msra.mxu0 0.0
    %3226 = vmatpush.msra.mxu0 0.0
    %3227 = vmatpush.msra.mxu0 0.0
    %3228 = vmatpush.msra.mxu0 0.0
    %3229 = vmatpush.msra.mxu0 0.0
    %3230 = vmatpush.msra.mxu0 0.0
    %3231 = vmatpush.msra.mxu0 0.0
    %3232 = vmatpush.msra.mxu0 0.0
    %3233 = vmatpush.msra.mxu0 0.0
    %3234 = vmatpush.msra.mxu0 0.0
    %3235 = vmatpush.msra.mxu0 0.0
    %3236 = vmatpush.msra.mxu0 0.0
    %3237 = vmatpush.msra.mxu0 %v2795
    %3238 = vmatpush.msra.mxu0 %v2793
    %3239 = vmatpush.msra.mxu0 %v2791
    %3240 = vmatpush.msra.mxu0 %v2789
    %3241 = vmatmul.f32.gmra.mxu0 %v3220
    %v3242 = vpop.f32.mrf.mxu0
    %v3243 = vadd.f32 0.0, %v3242
    %3244 = vmatmul.f32.gmra.mxu0 %v3223
    %v3245 = vpop.f32.mrf.mxu0
    %v3246 = vadd.f32 0.0, %v3245
    %3247 = vdwg.mxu0
    %3250 = vrot.lane.b32.xlu0 %v3185, 8
    %v3251 = vpop.permute.xlu0 %3250
    %3252 = vrot.lane.b32.xlu0 %v3188, 8
    %v3253 = vpop.permute.xlu0 %3252
    %3258 = vrot.lane.b32.xlu0 %v3214, 16
    %v3259 = vpop.permute.xlu0 %3258
    %3260 = vrot.lane.b32.xlu0 %v3217, 16
    %v3261 = vpop.permute.xlu0 %3260
    %3266 = vrot.lane.b32.xlu0 %v3243, 24
    %v3267 = vpop.permute.xlu0 %3266
    %3268 = vrot.lane.b32.xlu0 %v3246, 24
    %v3269 = vpop.permute.xlu0 %3268
    %v3272 = vsel %vm349, %v3156, %v3251
    %v3273 = vsel %vm349, %v3159, %v3253
    %v3274 = vsel %vm486, %v3272, %v3259
    %v3275 = vsel %vm486, %v3273, %v3261
    %v3276 = vsel %vm823, %v3274, %v3267
    %v3277 = vsel %vm823, %v3275, %v3269
    %s3278 = scalar_lea.vmem [#allocation13], 96
    %v3279 = vld [vmem:[%s3278] sm:$0xff]
    %v3280 = vld [vmem:[%s3278 + $0x8] sm:$0xff]
    %v3281 = vld [vmem:[%s3278 + $0x10] sm:$0xff]
    %v3282 = vld [vmem:[%s3278 + $0x18] sm:$0xff]
    %v3284 = vperm.slane %v199, 0
    %v3287 = vsel %vm217, %v3276, 0
    %v3290 = vsel %vm217, %v3277, 0
    %3292 = vmatpush.msra.mxu0 0.0
    %3293 = vmatpush.msra.mxu0 0.0
    %3294 = vmatpush.msra.mxu0 0.0
    %3295 = vmatpush.msra.mxu0 0.0
    %3296 = vmatpush.msra.mxu0 0.0
    %3297 = vmatpush.msra.mxu0 0.0
    %3298 = vmatpush.msra.mxu0 0.0
    %3299 = vmatpush.msra.mxu0 0.0
    %3300 = vmatpush.msra.mxu0 0.0
    %3301 = vmatpush.msra.mxu0 0.0
    %3302 = vmatpush.msra.mxu0 0.0
    %3303 = vmatpush.msra.mxu0 0.0
    %3304 = vmatpush.msra.mxu0 %v3282
    %3305 = vmatpush.msra.mxu0 %v3281
    %3306 = vmatpush.msra.mxu0 %v3280
    %3307 = vmatpush.msra.mxu0 %v3279
    %3308 = vmatmul.f32.gmra.mxu0 %v3287
    %v3309 = vpop.f32.mrf.mxu0
    %v3310 = vadd.f32 %v3284, %v3309
    %3311 = vmatmul.f32.gmra.mxu0 %v3290
    %v3312 = vpop.f32.mrf.mxu0
    %v3313 = vadd.f32 %v3284, %v3312
    %3314 = vdwg.mxu0
    %v3315 = vadd.f32 %v2581, %v3310
    %v3316 = vadd.f32 %v2582, %v3313
    %v3317 = vsel %vm217, %v3315, 0.0
    %3318 = vadd.xlane.f32.xlu0 %v3317
    %v3319 = vpop.xlane.xlu0 %3318
    %v3320 = vsel %vm217, %v3316, 0.0
    %3321 = vadd.xlane.f32.xlu0 %v3320
    %v3322 = vpop.xlane.xlu0 %3321
    %v3323 = vmul.f32 %v3319, %v876
    %v3324 = vmul.f32 %v3322, %v876
    %v3325 = vsub.f32 %v3315, %v3323
    %v3326 = vsub.f32 %v3316, %v3324
    %v3327 = vmul.f32 %v3325, %v3325
    %v3328 = vmul.f32 %v3326, %v3326
    %v3329 = vsel %vm217, %v3327, 0.0
    %3330 = vadd.xlane.f32.xlu0 %v3329
    %v3331 = vpop.xlane.xlu0 %3330
    %v3332 = vsel %vm217, %v3328, 0.0
    %3333 = vadd.xlane.f32.xlu0 %v3332
    %v3334 = vpop.xlane.xlu0 %3333
    %v3335 = vmul.f32 %v3331, %v876
    %v3336 = vmul.f32 %v3334, %v876
    %v3337 = vadd.f32 %v3335, 1e-05
    %v3338 = vadd.f32 %v3336, 1e-05
    %v3339 = vrsqrt.pop %v3337
    %v3340 = vmul.f32 %v3339, %v3337
    %v3341 = vmul.f32 %v3340, %v3339
    %v3342 = vmul.f32 0.5, %v3341
    %v3343 = vsub.f32 1.5, %v3342
    %v3344 = vmul.f32 %v3339, %v3343
    %vm3345 = vweird.f32 %v3337
    %vm3346 = vweird.f32 %v3339
    %vm3347 = vmor %vm3345, %vm3346
    %v3348 = vsel %vm3347, %v3339, %v3344
    %v3349 = vrsqrt.pop %v3338
    %v3350 = vmul.f32 %v3349, %v3338
    %v3351 = vmul.f32 %v3350, %v3349
    %v3352 = vmul.f32 0.5, %v3351
    %v3353 = vsub.f32 1.5, %v3352
    %v3354 = vmul.f32 %v3349, %v3353
    %vm3355 = vweird.f32 %v3338
    %vm3356 = vweird.f32 %v3349
    %vm3357 = vmor %vm3355, %vm3356
    %v3358 = vsel %vm3357, %v3349, %v3354
    %v3359 = vmul.f32 %v3325, %v3348
    %v3360 = vmul.f32 %v3326, %v3358
    %v3362 = vperm.slane %v203, 0
    %v3364 = vmul.f32 %v3359, %v3362
    %v3365 = vmul.f32 %v3360, %v3362
    %v3367 = vperm.slane %v204, 0
    %v3369 = vadd.f32 %v3364, %v3367
    %v3370 = vadd.f32 %v3365, %v3367
    %s3371 = scalar_lea.vmem %s9, 32
    %v3372 = vld [vmem:[%s3371] sm:$0xff]
    %v3373 = vld [vmem:[%s3371 + $0x8] sm:$0xff]
    %v3374 = vld [vmem:[%s3371 + $0x10] sm:$0xff]
    %v3375 = vld [vmem:[%s3371 + $0x18] sm:$0xff]
    %s3376 = scalar_lea.vmem %s10, 1
    %v3377 = vld [vmem:[%s3376] sm:$0x1]
    %v3379 = vperm.slane %v3377, 0
    %v3382 = vsel %vm217, %v3369, 0
    %v3385 = vsel %vm217, %v3370, 0
    %3387 = vmatpush.msra.mxu0 0.0
    %3388 = vmatpush.msra.mxu0 0.0
    %3389 = vmatpush.msra.mxu0 0.0
    %3390 = vmatpush.msra.mxu0 0.0
    %3391 = vmatpush.msra.mxu0 0.0
    %3392 = vmatpush.msra.mxu0 0.0
    %3393 = vmatpush.msra.mxu0 0.0
    %3394 = vmatpush.msra.mxu0 0.0
    %3395 = vmatpush.msra.mxu0 0.0
    %3396 = vmatpush.msra.mxu0 0.0
    %3397 = vmatpush.msra.mxu0 0.0
    %3398 = vmatpush.msra.mxu0 0.0
    %3399 = vmatpush.msra.mxu0 %v3375
    %3400 = vmatpush.msra.mxu0 %v3374
    %3401 = vmatpush.msra.mxu0 %v3373
    %3402 = vmatpush.msra.mxu0 %v3372
    %3403 = vmatmul.f32.gmra.mxu0 %v3382
    %v3404 = vpop.f32.mrf.mxu0
    %v3405 = vadd.f32 %v3379, %v3404
    %3406 = vmatmul.f32.gmra.mxu0 %v3385
    %v3407 = vpop.f32.mrf.mxu0
    %v3408 = vadd.f32 %v3379, %v3407
    %3409 = vdwg.mxu0
    %v3410 = vmax.f32 %v3405, 0.0
    %v3411 = vmax.f32 %v3408, 0.0
    %s3412 = scalar_lea.vmem %s11, 64
    %v3413 = vld [vmem:[%s3412] sm:$0xff]
    %v3414 = vld [vmem:[%s3412 + $0x8] sm:$0xff]
    %v3415 = vld [vmem:[%s3412 + $0x10] sm:$0xff]
    %v3416 = vld [vmem:[%s3412 + $0x18] sm:$0xff]
    %v3417 = vld [vmem:[%s3412 + $0x20] sm:$0xff]
    %v3418 = vld [vmem:[%s3412 + $0x28] sm:$0xff]
    %v3419 = vld [vmem:[%s3412 + $0x30] sm:$0xff]
    %v3420 = vld [vmem:[%s3412 + $0x38] sm:$0xff]
    %v3422 = vperm.slane %v200, 0
    %v3425 = vsel %vm1787, %v3410, 0
    %v3428 = vsel %vm1787, %v3411, 0
    %3430 = vmatpush.msra.mxu0 0.0
    %3431 = vmatpush.msra.mxu0 0.0
    %3432 = vmatpush.msra.mxu0 0.0
    %3433 = vmatpush.msra.mxu0 0.0
    %3434 = vmatpush.msra.mxu0 0.0
    %3435 = vmatpush.msra.mxu0 0.0
    %3436 = vmatpush.msra.mxu0 0.0
    %3437 = vmatpush.msra.mxu0 0.0
    %3438 = vmatpush.msra.mxu0 %v3420
    %3439 = vmatpush.msra.mxu0 %v3419
    %3440 = vmatpush.msra.mxu0 %v3418
    %3441 = vmatpush.msra.mxu0 %v3417
    %3442 = vmatpush.msra.mxu0 %v3416
    %3443 = vmatpush.msra.mxu0 %v3415
    %3444 = vmatpush.msra.mxu0 %v3414
    %3445 = vmatpush.msra.mxu0 %v3413
    %3446 = vmatmul.f32.gmra.mxu0 %v3425
    %v3447 = vpop.f32.mrf.mxu0
    %v3448 = vadd.f32 %v3422, %v3447
    %3449 = vmatmul.f32.gmra.mxu0 %v3428
    %v3450 = vpop.f32.mrf.mxu0
    %v3451 = vadd.f32 %v3422, %v3450
    %3452 = vdwg.mxu0
    %v3453 = vadd.f32 %v3369, %v3448
    %v3454 = vadd.f32 %v3370, %v3451
    %v3455 = vsel %vm217, %v3453, 0.0
    %3456 = vadd.xlane.f32.xlu0 %v3455
    %v3457 = vpop.xlane.xlu0 %3456
    %v3458 = vsel %vm217, %v3454, 0.0
    %3459 = vadd.xlane.f32.xlu0 %v3458
    %v3460 = vpop.xlane.xlu0 %3459
    %v3461 = vmul.f32 %v3457, %v876
    %v3462 = vmul.f32 %v3460, %v876
    %v3463 = vsub.f32 %v3453, %v3461
    %v3464 = vsub.f32 %v3454, %v3462
    %v3465 = vmul.f32 %v3463, %v3463
    %v3466 = vmul.f32 %v3464, %v3464
    %v3467 = vsel %vm217, %v3465, 0.0
    %3468 = vadd.xlane.f32.xlu0 %v3467
    %v3469 = vpop.xlane.xlu0 %3468
    %v3470 = vsel %vm217, %v3466, 0.0
    %3471 = vadd.xlane.f32.xlu0 %v3470
    %v3472 = vpop.xlane.xlu0 %3471
    %v3473 = vmul.f32 %v3469, %v876
    %v3474 = vmul.f32 %v3472, %v876
    %v3475 = vadd.f32 %v3473, 1e-05
    %v3476 = vadd.f32 %v3474, 1e-05
    %v3477 = vrsqrt.pop %v3475
    %v3478 = vmul.f32 %v3477, %v3475
    %v3479 = vmul.f32 %v3478, %v3477
    %v3480 = vmul.f32 0.5, %v3479
    %v3481 = vsub.f32 1.5, %v3480
    %v3482 = vmul.f32 %v3477, %v3481
    %vm3483 = vweird.f32 %v3475
    %vm3484 = vweird.f32 %v3477
    %vm3485 = vmor %vm3483, %vm3484
    %v3486 = vsel %vm3485, %v3477, %v3482
    %v3487 = vrsqrt.pop %v3476
    %v3488 = vmul.f32 %v3487, %v3476
    %v3489 = vmul.f32 %v3488, %v3487
    %v3490 = vmul.f32 0.5, %v3489
    %v3491 = vsub.f32 1.5, %v3490
    %v3492 = vmul.f32 %v3487, %v3491
    %vm3493 = vweird.f32 %v3476
    %vm3494 = vweird.f32 %v3487
    %vm3495 = vmor %vm3493, %vm3494
    %v3496 = vsel %vm3495, %v3487, %v3492
    %v3497 = vmul.f32 %v3463, %v3486
    %v3498 = vmul.f32 %v3464, %v3496
    %v3500 = vperm.slane %v205, 0
    %v3502 = vmul.f32 %v3497, %v3500
    %v3503 = vmul.f32 %v3498, %v3500
    %v3505 = vperm.slane %v206, 0
    %v3507 = vadd.f32 %v3502, %v3505
    %v3508 = vadd.f32 %v3503, %v3505
    %v3509 = vld [vmem:[%s13] sm:$0x1]
    %s3510 = scalar_lea.vmem %s13, 1
    %v3511 = vld [vmem:[%s3510] sm:$0x1]
    %v3512 = vsel %vm217, %v3507, 0.0
    %3513 = vadd.xlane.f32.xlu0 %v3512
    %v3514 = vpop.xlane.xlu0 %3513
    %v3515 = vsel %vm217, %v3508, 0.0
    %3516 = vadd.xlane.f32.xlu0 %v3515
    %v3517 = vpop.xlane.xlu0 %3516
    %v3518 = vmul.f32 %v3514, %v876
    %v3519 = vmul.f32 %v3517, %v876
    %v3520 = vsub.f32 %v3507, %v3518
    %v3521 = vsub.f32 %v3508, %v3519
    %v3522 = vmul.f32 %v3520, %v3520
    %v3523 = vmul.f32 %v3521, %v3521
    %v3524 = vsel %vm217, %v3522, 0.0
    %3525 = vadd.xlane.f32.xlu0 %v3524
    %v3526 = vpop.xlane.xlu0 %3525
    %v3527 = vsel %vm217, %v3523, 0.0
    %3528 = vadd.xlane.f32.xlu0 %v3527
    %v3529 = vpop.xlane.xlu0 %3528
    %v3530 = vmul.f32 %v3526, %v876
    %v3531 = vmul.f32 %v3529, %v876
    %v3532 = vadd.f32 %v3530, 1e-05
    %v3533 = vadd.f32 %v3531, 1e-05
    %v3534 = vrsqrt.pop %v3532
    %v3535 = vmul.f32 %v3534, %v3532
    %v3536 = vmul.f32 %v3535, %v3534
    %v3537 = vmul.f32 0.5, %v3536
    %v3538 = vsub.f32 1.5, %v3537
    %v3539 = vmul.f32 %v3534, %v3538
    %vm3540 = vweird.f32 %v3532
    %vm3541 = vweird.f32 %v3534
    %vm3542 = vmor %vm3540, %vm3541
    %v3543 = vsel %vm3542, %v3534, %v3539
    %v3544 = vrsqrt.pop %v3533
    %v3545 = vmul.f32 %v3544, %v3533
    %v3546 = vmul.f32 %v3545, %v3544
    %v3547 = vmul.f32 0.5, %v3546
    %v3548 = vsub.f32 1.5, %v3547
    %v3549 = vmul.f32 %v3544, %v3548
    %vm3550 = vweird.f32 %v3533
    %vm3551 = vweird.f32 %v3544
    %vm3552 = vmor %vm3550, %vm3551
    %v3553 = vsel %vm3552, %v3544, %v3549
    %v3554 = vmul.f32 %v3520, %v3543
    %v3555 = vmul.f32 %v3521, %v3553
    %v3557 = vperm.slane %v3509, 0
    %v3559 = vmul.f32 %v3554, %v3557
    %v3560 = vmul.f32 %v3555, %v3557
    %v3562 = vperm.slane %v3511, 0
    %v3564 = vadd.f32 %v3559, %v3562
    %v3565 = vadd.f32 %v3560, %v3562
    %3566 = vst.msk [vmem:[#allocation16] sm:$0xff] %vm217, %v3564
    %3567 = vst.msk [vmem:[#allocation16 + $0x8] sm:$0xff] %vm217, %v3565
    // Predicated region
    $region90: #{tpu_custom_call.1} parent=1 // pred_check
      _
    $region91: #{tpu_custom_call.1} parent=1 // pred_check_branch
      %3569 = sbr.rel (0) target = $region93
    $region92: #{tpu_custom_call.1} parent=1 // pred_region
      %3571 = vsyncadd [#allocation4], 0
      %s3572 = sshll.u32 [#allocation16], 4
      %s3573 = int_to_ptr.vmem [resolvable:$true] %s3572
      %s3574 = sshll.u32 %s14, 4
      %s3575 = int_to_ptr.hbm [resolvable:$true] %s3574
      %3580 = dma.vmem_to_hbm [thread:$0]  %s3573, 256, %s3575, [#allocation4], 128, 128, 8
    $region93: #{tpu_custom_call.1} parent=1 // pred_fallthru
      _
    // Predicated region
    $region94: #{tpu_custom_call.1} parent=1 // pred_check
      _
    $region95: #{tpu_custom_call.1} parent=1 // pred_check_branch
      %3582 = sbr.rel (0) target = $region97
    $region96: #{tpu_custom_call.1} parent=1 // pred_region
      %3584 = dma.done [#allocation4], 256
    $region97: #{tpu_custom_call.1} parent=1 // pred_fallthru
      _
    %3585 = vsyncpa [#allocation3], 1
    %3586 = vsyncpa [#allocation6], 1
    %3587 = vsyncpa [#allocation9], 1
    %3588 = vsyncpa [#allocation12], 1
    %3589 = vsyncpa [#allocation15], 1
    %3590 = vsyncpa [#allocation4], 1

</llo_original>
